<compile_context>
chip_gen: v6e
topology: v6e:2x2x1
jax: 0.10.0
libtpu: 0.0.40
codegen_flags: <defaults>
</compile_context>

<pallas_src>
import functools

import numpy as np

import jax
import jax.numpy as jnp
from jax import lax
from jax.experimental import pallas as pl
from jax.experimental.pallas import tpu as pltpu


def make_divisible(v, divisor=8, min_value=None, round_limit=0.9):
    min_value = min_value or divisor
    new_v = max(min_value, int(v + divisor / 2) // divisor * divisor)
    if new_v < round_limit * v:
        new_v += divisor
    return new_v


def _cdiv(a, b):
    return -(-a // b)


def _round_up(a, b):
    return _cdiv(a, b) * b


def _vmem_capacity_bytes():
    # Generation-aware VMEM capacity (64 MiB/core on v7x, 128 MiB on v5e/v6e).  The
    # fallback only affects sizing heuristics (never kernel semantics), so a narrow
    # catch with a conservative (v7x) default is safe.
    if not hasattr(pltpu, "get_tpu_info"):
        return 64 * 1024 * 1024
    try:
        return int(pltpu.get_tpu_info().vmem_capacity_bytes)
    except (AttributeError, TypeError, ValueError, RuntimeError, NotImplementedError):
        return 64 * 1024 * 1024


def _choose_hw_tile(n_out, *, radix, cin, cout, halo_pad, out_itemsize, vmem_cap):
    """Pick the hw tile (lane) width, budgeting every resident VMEM buffer."""
    n_out_pad = _round_up(n_out, 128)
    if n_out_pad <= 512:
        return n_out_pad                                  # single tile, minimal padding
    budget = int(vmem_cap * 0.75)
    # Per-batch resident buffers (independent of hw_tile):
    #   x block (bf16, double-buffered) + y_scr (bf16).
    resident = 2 * cin * (n_out_pad + halo_pad) * 2 + radix * cout * n_out_pad * 2
    # Bytes per lane of tile width: output block (double-buffered) + mask block +
    # live f32 temporaries (acc / tap matmul / y) + bf16 input window + tap slab.
    per_lane = 2 * cout * out_itemsize + 2 * 4 + 3 * 4 * cout + 2 * 2 * cin
    avail = budget - resident - (4 << 20)                 # weights / misc headroom
    cap = (max(avail, 0) // max(per_lane, 1)) // 128 * 128
    tile = min(n_out_pad, 4096, max(512, cap))            # 512 floor (HBM roofline data)
    # Re-derive so hw_pad stays as close to n_out_pad as possible (minimal padding).
    num_t = _cdiv(n_out_pad, tile)
    return _round_up(_cdiv(n_out_pad, num_t), 128)


def _splat_kernel(x_ref, cw_ref, mask_ref, w1_ref, b1_ref, w2_ref, b2_ref,
                  o_ref, y_scr, gap_scr, attn_scr, *,
                  radix, cin_g, ksize, wp, hw_tile, win_w, inv_hw):
    """Grid = (B, 2, num_t).  Pass 0: conv+ReLU+GAP per tile; pass 1: attention apply.

    x_ref   : (Cin, L)              bf16  zero-padded NCHW input, flattened per batch
    cw_ref  : (R, K*K, Cout, Cin_g) bf16  conv weights, one (Cout, Cin_g) matrix per tap
    mask_ref: (1, hw_tile)          f32   1.0 on valid output columns, 0.0 on pad columns
    w1_ref  : (A, Cout) f32,  b1_ref: (A, 1) f32          fc1
    w2_ref  : (R, Cout, A) f32, b2_ref: (R, Cout, 1) f32   fc2 (per radix chunk)
    o_ref   : (Cout, hw_tile)             output tile (lane-dense, written in pass 1)
    y_scr   : (R, Cout, hw_pad)     bf16  post-ReLU conv, read back in pass 1
    gap_scr : (Cout, 1)             f32   masked global-average-pool accumulator
    attn_scr: (R, Cout, 1)          f32   radix-softmax attention weights
    """
    p = pl.program_id(1)
    t = pl.program_id(2)
    col0 = pl.multiple_of(t * hw_tile, 128)

    @pl.when(p == 0)
    def _conv_pass():
        @pl.when(t == 0)
        def _init():
            gap_scr[...] = jnp.zeros_like(gap_scr)

        mask = mask_ref[...]                                    # (1, hw_tile)
        for r in range(radix):
            c0 = r * cin_g
            # Halo'd input window for this tile (lane-aligned dynamic slice).
            x_win = x_ref[c0:c0 + cin_g, pl.ds(col0, win_w)]    # (Cin_g, win_w) bf16
            acc = None
            for kh in range(ksize):
                for kw in range(ksize):
                    off = kh * wp + kw                          # static tap offset
                    tap = x_win[:, off:off + hw_tile]           # (Cin_g, hw_tile)
                    c = jnp.dot(cw_ref[r, kh * ksize + kw], tap,
                                preferred_element_type=jnp.float32)
                    acc = c if acc is None else acc + c
            y = jnp.maximum(acc, 0.0)                           # (Cout, hw_tile) f32
            # Masked GAP accumulated per radix branch from the f32 result.
            gap_scr[...] += jnp.sum(y * mask, axis=-1, keepdims=True)
            y_scr[r, :, pl.ds(col0, hw_tile)] = y.astype(y_scr.dtype)

    @pl.when(p == 1)
    def _apply_pass():
        @pl.when(t == 0)
        def _attention():
            gap = gap_scr[...] * inv_hw                         # (Cout, 1)
            # fc1 (1x1 conv) + ReLU   (bn1 is Identity)
            h = jnp.dot(w1_ref[...], gap,
                        preferred_element_type=jnp.float32) + b1_ref[...]
            h = jnp.maximum(h, 0.0)                             # (A, 1)
            # fc2 (1x1 conv), one chunk per radix branch
            logits = [
                jnp.dot(w2_ref[r], h, preferred_element_type=jnp.float32) + b2_ref[r]
                for r in range(radix)
            ]                                                   # each (Cout, 1)
            # RadixSoftmax (cardinality == 1)
            if radix == 1:
                attn = [1.0 / (1.0 + jnp.exp(-logits[0]))]      # sigmoid
            elif radix == 2:
                a0 = 1.0 / (1.0 + jnp.exp(logits[1] - logits[0]))
                attn = [a0, 1.0 - a0]
            else:
                m = logits[0]
                for r in range(1, radix):
                    m = jnp.maximum(m, logits[r])
                es = [jnp.exp(l - m) for l in logits]
                den = es[0]
                for r in range(1, radix):
                    den = den + es[r]
                attn = [e / den for e in es]                    # exact: once per batch
            for r in range(radix):
                attn_scr[r, :, :] = attn[r]

        # Attention-weighted radix sum for this tile (attn broadcasts over lanes).
        acc = y_scr[0, :, pl.ds(col0, hw_tile)].astype(jnp.float32) * attn_scr[0]
        for r in range(1, radix):
            acc += y_scr[r, :, pl.ds(col0, hw_tile)].astype(jnp.float32) * attn_scr[r]
        o_ref[...] = acc.astype(o_ref.dtype)


def split_attn_forward(x_nchw, params, *, radix=2, groups=1, kernel_size=3,
                       padding=None, hw_tile=None):
    assert groups == 1, "kernel implemented for cardinality (groups) == 1 (module default)"
    if padding is None:
        padding = kernel_size // 2
    B, cin, H, W = x_nchw.shape
    conv_w = params["conv_w"]                        # (mid_chs, Cin/radix, kh, kw)
    fc1_w, fc1_b = params["fc1_w"], params["fc1_b"]  # (A, Cout, 1, 1), (A,)
    fc2_w, fc2_b = params["fc2_w"], params["fc2_b"]  # (R*Cout, A, 1, 1), (R*Cout,)

    mid_chs = conv_w.shape[0]
    cout = mid_chs // radix
    cin_g = cin // (groups * radix)
    attn_chs = fc1_w.shape[0]

    hp = H + 2 * padding
    wp = W + 2 * padding
    n_out = H * wp                                   # output columns on padded-width grid
    max_off = (kernel_size - 1) * wp + (kernel_size - 1)
    halo_pad = _round_up(max_off, 128)
    out_dtype = x_nchw.dtype

    vmem_cap = _vmem_capacity_bytes()
    if hw_tile is None:
        hw_tile = _choose_hw_tile(n_out, radix=radix, cin=cin, cout=cout,
                                  halo_pad=halo_pad,
                                  out_itemsize=jnp.dtype(out_dtype).itemsize,
                                  vmem_cap=vmem_cap)
    assert hw_tile % 128 == 0, "hw_tile must be a multiple of 128 (lane width)"
    num_t = _cdiv(n_out, hw_tile)
    hw_pad = num_t * hw_tile
    win_w = hw_tile + halo_pad
    l_pad = _round_up((num_t - 1) * hw_tile + win_w, 128)

    # ---- input: cast bf16, zero-pad spatially, flatten rows onto lanes, pad the tail ----
    xb = x_nchw.astype(jnp.bfloat16)
    xb = jnp.pad(xb, ((0, 0), (0, 0), (padding, padding), (padding, padding)))
    xb = xb.reshape(B, cin, hp * wp)
    if l_pad > hp * wp:
        xb = jnp.pad(xb, ((0, 0), (0, 0), (0, l_pad - hp * wp)))

    # ---- static valid-column mask for the GAP (0 on the Wp-W pad columns / tail) ----
    q = np.arange(hw_pad)
    mask = jnp.asarray(((q < n_out) & ((q % wp) < W)).astype(np.float32).reshape(1, hw_pad))

    # ---- weights in per-tap matmul form; conv weights bf16 (MXU), fc weights f32 ----
    cw = conv_w.reshape(radix, cout, cin_g, kernel_size * kernel_size)
    cw = jnp.transpose(cw, (0, 3, 1, 2)).astype(jnp.bfloat16)    # (R, K*K, Cout, Cin_g)
    w1 = fc1_w.reshape(attn_chs, cout).astype(jnp.float32)       # (A, Cout)
    b1 = fc1_b.reshape(attn_chs, 1).astype(jnp.float32)          # (A, 1)
    w2 = fc2_w.reshape(mid_chs, attn_chs).astype(jnp.float32).reshape(radix, cout, attn_chs)
    b2 = fc2_b.reshape(radix, cout, 1).astype(jnp.float32)       # (R, Cout, 1)

    kernel = functools.partial(
        _splat_kernel, radix=radix, cin_g=cin_g, ksize=kernel_size,
        wp=wp, hw_tile=hw_tile, win_w=win_w, inv_hw=1.0 / (H * W))

    grid_spec = pltpu.PrefetchScalarGridSpec(
        num_scalar_prefetch=0,
        grid=(B, 2, num_t),                                      # (batch, pass, hw tile)
        in_specs=[
            pl.BlockSpec((None, cin, l_pad), lambda b, p, t: (b, 0, 0)),
            pl.BlockSpec((radix, kernel_size * kernel_size, cout, cin_g),
                         lambda b, p, t: (0, 0, 0, 0)),
            pl.BlockSpec((1, hw_tile), lambda b, p, t: (0, t)),
            pl.BlockSpec((attn_chs, cout), lambda b, p, t: (0, 0)),
            pl.BlockSpec((attn_chs, 1), lambda b, p, t: (0, 0)),
            pl.BlockSpec((radix, cout, attn_chs), lambda b, p, t: (0, 0, 0)),
            pl.BlockSpec((radix, cout, 1), lambda b, p, t: (0, 0, 0)),
        ],
        # Pass 0 keeps the output block parked at tile 0 (never written, never flushed);
        # pass 1 writes one (Cout, hw_tile) tile per step so the writeback DMA pipelines.
        out_specs=pl.BlockSpec((None, cout, hw_tile), lambda b, p, t: (b, 0, t * p)),
        scratch_shapes=[
            pltpu.VMEM((radix, cout, hw_pad), jnp.bfloat16),     # post-ReLU conv
            pltpu.VMEM((cout, 1), jnp.float32),                  # GAP accumulator
            pltpu.VMEM((radix, cout, 1), jnp.float32),           # attention weights
        ],
    )
    out_flat = pl.pallas_call(
        kernel,
        out_shape=jax.ShapeDtypeStruct((B, cout, hw_pad), out_dtype),
        grid_spec=grid_spec,
        compiler_params=pltpu.CompilerParams(
            dimension_semantics=("parallel", "arbitrary", "arbitrary"),
            vmem_limit_bytes=int(vmem_cap * 0.78),               # ~50 MiB v7x / ~100 MiB v5e-v6e
        ),
    )(xb, cw, mask, w1, b1, w2, b2)

    # Strip the Wp-W pad columns: (B, Cout, hw_pad) -> NCHW (one cheap XLA slice).
    return out_flat[:, :, :n_out].reshape(B, cout, H, wp)[:, :, :, :W]


def split_attn_reference(x, params, *, radix=2, groups=1):
    # Pure-JAX (f32) reference mirroring the PyTorch forward exactly (NCHW).
    B, cin, H, W = x.shape
    conv_w = params["conv_w"]
    mid_chs = conv_w.shape[0]
    cout = mid_chs // radix
    y = lax.conv_general_dilated(
        x, conv_w, window_strides=(1, 1), padding=((1, 1), (1, 1)),
        feature_group_count=groups * radix,
        dimension_numbers=("NCHW", "OIHW", "NCHW"))
    y = jnp.maximum(y, 0.0)
    y5 = y.reshape(B, radix, cout, H, W)
    gap = y5.sum(axis=1).mean(axis=(2, 3))                        # (B, cout)
    w1 = params["fc1_w"].reshape(-1, cout)
    h = jnp.maximum(gap @ w1.T + params["fc1_b"], 0.0)            # (B, A)
    w2 = params["fc2_w"].reshape(mid_chs, -1)
    logits = h @ w2.T + params["fc2_b"]                           # (B, mid_chs)
    if radix > 1:
        lg = logits.reshape(B, groups, radix, -1).transpose(0, 2, 1, 3)
        attn = jax.nn.softmax(lg, axis=1).reshape(B, -1)
    else:
        attn = jax.nn.sigmoid(logits)                             # matches RadixSoftmax
    out = (y5 * attn.reshape(B, radix, cout, 1, 1)).sum(axis=1)
    return out


if __name__ == "__main__":
    B, cin, H, W = 2, 4, 16, 16
    radix, groups = 2, 1
    out_channels = cin
    mid_chs = out_channels * radix
    attn_chs = make_divisible(cin * radix * 0.25, min_value=32, divisor=8)

    key = jax.random.PRNGKey(0)
    k_x, k_c, k_w1, k_b1, k_w2, k_b2 = jax.random.split(key, 6)

    def bf16_round(a):  # MXU inputs are bf16; validate at matched input precision
        return a.astype(jnp.bfloat16).astype(jnp.float32)

    x = bf16_round(jax.random.normal(k_x, (B, cin, H, W), jnp.float32))
    params = {
        "conv_w": bf16_round(
            jax.random.normal(k_c, (mid_chs, cin // (groups * radix), 3, 3), jnp.float32) * 0.2),
        "fc1_w": jax.random.normal(k_w1, (attn_chs, out_channels, 1, 1), jnp.float32) * 0.2,
        "fc1_b": jax.random.normal(k_b1, (attn_chs,), jnp.float32) * 0.1,
        "fc2_w": jax.random.normal(k_w2, (mid_chs, attn_chs, 1, 1), jnp.float32) * 0.2,
        "fc2_b": jax.random.normal(k_b2, (mid_chs,), jnp.float32) * 0.1,
    }

    ref = split_attn_reference(x, params, radix=radix, groups=groups)

    # Tolerance covers the bf16 storage of the post-ReLU conv (y_scr); conv accumulation,
    # GAP and the softmax themselves run in f32.
    TOL = 2e-2

    # Auto-tiled path (single lane-dense tile for this feature-map size).
    out = jax.block_until_ready(split_attn_forward(x, params, radix=radix, groups=groups))
    assert out.shape == (B, out_channels, H, W)
    err = float(jnp.max(jnp.abs(out - ref)))
    if err > TOL:
        raise AssertionError(f"mismatch vs reference (single tile): max abs err = {err}")

    # Multi-tile path (streams hw tiles through both passes; exercises the tiled
    # GAP accumulation and the per-tile attention-apply/output writeback).
    out_t = jax.block_until_ready(
        split_attn_forward(x, params, radix=radix, groups=groups, hw_tile=128))
    err_t = float(jnp.max(jnp.abs(out_t - ref)))
    if err_t > TOL:
        raise AssertionError(f"mismatch vs reference (tiled): max abs err = {err_t}")

    print("KERNEL_OK")
</pallas_src>

<mosaic_0001>
module attributes {stable_mosaic.version = 11 : i64} {
  func.func @_splat_kernel(%arg0: i32, %arg1: i32, %arg2: i32, %arg3: memref<1x4x512xbf16, #tpu.memory_space<vmem>>, %arg4: memref<2x9x4x2xbf16, #tpu.memory_space<vmem>>, %arg5: memref<1x384xf32, #tpu.memory_space<vmem>>, %arg6: memref<32x4xf32, #tpu.memory_space<vmem>>, %arg7: memref<32x1xf32, #tpu.memory_space<vmem>>, %arg8: memref<2x4x32xf32, #tpu.memory_space<vmem>>, %arg9: memref<2x4x1xf32, #tpu.memory_space<vmem>>, %arg10: memref<1x4x384xf32, #tpu.memory_space<vmem>>, %arg11: memref<2x4x384xbf16, #tpu.memory_space<vmem>>, %arg12: memref<4x1xf32, #tpu.memory_space<vmem>>, %arg13: memref<2x4x1xf32, #tpu.memory_space<vmem>>) attributes {dimension_semantics = [#tpu.dimension_semantics<parallel>, #tpu.dimension_semantics<arbitrary>, #tpu.dimension_semantics<arbitrary>], iteration_bounds = array<i64: 2, 2, 1>, scalar_prefetch = 0 : i64, scratch_operands = 3 : i64, tpu.core_type = #tpu.core_type<tc>, window_params = [{transform_indices = @transform_0, window_bounds = array<i64: 1, 4, 512>}, {pipeline_mode = #tpu.pipeline_mode<synchronous>, transform_indices = @transform_1, window_bounds = array<i64: 2, 9, 4, 2>}, {transform_indices = @transform_2, window_bounds = array<i64: 1, 384>}, {pipeline_mode = #tpu.pipeline_mode<synchronous>, transform_indices = @transform_3, window_bounds = array<i64: 32, 4>}, {pipeline_mode = #tpu.pipeline_mode<synchronous>, transform_indices = @transform_4, window_bounds = array<i64: 32, 1>}, {pipeline_mode = #tpu.pipeline_mode<synchronous>, transform_indices = @transform_5, window_bounds = array<i64: 2, 4, 32>}, {pipeline_mode = #tpu.pipeline_mode<synchronous>, transform_indices = @transform_6, window_bounds = array<i64: 2, 4, 1>}, {transform_indices = @transform_7, window_bounds = array<i64: 1, 4, 384>}]} {
    %c384_i32 = arith.constant 384 : i32
    %0 = arith.muli %arg2, %c384_i32 : i32
    %1 = tpu.assume_multiple %0, 128 : i32
    %c0_i32 = arith.constant 0 : i32
    %2 = arith.cmpi eq, %arg1, %c0_i32 : i32
    %3 = arith.extui %2 : i1 to i32
    %c0_i32_0 = arith.constant 0 : i32
    %4 = arith.cmpi ne, %3, %c0_i32_0 : i32
    scf.if %4 {
      %c0_i32_2 = arith.constant 0 : i32
      %8 = arith.cmpi eq, %arg2, %c0_i32_2 : i32
      %9 = arith.extui %8 : i1 to i32
      %c0_i32_3 = arith.constant 0 : i32
      %10 = arith.cmpi ne, %9, %c0_i32_3 : i32
      scf.if %10 {
        %cst_106 = arith.constant 0.000000e+00 : f32
        %134 = vector.broadcast %cst_106 : f32 to vector<4x1xf32>
        %c0_107 = arith.constant 0 : index
        %c0_108 = arith.constant 0 : index
        %135 = vector.load %arg12[%c0_107, %c0_108] : memref<4x1xf32, #tpu.memory_space<vmem>>, vector<4x1xf32>
        tpu.vector_store %arg12[%c0_107, %c0_108], %134 {strides = array<i32>} : memref<4x1xf32, #tpu.memory_space<vmem>>, vector<4x1xf32>,
      } else {
      }
      %c0 = arith.constant 0 : index
      %c0_4 = arith.constant 0 : index
      %11 = vector.load %arg5[%c0, %c0_4] : memref<1x384xf32, #tpu.memory_space<vmem>>, vector<1x384xf32>
      %c0_5 = arith.constant 0 : index
      %c0_6 = arith.constant 0 : index
      %12 = arith.index_cast %1 : i32 to index
      %13 = vector.load %arg3[%c0_5, %c0_6, %12] : memref<1x4x512xbf16, #tpu.memory_space<vmem>>, vector<1x2x512xbf16>
      %14 = vector.shape_cast %13 : vector<1x2x512xbf16> to vector<2x512xbf16>
      %15 = vector.extract_strided_slice %14 {offsets = [0, 0], sizes = [2, 384], strides = [1, 1]} : vector<2x512xbf16> to vector<2x384xbf16>
      %c0_7 = arith.constant 0 : index
      %c0_8 = arith.constant 0 : index
      %c0_9 = arith.constant 0 : index
      %c0_10 = arith.constant 0 : index
      %16 = vector.load %arg4[%c0_7, %c0_8, %c0_9, %c0_10] : memref<2x9x4x2xbf16, #tpu.memory_space<vmem>>, vector<1x1x4x2xbf16>
      %17 = vector.shape_cast %16 : vector<1x1x4x2xbf16> to vector<4x2xbf16>
      %cst = arith.constant dense<0.000000e+00> : vector<4x384xf32>
      %18 = tpu.matmul %17, %15, %cst {dimension_numbers = #tpu.dot_dimension_numbers<[1], [0], [0], [1], [0, 0, 1, 1], [], []>} : vector<4x2xbf16>, vector<2x384xbf16>, vector<4x384xf32> -> vector<4x384xf32>
      %19 = vector.extract_strided_slice %14 {offsets = [0, 1], sizes = [2, 384], strides = [1, 1]} : vector<2x512xbf16> to vector<2x384xbf16>
      %c0_11 = arith.constant 0 : index
      %c1 = arith.constant 1 : index
      %c0_12 = arith.constant 0 : index
      %c0_13 = arith.constant 0 : index
      %20 = vector.load %arg4[%c0_11, %c1, %c0_12, %c0_13] : memref<2x9x4x2xbf16, #tpu.memory_space<vmem>>, vector<1x1x4x2xbf16>
      %21 = vector.shape_cast %20 : vector<1x1x4x2xbf16> to vector<4x2xbf16>
      %cst_14 = arith.constant dense<0.000000e+00> : vector<4x384xf32>
      %22 = tpu.matmul %21, %19, %cst_14 {dimension_numbers = #tpu.dot_dimension_numbers<[1], [0], [0], [1], [0, 0, 1, 1], [], []>} : vector<4x2xbf16>, vector<2x384xbf16>, vector<4x384xf32> -> vector<4x384xf32>
      %23 = arith.addf %18, %22 : vector<4x384xf32>
      %24 = vector.extract_strided_slice %14 {offsets = [0, 2], sizes = [2, 384], strides = [1, 1]} : vector<2x512xbf16> to vector<2x384xbf16>
      %c0_15 = arith.constant 0 : index
      %c2 = arith.constant 2 : index
      %c0_16 = arith.constant 0 : index
      %c0_17 = arith.constant 0 : index
      %25 = vector.load %arg4[%c0_15, %c2, %c0_16, %c0_17] : memref<2x9x4x2xbf16, #tpu.memory_space<vmem>>, vector<1x1x4x2xbf16>
      %26 = vector.shape_cast %25 : vector<1x1x4x2xbf16> to vector<4x2xbf16>
      %cst_18 = arith.constant dense<0.000000e+00> : vector<4x384xf32>
      %27 = tpu.matmul %26, %24, %cst_18 {dimension_numbers = #tpu.dot_dimension_numbers<[1], [0], [0], [1], [0, 0, 1, 1], [], []>} : vector<4x2xbf16>, vector<2x384xbf16>, vector<4x384xf32> -> vector<4x384xf32>
      %28 = arith.addf %23, %27 : vector<4x384xf32>
      %29 = vector.extract_strided_slice %14 {offsets = [0, 18], sizes = [2, 384], strides = [1, 1]} : vector<2x512xbf16> to vector<2x384xbf16>
      %c0_19 = arith.constant 0 : index
      %c3 = arith.constant 3 : index
      %c0_20 = arith.constant 0 : index
      %c0_21 = arith.constant 0 : index
      %30 = vector.load %arg4[%c0_19, %c3, %c0_20, %c0_21] : memref<2x9x4x2xbf16, #tpu.memory_space<vmem>>, vector<1x1x4x2xbf16>
      %31 = vector.shape_cast %30 : vector<1x1x4x2xbf16> to vector<4x2xbf16>
      %cst_22 = arith.constant dense<0.000000e+00> : vector<4x384xf32>
      %32 = tpu.matmul %31, %29, %cst_22 {dimension_numbers = #tpu.dot_dimension_numbers<[1], [0], [0], [1], [0, 0, 1, 1], [], []>} : vector<4x2xbf16>, vector<2x384xbf16>, vector<4x384xf32> -> vector<4x384xf32>
      %33 = arith.addf %28, %32 : vector<4x384xf32>
      %34 = vector.extract_strided_slice %14 {offsets = [0, 19], sizes = [2, 384], strides = [1, 1]} : vector<2x512xbf16> to vector<2x384xbf16>
      %c0_23 = arith.constant 0 : index
      %c4 = arith.constant 4 : index
      %c0_24 = arith.constant 0 : index
      %c0_25 = arith.constant 0 : index
      %35 = vector.load %arg4[%c0_23, %c4, %c0_24, %c0_25] : memref<2x9x4x2xbf16, #tpu.memory_space<vmem>>, vector<1x1x4x2xbf16>
      %36 = vector.shape_cast %35 : vector<1x1x4x2xbf16> to vector<4x2xbf16>
      %cst_26 = arith.constant dense<0.000000e+00> : vector<4x384xf32>
      %37 = tpu.matmul %36, %34, %cst_26 {dimension_numbers = #tpu.dot_dimension_numbers<[1], [0], [0], [1], [0, 0, 1, 1], [], []>} : vector<4x2xbf16>, vector<2x384xbf16>, vector<4x384xf32> -> vector<4x384xf32>
      %38 = arith.addf %33, %37 : vector<4x384xf32>
      %39 = vector.extract_strided_slice %14 {offsets = [0, 20], sizes = [2, 384], strides = [1, 1]} : vector<2x512xbf16> to vector<2x384xbf16>
      %c0_27 = arith.constant 0 : index
      %c5 = arith.constant 5 : index
      %c0_28 = arith.constant 0 : index
      %c0_29 = arith.constant 0 : index
      %40 = vector.load %arg4[%c0_27, %c5, %c0_28, %c0_29] : memref<2x9x4x2xbf16, #tpu.memory_space<vmem>>, vector<1x1x4x2xbf16>
      %41 = vector.shape_cast %40 : vector<1x1x4x2xbf16> to vector<4x2xbf16>
      %cst_30 = arith.constant dense<0.000000e+00> : vector<4x384xf32>
      %42 = tpu.matmul %41, %39, %cst_30 {dimension_numbers = #tpu.dot_dimension_numbers<[1], [0], [0], [1], [0, 0, 1, 1], [], []>} : vector<4x2xbf16>, vector<2x384xbf16>, vector<4x384xf32> -> vector<4x384xf32>
      %43 = arith.addf %38, %42 : vector<4x384xf32>
      %44 = vector.extract_strided_slice %14 {offsets = [0, 36], sizes = [2, 384], strides = [1, 1]} : vector<2x512xbf16> to vector<2x384xbf16>
      %c0_31 = arith.constant 0 : index
      %c6 = arith.constant 6 : index
      %c0_32 = arith.constant 0 : index
      %c0_33 = arith.constant 0 : index
      %45 = vector.load %arg4[%c0_31, %c6, %c0_32, %c0_33] : memref<2x9x4x2xbf16, #tpu.memory_space<vmem>>, vector<1x1x4x2xbf16>
      %46 = vector.shape_cast %45 : vector<1x1x4x2xbf16> to vector<4x2xbf16>
      %cst_34 = arith.constant dense<0.000000e+00> : vector<4x384xf32>
      %47 = tpu.matmul %46, %44, %cst_34 {dimension_numbers = #tpu.dot_dimension_numbers<[1], [0], [0], [1], [0, 0, 1, 1], [], []>} : vector<4x2xbf16>, vector<2x384xbf16>, vector<4x384xf32> -> vector<4x384xf32>
      %48 = arith.addf %43, %47 : vector<4x384xf32>
      %49 = vector.extract_strided_slice %14 {offsets = [0, 37], sizes = [2, 384], strides = [1, 1]} : vector<2x512xbf16> to vector<2x384xbf16>
      %c0_35 = arith.constant 0 : index
      %c7 = arith.constant 7 : index
      %c0_36 = arith.constant 0 : index
      %c0_37 = arith.constant 0 : index
      %50 = vector.load %arg4[%c0_35, %c7, %c0_36, %c0_37] : memref<2x9x4x2xbf16, #tpu.memory_space<vmem>>, vector<1x1x4x2xbf16>
      %51 = vector.shape_cast %50 : vector<1x1x4x2xbf16> to vector<4x2xbf16>
      %cst_38 = arith.constant dense<0.000000e+00> : vector<4x384xf32>
      %52 = tpu.matmul %51, %49, %cst_38 {dimension_numbers = #tpu.dot_dimension_numbers<[1], [0], [0], [1], [0, 0, 1, 1], [], []>} : vector<4x2xbf16>, vector<2x384xbf16>, vector<4x384xf32> -> vector<4x384xf32>
      %53 = arith.addf %48, %52 : vector<4x384xf32>
      %54 = vector.extract_strided_slice %14 {offsets = [0, 38], sizes = [2, 384], strides = [1, 1]} : vector<2x512xbf16> to vector<2x384xbf16>
      %c0_39 = arith.constant 0 : index
      %c8 = arith.constant 8 : index
      %c0_40 = arith.constant 0 : index
      %c0_41 = arith.constant 0 : index
      %55 = vector.load %arg4[%c0_39, %c8, %c0_40, %c0_41] : memref<2x9x4x2xbf16, #tpu.memory_space<vmem>>, vector<1x1x4x2xbf16>
      %56 = vector.shape_cast %55 : vector<1x1x4x2xbf16> to vector<4x2xbf16>
      %cst_42 = arith.constant dense<0.000000e+00> : vector<4x384xf32>
      %57 = tpu.matmul %56, %54, %cst_42 {dimension_numbers = #tpu.dot_dimension_numbers<[1], [0], [0], [1], [0, 0, 1, 1], [], []>} : vector<4x2xbf16>, vector<2x384xbf16>, vector<4x384xf32> -> vector<4x384xf32>
      %58 = arith.addf %53, %57 : vector<4x384xf32>
      %cst_43 = arith.constant 0.000000e+00 : f32
      %59 = vector.broadcast %cst_43 : f32 to vector<4x384xf32>
      %60 = arith.maximumf %58, %59 : vector<4x384xf32>
      %c0_44 = arith.constant 0 : index
      %c0_45 = arith.constant 0 : index
      %61 = vector.load %arg12[%c0_44, %c0_45] : memref<4x1xf32, #tpu.memory_space<vmem>>, vector<4x1xf32>
      %62 = vector.broadcast %11 : vector<1x384xf32> to vector<4x384xf32>
      %63 = arith.mulf %60, %62 : vector<4x384xf32>
      %cst_46 = arith.constant dense<0.000000e+00> : vector<4xf32>
      %64 = vector.multi_reduction <add>, %63, %cst_46 [1] : vector<4x384xf32> to vector<4xf32>
      %65 = vector.shape_cast %64 : vector<4xf32> to vector<4x1xf32>
      %66 = arith.addf %61, %65 : vector<4x1xf32>
      %c0_47 = arith.constant 0 : index
      %c0_48 = arith.constant 0 : index
      %67 = vector.load %arg12[%c0_47, %c0_48] : memref<4x1xf32, #tpu.memory_space<vmem>>, vector<4x1xf32>
      tpu.vector_store %arg12[%c0_47, %c0_48], %66 {strides = array<i32>} : memref<4x1xf32, #tpu.memory_space<vmem>>, vector<4x1xf32>,
      %68 = arith.truncf %60 : vector<4x384xf32> to vector<4x384xbf16>
      %c0_49 = arith.constant 0 : index
      %c0_50 = arith.constant 0 : index
      %69 = arith.index_cast %1 : i32 to index
      %70 = vector.load %arg11[%c0_49, %c0_50, %69] : memref<2x4x384xbf16, #tpu.memory_space<vmem>>, vector<1x4x384xbf16>
      %71 = vector.shape_cast %70 : vector<1x4x384xbf16> to vector<4x384xbf16>
      %72 = vector.shape_cast %68 : vector<4x384xbf16> to vector<1x4x384xbf16>
      tpu.vector_store %arg11[%c0_49, %c0_50, %69], %72 {strides = array<i32>} : memref<2x4x384xbf16, #tpu.memory_space<vmem>>, vector<1x4x384xbf16>,
      %c0_51 = arith.constant 0 : index
      %c2_52 = arith.constant 2 : index
      %73 = arith.index_cast %1 : i32 to index
      %74 = vector.load %arg3[%c0_51, %c2_52, %73] : memref<1x4x512xbf16, #tpu.memory_space<vmem>>, vector<1x2x512xbf16>
      %75 = vector.shape_cast %74 : vector<1x2x512xbf16> to vector<2x512xbf16>
      %76 = vector.extract_strided_slice %75 {offsets = [0, 0], sizes = [2, 384], strides = [1, 1]} : vector<2x512xbf16> to vector<2x384xbf16>
      %c1_53 = arith.constant 1 : index
      %c0_54 = arith.constant 0 : index
      %c0_55 = arith.constant 0 : index
      %c0_56 = arith.constant 0 : index
      %77 = vector.load %arg4[%c1_53, %c0_54, %c0_55, %c0_56] : memref<2x9x4x2xbf16, #tpu.memory_space<vmem>>, vector<1x1x4x2xbf16>
      %78 = vector.shape_cast %77 : vector<1x1x4x2xbf16> to vector<4x2xbf16>
      %cst_57 = arith.constant dense<0.000000e+00> : vector<4x384xf32>
      %79 = tpu.matmul %78, %76, %cst_57 {dimension_numbers = #tpu.dot_dimension_numbers<[1], [0], [0], [1], [0, 0, 1, 1], [], []>} : vector<4x2xbf16>, vector<2x384xbf16>, vector<4x384xf32> -> vector<4x384xf32>
      %80 = vector.extract_strided_slice %75 {offsets = [0, 1], sizes = [2, 384], strides = [1, 1]} : vector<2x512xbf16> to vector<2x384xbf16>
      %c1_58 = arith.constant 1 : index
      %c1_59 = arith.constant 1 : index
      %c0_60 = arith.constant 0 : index
      %c0_61 = arith.constant 0 : index
      %81 = vector.load %arg4[%c1_58, %c1_59, %c0_60, %c0_61] : memref<2x9x4x2xbf16, #tpu.memory_space<vmem>>, vector<1x1x4x2xbf16>
      %82 = vector.shape_cast %81 : vector<1x1x4x2xbf16> to vector<4x2xbf16>
      %cst_62 = arith.constant dense<0.000000e+00> : vector<4x384xf32>
      %83 = tpu.matmul %82, %80, %cst_62 {dimension_numbers = #tpu.dot_dimension_numbers<[1], [0], [0], [1], [0, 0, 1, 1], [], []>} : vector<4x2xbf16>, vector<2x384xbf16>, vector<4x384xf32> -> vector<4x384xf32>
      %84 = arith.addf %79, %83 : vector<4x384xf32>
      %85 = vector.extract_strided_slice %75 {offsets = [0, 2], sizes = [2, 384], strides = [1, 1]} : vector<2x512xbf16> to vector<2x384xbf16>
      %c1_63 = arith.constant 1 : index
      %c2_64 = arith.constant 2 : index
      %c0_65 = arith.constant 0 : index
      %c0_66 = arith.constant 0 : index
      %86 = vector.load %arg4[%c1_63, %c2_64, %c0_65, %c0_66] : memref<2x9x4x2xbf16, #tpu.memory_space<vmem>>, vector<1x1x4x2xbf16>
      %87 = vector.shape_cast %86 : vector<1x1x4x2xbf16> to vector<4x2xbf16>
      %cst_67 = arith.constant dense<0.000000e+00> : vector<4x384xf32>
      %88 = tpu.matmul %87, %85, %cst_67 {dimension_numbers = #tpu.dot_dimension_numbers<[1], [0], [0], [1], [0, 0, 1, 1], [], []>} : vector<4x2xbf16>, vector<2x384xbf16>, vector<4x384xf32> -> vector<4x384xf32>
      %89 = arith.addf %84, %88 : vector<4x384xf32>
      %90 = vector.extract_strided_slice %75 {offsets = [0, 18], sizes = [2, 384], strides = [1, 1]} : vector<2x512xbf16> to vector<2x384xbf16>
      %c1_68 = arith.constant 1 : index
      %c3_69 = arith.constant 3 : index
      %c0_70 = arith.constant 0 : index
      %c0_71 = arith.constant 0 : index
      %91 = vector.load %arg4[%c1_68, %c3_69, %c0_70, %c0_71] : memref<2x9x4x2xbf16, #tpu.memory_space<vmem>>, vector<1x1x4x2xbf16>
      %92 = vector.shape_cast %91 : vector<1x1x4x2xbf16> to vector<4x2xbf16>
      %cst_72 = arith.constant dense<0.000000e+00> : vector<4x384xf32>
      %93 = tpu.matmul %92, %90, %cst_72 {dimension_numbers = #tpu.dot_dimension_numbers<[1], [0], [0], [1], [0, 0, 1, 1], [], []>} : vector<4x2xbf16>, vector<2x384xbf16>, vector<4x384xf32> -> vector<4x384xf32>
      %94 = arith.addf %89, %93 : vector<4x384xf32>
      %95 = vector.extract_strided_slice %75 {offsets = [0, 19], sizes = [2, 384], strides = [1, 1]} : vector<2x512xbf16> to vector<2x384xbf16>
      %c1_73 = arith.constant 1 : index
      %c4_74 = arith.constant 4 : index
      %c0_75 = arith.constant 0 : index
      %c0_76 = arith.constant 0 : index
      %96 = vector.load %arg4[%c1_73, %c4_74, %c0_75, %c0_76] : memref<2x9x4x2xbf16, #tpu.memory_space<vmem>>, vector<1x1x4x2xbf16>
      %97 = vector.shape_cast %96 : vector<1x1x4x2xbf16> to vector<4x2xbf16>
      %cst_77 = arith.constant dense<0.000000e+00> : vector<4x384xf32>
      %98 = tpu.matmul %97, %95, %cst_77 {dimension_numbers = #tpu.dot_dimension_numbers<[1], [0], [0], [1], [0, 0, 1, 1], [], []>} : vector<4x2xbf16>, vector<2x384xbf16>, vector<4x384xf32> -> vector<4x384xf32>
      %99 = arith.addf %94, %98 : vector<4x384xf32>
      %100 = vector.extract_strided_slice %75 {offsets = [0, 20], sizes = [2, 384], strides = [1, 1]} : vector<2x512xbf16> to vector<2x384xbf16>
      %c1_78 = arith.constant 1 : index
      %c5_79 = arith.constant 5 : index
      %c0_80 = arith.constant 0 : index
      %c0_81 = arith.constant 0 : index
      %101 = vector.load %arg4[%c1_78, %c5_79, %c0_80, %c0_81] : memref<2x9x4x2xbf16, #tpu.memory_space<vmem>>, vector<1x1x4x2xbf16>
      %102 = vector.shape_cast %101 : vector<1x1x4x2xbf16> to vector<4x2xbf16>
      %cst_82 = arith.constant dense<0.000000e+00> : vector<4x384xf32>
      %103 = tpu.matmul %102, %100, %cst_82 {dimension_numbers = #tpu.dot_dimension_numbers<[1], [0], [0], [1], [0, 0, 1, 1], [], []>} : vector<4x2xbf16>, vector<2x384xbf16>, vector<4x384xf32> -> vector<4x384xf32>
      %104 = arith.addf %99, %103 : vector<4x384xf32>
      %105 = vector.extract_strided_slice %75 {offsets = [0, 36], sizes = [2, 384], strides = [1, 1]} : vector<2x512xbf16> to vector<2x384xbf16>
      %c1_83 = arith.constant 1 : index
      %c6_84 = arith.constant 6 : index
      %c0_85 = arith.constant 0 : index
      %c0_86 = arith.constant 0 : index
      %106 = vector.load %arg4[%c1_83, %c6_84, %c0_85, %c0_86] : memref<2x9x4x2xbf16, #tpu.memory_space<vmem>>, vector<1x1x4x2xbf16>
      %107 = vector.shape_cast %106 : vector<1x1x4x2xbf16> to vector<4x2xbf16>
      %cst_87 = arith.constant dense<0.000000e+00> : vector<4x384xf32>
      %108 = tpu.matmul %107, %105, %cst_87 {dimension_numbers = #tpu.dot_dimension_numbers<[1], [0], [0], [1], [0, 0, 1, 1], [], []>} : vector<4x2xbf16>, vector<2x384xbf16>, vector<4x384xf32> -> vector<4x384xf32>
      %109 = arith.addf %104, %108 : vector<4x384xf32>
      %110 = vector.extract_strided_slice %75 {offsets = [0, 37], sizes = [2, 384], strides = [1, 1]} : vector<2x512xbf16> to vector<2x384xbf16>
      %c1_88 = arith.constant 1 : index
      %c7_89 = arith.constant 7 : index
      %c0_90 = arith.constant 0 : index
      %c0_91 = arith.constant 0 : index
      %111 = vector.load %arg4[%c1_88, %c7_89, %c0_90, %c0_91] : memref<2x9x4x2xbf16, #tpu.memory_space<vmem>>, vector<1x1x4x2xbf16>
      %112 = vector.shape_cast %111 : vector<1x1x4x2xbf16> to vector<4x2xbf16>
      %cst_92 = arith.constant dense<0.000000e+00> : vector<4x384xf32>
      %113 = tpu.matmul %112, %110, %cst_92 {dimension_numbers = #tpu.dot_dimension_numbers<[1], [0], [0], [1], [0, 0, 1, 1], [], []>} : vector<4x2xbf16>, vector<2x384xbf16>, vector<4x384xf32> -> vector<4x384xf32>
      %114 = arith.addf %109, %113 : vector<4x384xf32>
      %115 = vector.extract_strided_slice %75 {offsets = [0, 38], sizes = [2, 384], strides = [1, 1]} : vector<2x512xbf16> to vector<2x384xbf16>
      %c1_93 = arith.constant 1 : index
      %c8_94 = arith.constant 8 : index
      %c0_95 = arith.constant 0 : index
      %c0_96 = arith.constant 0 : index
      %116 = vector.load %arg4[%c1_93, %c8_94, %c0_95, %c0_96] : memref<2x9x4x2xbf16, #tpu.memory_space<vmem>>, vector<1x1x4x2xbf16>
      %117 = vector.shape_cast %116 : vector<1x1x4x2xbf16> to vector<4x2xbf16>
      %cst_97 = arith.constant dense<0.000000e+00> : vector<4x384xf32>
      %118 = tpu.matmul %117, %115, %cst_97 {dimension_numbers = #tpu.dot_dimension_numbers<[1], [0], [0], [1], [0, 0, 1, 1], [], []>} : vector<4x2xbf16>, vector<2x384xbf16>, vector<4x384xf32> -> vector<4x384xf32>
      %119 = arith.addf %114, %118 : vector<4x384xf32>
      %cst_98 = arith.constant 0.000000e+00 : f32
      %120 = vector.broadcast %cst_98 : f32 to vector<4x384xf32>
      %121 = arith.maximumf %119, %120 : vector<4x384xf32>
      %c0_99 = arith.constant 0 : index
      %c0_100 = arith.constant 0 : index
      %122 = vector.load %arg12[%c0_99, %c0_100] : memref<4x1xf32, #tpu.memory_space<vmem>>, vector<4x1xf32>
      %123 = vector.broadcast %11 : vector<1x384xf32> to vector<4x384xf32>
      %124 = arith.mulf %121, %123 : vector<4x384xf32>
      %cst_101 = arith.constant dense<0.000000e+00> : vector<4xf32>
      %125 = vector.multi_reduction <add>, %124, %cst_101 [1] : vector<4x384xf32> to vector<4xf32>
      %126 = vector.shape_cast %125 : vector<4xf32> to vector<4x1xf32>
      %127 = arith.addf %122, %126 : vector<4x1xf32>
      %c0_102 = arith.constant 0 : index
      %c0_103 = arith.constant 0 : index
      %128 = vector.load %arg12[%c0_102, %c0_103] : memref<4x1xf32, #tpu.memory_space<vmem>>, vector<4x1xf32>
      tpu.vector_store %arg12[%c0_102, %c0_103], %127 {strides = array<i32>} : memref<4x1xf32, #tpu.memory_space<vmem>>, vector<4x1xf32>,
      %129 = arith.truncf %121 : vector<4x384xf32> to vector<4x384xbf16>
      %c1_104 = arith.constant 1 : index
      %c0_105 = arith.constant 0 : index
      %130 = arith.index_cast %1 : i32 to index
      %131 = vector.load %arg11[%c1_104, %c0_105, %130] : memref<2x4x384xbf16, #tpu.memory_space<vmem>>, vector<1x4x384xbf16>
      %132 = vector.shape_cast %131 : vector<1x4x384xbf16> to vector<4x384xbf16>
      %133 = vector.shape_cast %129 : vector<4x384xbf16> to vector<1x4x384xbf16>
      tpu.vector_store %arg11[%c1_104, %c0_105, %130], %133 {strides = array<i32>} : memref<2x4x384xbf16, #tpu.memory_space<vmem>>, vector<1x4x384xbf16>,
    } else {
    }
    %c1_i32 = arith.constant 1 : i32
    %5 = arith.cmpi eq, %arg1, %c1_i32 : i32
    %6 = arith.extui %5 : i1 to i32
    %c0_i32_1 = arith.constant 0 : i32
    %7 = arith.cmpi ne, %6, %c0_i32_1 : i32
    scf.if %7 {
      %c0_i32_2 = arith.constant 0 : i32
      %8 = arith.cmpi eq, %arg2, %c0_i32_2 : i32
      %9 = arith.extui %8 : i1 to i32
      %c0_i32_3 = arith.constant 0 : i32
      %10 = arith.cmpi ne, %9, %c0_i32_3 : i32
      scf.if %10 {
        %c0_15 = arith.constant 0 : index
        %c0_16 = arith.constant 0 : index
        %31 = vector.load %arg12[%c0_15, %c0_16] : memref<4x1xf32, #tpu.memory_space<vmem>>, vector<4x1xf32>
        %cst = arith.constant 3.906250e-03 : f32
        %32 = vector.broadcast %cst : f32 to vector<4x1xf32>
        %33 = arith.mulf %31, %32 : vector<4x1xf32>
        %c0_17 = arith.constant 0 : index
        %c0_18 = arith.constant 0 : index
        %34 = vector.load %arg6[%c0_17, %c0_18] : memref<32x4xf32, #tpu.memory_space<vmem>>, vector<32x4xf32>
        %cst_19 = arith.constant dense<0.000000e+00> : vector<32x1xf32>
        %35 = tpu.matmul %34, %33, %cst_19 {dimension_numbers = #tpu.dot_dimension_numbers<[1], [0], [0], [1], [0, 0, 1, 1], [], []>} : vector<32x4xf32>, vector<4x1xf32>, vector<32x1xf32> -> vector<32x1xf32>
        %c0_20 = arith.constant 0 : index
        %c0_21 = arith.constant 0 : index
        %36 = vector.load %arg7[%c0_20, %c0_21] : memref<32x1xf32, #tpu.memory_space<vmem>>, vector<32x1xf32>
        %37 = arith.addf %35, %36 : vector<32x1xf32>
        %cst_22 = arith.constant 0.000000e+00 : f32
        %38 = vector.broadcast %cst_22 : f32 to vector<32x1xf32>
        %39 = arith.maximumf %37, %38 : vector<32x1xf32>
        %c0_23 = arith.constant 0 : index
        %c0_24 = arith.constant 0 : index
        %c0_25 = arith.constant 0 : index
        %40 = vector.load %arg8[%c0_23, %c0_24, %c0_25] : memref<2x4x32xf32, #tpu.memory_space<vmem>>, vector<1x4x32xf32>
        %41 = vector.shape_cast %40 : vector<1x4x32xf32> to vector<4x32xf32>
        %cst_26 = arith.constant dense<0.000000e+00> : vector<4x1xf32>
        %42 = tpu.matmul %41, %39, %cst_26 {dimension_numbers = #tpu.dot_dimension_numbers<[1], [0], [0], [1], [0, 0, 1, 1], [], []>} : vector<4x32xf32>, vector<32x1xf32>, vector<4x1xf32> -> vector<4x1xf32>
        %c0_27 = arith.constant 0 : index
        %c0_28 = arith.constant 0 : index
        %c0_29 = arith.constant 0 : index
        %43 = vector.load %arg9[%c0_27, %c0_28, %c0_29] : memref<2x4x1xf32, #tpu.memory_space<vmem>>, vector<1x4x1xf32>
        %44 = vector.shape_cast %43 : vector<1x4x1xf32> to vector<4x1xf32>
        %45 = arith.addf %42, %44 : vector<4x1xf32>
        %c1_30 = arith.constant 1 : index
        %c0_31 = arith.constant 0 : index
        %c0_32 = arith.constant 0 : index
        %46 = vector.load %arg8[%c1_30, %c0_31, %c0_32] : memref<2x4x32xf32, #tpu.memory_space<vmem>>, vector<1x4x32xf32>
        %47 = vector.shape_cast %46 : vector<1x4x32xf32> to vector<4x32xf32>
        %cst_33 = arith.constant dense<0.000000e+00> : vector<4x1xf32>
        %48 = tpu.matmul %47, %39, %cst_33 {dimension_numbers = #tpu.dot_dimension_numbers<[1], [0], [0], [1], [0, 0, 1, 1], [], []>} : vector<4x32xf32>, vector<32x1xf32>, vector<4x1xf32> -> vector<4x1xf32>
        %c1_34 = arith.constant 1 : index
        %c0_35 = arith.constant 0 : index
        %c0_36 = arith.constant 0 : index
        %49 = vector.load %arg9[%c1_34, %c0_35, %c0_36] : memref<2x4x1xf32, #tpu.memory_space<vmem>>, vector<1x4x1xf32>
        %50 = vector.shape_cast %49 : vector<1x4x1xf32> to vector<4x1xf32>
        %51 = arith.addf %48, %50 : vector<4x1xf32>
        %52 = arith.subf %51, %45 : vector<4x1xf32>
        %53 = math.exp %52 : vector<4x1xf32>
        %cst_37 = arith.constant 1.000000e+00 : f32
        %54 = vector.broadcast %cst_37 : f32 to vector<4x1xf32>
        %55 = arith.addf %54, %53 : vector<4x1xf32>
        %cst_38 = arith.constant 1.000000e+00 : f32
        %56 = vector.broadcast %cst_38 : f32 to vector<4x1xf32>
        %57 = arith.divf %56, %55 : vector<4x1xf32>
        %cst_39 = arith.constant 1.000000e+00 : f32
        %58 = vector.broadcast %cst_39 : f32 to vector<4x1xf32>
        %59 = arith.subf %58, %57 : vector<4x1xf32>
        %c0_40 = arith.constant 0 : index
        %c0_41 = arith.constant 0 : index
        %c0_42 = arith.constant 0 : index
        %60 = vector.load %arg13[%c0_40, %c0_41, %c0_42] : memref<2x4x1xf32, #tpu.memory_space<vmem>>, vector<1x4x1xf32>
        %61 = vector.shape_cast %60 : vector<1x4x1xf32> to vector<4x1xf32>
        %62 = vector.shape_cast %57 : vector<4x1xf32> to vector<1x4x1xf32>
        tpu.vector_store %arg13[%c0_40, %c0_41, %c0_42], %62 {strides = array<i32>} : memref<2x4x1xf32, #tpu.memory_space<vmem>>, vector<1x4x1xf32>,
        %c1_43 = arith.constant 1 : index
        %c0_44 = arith.constant 0 : index
        %c0_45 = arith.constant 0 : index
        %63 = vector.load %arg13[%c1_43, %c0_44, %c0_45] : memref<2x4x1xf32, #tpu.memory_space<vmem>>, vector<1x4x1xf32>
        %64 = vector.shape_cast %63 : vector<1x4x1xf32> to vector<4x1xf32>
        %65 = vector.shape_cast %59 : vector<4x1xf32> to vector<1x4x1xf32>
        tpu.vector_store %arg13[%c1_43, %c0_44, %c0_45], %65 {strides = array<i32>} : memref<2x4x1xf32, #tpu.memory_space<vmem>>, vector<1x4x1xf32>,
      } else {
      }
      %c0 = arith.constant 0 : index
      %c0_4 = arith.constant 0 : index
      %11 = arith.index_cast %1 : i32 to index
      %12 = vector.load %arg11[%c0, %c0_4, %11] : memref<2x4x384xbf16, #tpu.memory_space<vmem>>, vector<1x4x384xbf16>
      %13 = vector.shape_cast %12 : vector<1x4x384xbf16> to vector<4x384xbf16>
      %14 = arith.extf %13 : vector<4x384xbf16> to vector<4x384xf32>
      %c0_5 = arith.constant 0 : index
      %c0_6 = arith.constant 0 : index
      %c0_7 = arith.constant 0 : index
      %15 = vector.load %arg13[%c0_5, %c0_6, %c0_7] : memref<2x4x1xf32, #tpu.memory_space<vmem>>, vector<1x4x1xf32>
      %16 = vector.shape_cast %15 : vector<1x4x1xf32> to vector<4x1xf32>
      %17 = vector.broadcast %16 : vector<4x1xf32> to vector<4x384xf32>
      %18 = arith.mulf %14, %17 : vector<4x384xf32>
      %c1 = arith.constant 1 : index
      %c0_8 = arith.constant 0 : index
      %19 = arith.index_cast %1 : i32 to index
      %20 = vector.load %arg11[%c1, %c0_8, %19] : memref<2x4x384xbf16, #tpu.memory_space<vmem>>, vector<1x4x384xbf16>
      %21 = vector.shape_cast %20 : vector<1x4x384xbf16> to vector<4x384xbf16>
      %22 = arith.extf %21 : vector<4x384xbf16> to vector<4x384xf32>
      %c1_9 = arith.constant 1 : index
      %c0_10 = arith.constant 0 : index
      %c0_11 = arith.constant 0 : index
      %23 = vector.load %arg13[%c1_9, %c0_10, %c0_11] : memref<2x4x1xf32, #tpu.memory_space<vmem>>, vector<1x4x1xf32>
      %24 = vector.shape_cast %23 : vector<1x4x1xf32> to vector<4x1xf32>
      %25 = vector.broadcast %24 : vector<4x1xf32> to vector<4x384xf32>
      %26 = arith.mulf %22, %25 : vector<4x384xf32>
      %27 = arith.addf %18, %26 : vector<4x384xf32>
      %c0_12 = arith.constant 0 : index
      %c0_13 = arith.constant 0 : index
      %c0_14 = arith.constant 0 : index
      %28 = vector.load %arg10[%c0_12, %c0_13, %c0_14] : memref<1x4x384xf32, #tpu.memory_space<vmem>>, vector<1x4x384xf32>
      %29 = vector.shape_cast %28 : vector<1x4x384xf32> to vector<4x384xf32>
      %30 = vector.shape_cast %27 : vector<4x384xf32> to vector<1x4x384xf32>
      tpu.vector_store %arg10[%c0_12, %c0_13, %c0_14], %30 {strides = array<i32>} : memref<1x4x384xf32, #tpu.memory_space<vmem>>, vector<1x4x384xf32>,
    } else {
    }
    return
  }
  func.func @transform_0(%arg0: i32, %arg1: i32, %arg2: i32) -> (i32, i32, i32) {
    %c0_i32 = arith.constant 0 : i32
    %c0_i32_0 = arith.constant 0 : i32
    %c0_i32_1 = arith.constant 0 : i32
    return %arg0, %c0_i32, %c0_i32_0 : i32, i32, i32
  }
  func.func @transform_1(%arg0: i32, %arg1: i32, %arg2: i32) -> (i32, i32, i32, i32) {
    %c0_i32 = arith.constant 0 : i32
    %c0_i32_0 = arith.constant 0 : i32
    %c0_i32_1 = arith.constant 0 : i32
    %c0_i32_2 = arith.constant 0 : i32
    %c0_i32_3 = arith.constant 0 : i32
    return %c0_i32, %c0_i32_0, %c0_i32_1, %c0_i32_2 : i32, i32, i32, i32
  }
  func.func @transform_2(%arg0: i32, %arg1: i32, %arg2: i32) -> (i32, i32) {
    %c0_i32 = arith.constant 0 : i32
    %c0_i32_0 = arith.constant 0 : i32
    return %c0_i32, %arg2 : i32, i32
  }
  func.func @transform_3(%arg0: i32, %arg1: i32, %arg2: i32) -> (i32, i32) {
    %c0_i32 = arith.constant 0 : i32
    %c0_i32_0 = arith.constant 0 : i32
    %c0_i32_1 = arith.constant 0 : i32
    return %c0_i32, %c0_i32_0 : i32, i32
  }
  func.func @transform_4(%arg0: i32, %arg1: i32, %arg2: i32) -> (i32, i32) {
    %c0_i32 = arith.constant 0 : i32
    %c0_i32_0 = arith.constant 0 : i32
    %c0_i32_1 = arith.constant 0 : i32
    return %c0_i32, %c0_i32_0 : i32, i32
  }
  func.func @transform_5(%arg0: i32, %arg1: i32, %arg2: i32) -> (i32, i32, i32) {
    %c0_i32 = arith.constant 0 : i32
    %c0_i32_0 = arith.constant 0 : i32
    %c0_i32_1 = arith.constant 0 : i32
    %c0_i32_2 = arith.constant 0 : i32
    return %c0_i32, %c0_i32_0, %c0_i32_1 : i32, i32, i32
  }
  func.func @transform_6(%arg0: i32, %arg1: i32, %arg2: i32) -> (i32, i32, i32) {
    %c0_i32 = arith.constant 0 : i32
    %c0_i32_0 = arith.constant 0 : i32
    %c0_i32_1 = arith.constant 0 : i32
    %c0_i32_2 = arith.constant 0 : i32
    return %c0_i32, %c0_i32_0, %c0_i32_1 : i32, i32, i32
  }
  func.func @transform_7(%arg0: i32, %arg1: i32, %arg2: i32) -> (i32, i32, i32) {
    %0 = arith.muli %arg2, %arg1 : i32
    %c0_i32 = arith.constant 0 : i32
    %c0_i32_0 = arith.constant 0 : i32
    return %arg0, %c0_i32, %0 : i32, i32, i32
  }
}

</mosaic_0001>

<llo_original>
// kernel: tpu_custom_call.1
$region0: #{tpu_custom_call.1}
  #allocation0 [shape = 'u32[]', space=smem, size = 0x4, offset = 0x4, fixed_abs, tag = 'smem constant byte address 0x4 - core index']
  #allocation1 [shape = 'u32[144,128]{1,0:T(1,128)}', space=vmem, size = 0x12000, scoped, tag = 'internal scratch']
  #allocation2 [shape = 'bf16[2,4,384]{2,1,0:T(4,128)(2,1)}', space=vmem, size = 0x1800, scoped, tag = 'scratch operand']
  #allocation3 [shape = 'f32[4,1]{1,0:T(4,128)}', space=vmem, size = 0x800, scoped, tag = 'scratch operand']
  #allocation4 [shape = 'f32[2,4,1]{2,1,0:T(4,128)}', space=vmem, size = 0x1000, scoped, tag = 'scratch operand']
  %s0 = inlined_call_operand.vmem [shape: bf16[2,4,512], index: 0, kind: input, shape index: {}]
  %s1 = inlined_call_operand.vmem [shape: bf16[2,9,4,2], index: 1, kind: input, shape index: {}]
  %s2 = inlined_call_operand.vmem [shape: f32[1,384], index: 2, kind: input, shape index: {}]
  %s3 = inlined_call_operand.vmem [shape: f32[32,4], index: 3, kind: input, shape index: {}]
  %s4 = inlined_call_operand.vmem [shape: f32[32,1], index: 4, kind: input, shape index: {}]
  %s5 = inlined_call_operand.vmem [shape: f32[2,4,32], index: 5, kind: input, shape index: {}]
  %s6 = inlined_call_operand.vmem [shape: f32[2,4,1], index: 6, kind: input, shape index: {}]
  %s7 = inlined_call_operand.hbm [shape: f32[2,4,384], index: 7, kind: output, shape index: {}]
  %s8 = sld [smem:[#allocation0]]
  $region77: #{tpu_custom_call.1} parent=0
    _
  %s10 = ssub.s32 1, %s8
  %s11 = scalar_select 0, %s10, %s8
  $region1: #{tpu_custom_call.1} parent=0
    #allocation5 [shape = 'u8[12288]{0}', space=vmem, size = 0x3000, scoped, tag = 'output window, operand 0']
    #allocation6 [shape = 's32[2]{0}', space=sflag, size = 0x8, scoped, tag = 'scoped memory for tpu_custom_call.1']
    %12 = vsyncpa [#allocation6], 0
    %s13 = scalar_lea.sflag [#allocation6], 1
    %14 = vsyncpa %s13, 0
    loop: start=0, step=1, limit=6
    $region2: #{tpu_custom_call.1} parent=1 // loop_pre_header
      _
    $region3: #{tpu_custom_call.1} parent=1 // loop_header
      %s16 = sphi 0, %s20
      %p17 = scmp.ge.s32.totalorder %s16, 6
      %s23 = sphi 0, %s42
      %s24 = sphi 0, %s38
      %s25 = sphi 0, %s34
      %s26 = sphi 0, %s23
      %s27 = sphi 0, %s24
      %s28 = sphi 0, %s25
      %s29 = sphi 0, %s26
      %s30 = sphi 0, %s27
      %s31 = sphi 0, %s28
      %s45 = sphi 0, %s47
      %s48 = sphi 0, %s45
      %s49 = sphi 0, %s48
      %s65 = sphi 0, %s49
      %s69 = sphi 0, %s69
      %s71 = sphi 0, %s69
      %s72 = sphi 0, %s71
      %s86 = sphi 0, %s72
      %s92 = sphi 0, %s94
      %s95 = sphi 0, %s92
      %s96 = sphi 0, %s95
      %s112 = sphi 0, %s96
      %s116 = sphi 0, %s116
      %s118 = sphi 0, %s116
      %s119 = sphi 0, %s118
      %s133 = sphi 0, %s119
      %s137 = sphi 0, %s137
      %s139 = sphi 0, %s137
      %s140 = sphi 0, %s139
      %s154 = sphi 0, %s140
      %s158 = sphi 0, %s158
      %s160 = sphi 0, %s158
      %s161 = sphi 0, %s160
      %s175 = sphi 0, %s161
      %s179 = sphi 0, %s179
      %s181 = sphi 0, %s179
      %s182 = sphi 0, %s181
      %s196 = sphi 0, %s182
      %s206 = sphi 0, %s208
      %s209 = sphi 0, %s206
      %s210 = sphi 0, %s209
      %s226 = sphi 0, %s210
    $region4: #{tpu_custom_call.1} parent=1 // loop_header_branch
      %19 = sbr.rel (%p17) target = $region8
    $region5: #{tpu_custom_call.1} parent=1 // loop_body
      %s21 = ssub.s32 %s16, 1
      %s22 = ssub.s32 %s16, 2
      %s32 = sadd.s32 1, %s25
      %p33 = scmp.ge.s32.totalorder %s32, 1
      %s34 = scalar_select %p33, 0, %s32
      %s35 = sadd.s32 1, %s24
      %s36 = scalar_select %p33, %s35, %s24
      %p37 = scmp.ge.s32.totalorder %s36, 2
      %s38 = scalar_select %p37, 0, %s36
      %s39 = sadd.s32 1, %s23
      %s40 = scalar_select %p37, %s39, %s23
      %p41 = scmp.ge.s32.totalorder %s40, 2
      %s42 = scalar_select %p41, 0, %s40
      %s43 = ssub.s32 %s23, %s42
      %p44 = scmp.eq.s32.totalorder %s43, 0
      %s46 = sadd.s32 %s45, 1
      %s47 = scalar_select %p44, %s45, %s46
      %p50 = pneg %p44
      %p51 = scmp.eq.s32.totalorder %s16, 3
      %p52 = por %p50, %p51
      %p53 = scmp.ne.s32.totalorder %s45, %s48
      %p54 = scmp.eq.s32.totalorder %s16, 0
      %p55 = por %p53, %p54
      %p56 = scmp.ne.s32.totalorder %s45, %s48
      %p57 = scmp.eq.s32.totalorder %s21, 3
      %p58 = por %p56, %p57
      %p59 = scmp.ne.s32.totalorder %s48, %s49
      %p60 = scmp.eq.s32.totalorder %s21, 0
      %p61 = por %p59, %p60
      %p62 = scmp.ne.s32.totalorder %s48, %s49
      %p63 = scmp.eq.s32.totalorder %s22, 3
      %p64 = por %p62, %p63
      %p66 = scmp.ne.s32.totalorder %s49, %s65
      %p67 = scmp.eq.s32.totalorder %s22, 0
      %p68 = por %p66, %p67
      %s70 = sadd.s32 %s69, 1
      %p73 = scmp.eq.s32.totalorder %s16, 3
      %p74 = scmp.ne.s32.totalorder %s69, %s71
      %p75 = scmp.eq.s32.totalorder %s16, 0
      %p76 = por %p74, %p75
      %p77 = scmp.ne.s32.totalorder %s69, %s71
      %p78 = scmp.eq.s32.totalorder %s21, 3
      %p79 = por %p77, %p78
      %p80 = scmp.ne.s32.totalorder %s71, %s72
      %p81 = scmp.eq.s32.totalorder %s21, 0
      %p82 = por %p80, %p81
      %p83 = scmp.ne.s32.totalorder %s71, %s72
      %p84 = scmp.eq.s32.totalorder %s22, 3
      %p85 = por %p83, %p84
      %p87 = scmp.ne.s32.totalorder %s72, %s86
      %p88 = scmp.eq.s32.totalorder %s22, 0
      %p89 = por %p87, %p88
      %s90 = ssub.s32 %s25, %s34
      %p91 = scmp.eq.s32.totalorder %s90, 0
      %s93 = sadd.s32 %s92, 1
      %s94 = scalar_select %p91, %s92, %s93
      %p97 = pneg %p91
      %p98 = scmp.eq.s32.totalorder %s16, 3
      %p99 = por %p97, %p98
      %p100 = scmp.ne.s32.totalorder %s92, %s95
      %p101 = scmp.eq.s32.totalorder %s16, 0
      %p102 = por %p100, %p101
      %p103 = scmp.ne.s32.totalorder %s92, %s95
      %p104 = scmp.eq.s32.totalorder %s21, 3
      %p105 = por %p103, %p104
      %p106 = scmp.ne.s32.totalorder %s95, %s96
      %p107 = scmp.eq.s32.totalorder %s21, 0
      %p108 = por %p106, %p107
      %p109 = scmp.ne.s32.totalorder %s95, %s96
      %p110 = scmp.eq.s32.totalorder %s22, 3
      %p111 = por %p109, %p110
      %p113 = scmp.ne.s32.totalorder %s96, %s112
      %p114 = scmp.eq.s32.totalorder %s22, 0
      %p115 = por %p113, %p114
      %s117 = sadd.s32 %s116, 1
      %p120 = scmp.eq.s32.totalorder %s16, 3
      %p121 = scmp.ne.s32.totalorder %s116, %s118
      %p122 = scmp.eq.s32.totalorder %s16, 0
      %p123 = por %p121, %p122
      %p124 = scmp.ne.s32.totalorder %s116, %s118
      %p125 = scmp.eq.s32.totalorder %s21, 3
      %p126 = por %p124, %p125
      %p127 = scmp.ne.s32.totalorder %s118, %s119
      %p128 = scmp.eq.s32.totalorder %s21, 0
      %p129 = por %p127, %p128
      %p130 = scmp.ne.s32.totalorder %s118, %s119
      %p131 = scmp.eq.s32.totalorder %s22, 3
      %p132 = por %p130, %p131
      %p134 = scmp.ne.s32.totalorder %s119, %s133
      %p135 = scmp.eq.s32.totalorder %s22, 0
      %p136 = por %p134, %p135
      %s138 = sadd.s32 %s137, 1
      %p141 = scmp.eq.s32.totalorder %s16, 3
      %p142 = scmp.ne.s32.totalorder %s137, %s139
      %p143 = scmp.eq.s32.totalorder %s16, 0
      %p144 = por %p142, %p143
      %p145 = scmp.ne.s32.totalorder %s137, %s139
      %p146 = scmp.eq.s32.totalorder %s21, 3
      %p147 = por %p145, %p146
      %p148 = scmp.ne.s32.totalorder %s139, %s140
      %p149 = scmp.eq.s32.totalorder %s21, 0
      %p150 = por %p148, %p149
      %p151 = scmp.ne.s32.totalorder %s139, %s140
      %p152 = scmp.eq.s32.totalorder %s22, 3
      %p153 = por %p151, %p152
      %p155 = scmp.ne.s32.totalorder %s140, %s154
      %p156 = scmp.eq.s32.totalorder %s22, 0
      %p157 = por %p155, %p156
      %s159 = sadd.s32 %s158, 1
      %p162 = scmp.eq.s32.totalorder %s16, 3
      %p163 = scmp.ne.s32.totalorder %s158, %s160
      %p164 = scmp.eq.s32.totalorder %s16, 0
      %p165 = por %p163, %p164
      %p166 = scmp.ne.s32.totalorder %s158, %s160
      %p167 = scmp.eq.s32.totalorder %s21, 3
      %p168 = por %p166, %p167
      %p169 = scmp.ne.s32.totalorder %s160, %s161
      %p170 = scmp.eq.s32.totalorder %s21, 0
      %p171 = por %p169, %p170
      %p172 = scmp.ne.s32.totalorder %s160, %s161
      %p173 = scmp.eq.s32.totalorder %s22, 3
      %p174 = por %p172, %p173
      %p176 = scmp.ne.s32.totalorder %s161, %s175
      %p177 = scmp.eq.s32.totalorder %s22, 0
      %p178 = por %p176, %p177
      %s180 = sadd.s32 %s179, 1
      %p183 = scmp.eq.s32.totalorder %s16, 3
      %p184 = scmp.ne.s32.totalorder %s179, %s181
      %p185 = scmp.eq.s32.totalorder %s16, 0
      %p186 = por %p184, %p185
      %p187 = scmp.ne.s32.totalorder %s179, %s181
      %p188 = scmp.eq.s32.totalorder %s21, 3
      %p189 = por %p187, %p188
      %p190 = scmp.ne.s32.totalorder %s181, %s182
      %p191 = scmp.eq.s32.totalorder %s21, 0
      %p192 = por %p190, %p191
      %p193 = scmp.ne.s32.totalorder %s181, %s182
      %p194 = scmp.eq.s32.totalorder %s22, 3
      %p195 = por %p193, %p194
      %p197 = scmp.ne.s32.totalorder %s182, %s196
      %p198 = scmp.eq.s32.totalorder %s22, 0
      %p199 = por %p197, %p198
      %s200 = smul.u32 %s25, %s24
      %s201 = smul.u32 %s34, %s38
      %s202 = ssub.s32 %s23, %s42
      %s203 = ssub.s32 %s200, %s201
      %s204 = sor.u32 %s202, %s203
      %p205 = scmp.eq.s32.totalorder %s204, 0
      %s207 = sadd.s32 %s206, 1
      %s208 = scalar_select %p205, %s206, %s207
      %p211 = pneg %p205
      %p212 = scmp.eq.s32.totalorder %s16, 3
      %p213 = por %p211, %p212
      %p214 = scmp.ne.s32.totalorder %s206, %s209
      %p215 = scmp.eq.s32.totalorder %s16, 0
      %p216 = por %p214, %p215
      %p217 = scmp.ne.s32.totalorder %s206, %s209
      %p218 = scmp.eq.s32.totalorder %s21, 3
      %p219 = por %p217, %p218
      %p220 = scmp.ne.s32.totalorder %s209, %s210
      %p221 = scmp.eq.s32.totalorder %s21, 0
      %p222 = por %p220, %p221
      %p223 = scmp.ne.s32.totalorder %s209, %s210
      %p224 = scmp.eq.s32.totalorder %s22, 3
      %p225 = por %p223, %p224
      %p227 = scmp.ne.s32.totalorder %s210, %s226
      %p228 = scmp.eq.s32.totalorder %s22, 0
      %p229 = por %p227, %p228
      %p230 = scmp.le.s32.totalorder 1, %s16
      %p231 = scmp.lt.s32.totalorder %s16, 5
      %p232 = pnand %p230, %p231
      %p233 = pneg %p232
      // Predicated region
      $region9: #{tpu_custom_call.1} parent=5 // pred_check
        _
      $region10: #{tpu_custom_call.1} parent=5 // pred_check_branch
        %235 = sbr.rel (%p232) target = $region12
      $region11: #{tpu_custom_call.1} parent=5 // pred_region
        %s236 = ssub.s32 %s16, 1
        // Predicated region
        $region13: #{tpu_custom_call.1} parent=11 // pred_check
          %p237 = pneg %p82
        $region14: #{tpu_custom_call.1} parent=11 // pred_check_branch
          %239 = sbr.rel (%p237) target = $region16
        $region15: #{tpu_custom_call.1} parent=11 // pred_region
          _
        $region16: #{tpu_custom_call.1} parent=11 // pred_fallthru
          _
        // Predicated region
        $region17: #{tpu_custom_call.1} parent=11 // pred_check
          %p240 = pneg %p108
        $region18: #{tpu_custom_call.1} parent=11 // pred_check_branch
          %242 = sbr.rel (%p240) target = $region20
        $region19: #{tpu_custom_call.1} parent=11 // pred_region
          %s243 = smul.u32 3, %s28
          %p244 = scmp.lt.s32.totalorder %s243, 2
          %s245 = scalar_select %p244, %s243, 2
          %s246 = scalar_lea.vmem %s2, %s245
          %s247 = smul.u32 3, %s28
        $region20: #{tpu_custom_call.1} parent=11 // pred_fallthru
          _
        // Predicated region
        $region21: #{tpu_custom_call.1} parent=11 // pred_check
          %p248 = pneg %p129
        $region22: #{tpu_custom_call.1} parent=11 // pred_check_branch
          %250 = sbr.rel (%p248) target = $region24
        $region23: #{tpu_custom_call.1} parent=11 // pred_region
          _
        $region24: #{tpu_custom_call.1} parent=11 // pred_fallthru
          _
        // Predicated region
        $region25: #{tpu_custom_call.1} parent=11 // pred_check
          %p251 = pneg %p150
        $region26: #{tpu_custom_call.1} parent=11 // pred_check_branch
          %253 = sbr.rel (%p251) target = $region28
        $region27: #{tpu_custom_call.1} parent=11 // pred_region
          _
        $region28: #{tpu_custom_call.1} parent=11 // pred_fallthru
          _
        // Predicated region
        $region29: #{tpu_custom_call.1} parent=11 // pred_check
          %p254 = pneg %p171
        $region30: #{tpu_custom_call.1} parent=11 // pred_check_branch
          %256 = sbr.rel (%p254) target = $region32
        $region31: #{tpu_custom_call.1} parent=11 // pred_region
          _
        $region32: #{tpu_custom_call.1} parent=11 // pred_fallthru
          _
        // Predicated region
        $region33: #{tpu_custom_call.1} parent=11 // pred_check
          %p257 = pneg %p192
        $region34: #{tpu_custom_call.1} parent=11 // pred_check_branch
          %259 = sbr.rel (%p257) target = $region36
        $region35: #{tpu_custom_call.1} parent=11 // pred_region
          _
        $region36: #{tpu_custom_call.1} parent=11 // pred_fallthru
          _
      $region12: #{tpu_custom_call.1} parent=5 // pred_fallthru
        _
      %p260 = scmp.lt.s32.totalorder %s16, 4
      // Predicated region
      $region37: #{tpu_custom_call.1} parent=5 // pred_check
        %p261 = pneg %p260
      $region38: #{tpu_custom_call.1} parent=5 // pred_check_branch
        %263 = sbr.rel (%p261) target = $region40
      $region39: #{tpu_custom_call.1} parent=5 // pred_region
        // Predicated region
        $region41: #{tpu_custom_call.1} parent=39 // pred_check
          %p264 = pneg %p55
        $region42: #{tpu_custom_call.1} parent=39 // pred_check_branch
          %266 = sbr.rel (%p264) target = $region44
        $region43: #{tpu_custom_call.1} parent=39 // pred_region
          %p267 = scmp.lt.s32.totalorder %s23, 1
          %s268 = scalar_select %p267, %s23, 1
          %s269 = smul.addr %s268, 4
          %s270 = smul.addr %s269, 2
          %s271 = scalar_lea.vmem %s0, %s270
        $region44: #{tpu_custom_call.1} parent=39 // pred_fallthru
          _
      $region40: #{tpu_custom_call.1} parent=5 // pred_fallthru
        _
      %p272 = scmp.le.s32.totalorder 1, %s16
      %p273 = scmp.lt.s32.totalorder %s16, 5
      %p274 = pnand %p272, %p273
      %p275 = pneg %p274
      // Predicated region
      $region45: #{tpu_custom_call.1} parent=5 // pred_check
        _
      $region46: #{tpu_custom_call.1} parent=5 // pred_check_branch
        %277 = sbr.rel (%p274) target = $region48
      $region47: #{tpu_custom_call.1} parent=5 // pred_region
        %s278 = ssub.s32 %s16, 1
        %p279 = scmp.lt.s32.totalorder %s26, 1
        %s280 = scalar_select %p279, %s26, 1
        %s281 = smul.addr %s280, 4
        %s282 = smul.addr %s281, 2
        %s283 = scalar_lea.vmem %s0, %s282
        %p284 = pneg %p61
        %p285 = pneg %p58
        %p286 = pneg %p82
        %p287 = pneg %p79
        %s288 = smul.u32 3, %s28
        %p289 = scmp.lt.s32.totalorder %s288, 2
        %s290 = scalar_select %p289, %s288, 2
        %s291 = scalar_lea.vmem %s2, %s290
        %p292 = pneg %p108
        %p293 = pneg %p105
        %p294 = pneg %p129
        %p295 = pneg %p126
        %p296 = pneg %p150
        %p297 = pneg %p147
        %p298 = pneg %p171
        %p299 = pneg %p168
        %p300 = pneg %p192
        %p301 = pneg %p189
        %p302 = pneg %p222
        %p303 = pneg %p219
        %s304 = sand.u32 %s209, 1
        %s305 = scalar_lea.sflag [#allocation6], %s304
        %s306 = sand.u32 %s209, 1
        %s307 = smul.addr %s306, 12
        %s308 = scalar_lea.vmem [#allocation5], %s307
        %p309 = scmp.lt.s32.totalorder %s26, 1
        %s310 = scalar_select %p309, %s26, 1
        %s311 = smul.addr %s310, 4
        %s312 = smul.addr %s311, 2
        %s313 = scalar_lea.vmem %s0, %s312
        %s314 = smul.u32 3, %s28
        %p315 = scmp.lt.s32.totalorder %s314, 2
        %s316 = scalar_select %p315, %s314, 2
        %s317 = scalar_lea.vmem %s2, %s316
        %s318 = smul.u32 3, %s28
        %s319 = smul.u32 %s28, %s27
        %s320 = smul.u32 3, %s319
        %s322 = smul.u32 %s28, 384
        %p323 = scmp.eq.s32.totalorder %s27, 0
        // Predicated region
        $region49: #{tpu_custom_call.1} parent=47 // pred_check
          %p324 = pneg %p323
        $region50: #{tpu_custom_call.1} parent=47 // pred_check_branch
          %326 = sbr.rel (%p324) target = $region52
        $region51: #{tpu_custom_call.1} parent=47 // pred_region
          %p327 = scmp.eq.s32.totalorder %s28, 0
          // Predicated region
          $region53: #{tpu_custom_call.1} parent=51 // pred_check
            %p328 = pneg %p327
          $region54: #{tpu_custom_call.1} parent=51 // pred_check_branch
            %330 = sbr.rel (%p328) target = $region56
          $region55: #{tpu_custom_call.1} parent=51 // pred_region
            %vm331 = vcmask 3072
            %332 = vst.msk [vmem:[#allocation3] sm:$0xf] %vm331, 0.0
          $region56: #{tpu_custom_call.1} parent=51 // pred_fallthru
            _
          %v333 = vld [vmem:[%s317] sm:$0x7]
          %s334 = sshra.s32 %s322, 7
          %s335 = sand.u32 %s322, 127
          %s336 = smul.addr %s334, 2
          %s337 = scalar_lea.vmem %s313, %s336
          %v338 = vld [vmem:[%s337] sm:$0x55]
          %v339 = vld [vmem:[%s1] sm:$0x3]
          %s340 = scalar_lea.vmem %s1, 2
          %v341 = vld [vmem:[%s340] sm:$0x3]
          %v343 = vcombine.high %v338, %v338
          %v345 = vunpack.c.l.s4 1983009808
          %v346 = vunpack.c.0.s8 %v345
          %v347 = vlaneseq
          %v348 = vshrl.u32 %v347, 7
          %v349 = vsub.s32 %v346, %v348
          %v350 = vrot.slane %v338, %v349
          %v352 = vunpack.c.l.s4 1983009808
          %v353 = vunpack.c.0.s8 %v352
          %v354 = vlaneseq
          %v355 = vshrl.u32 %v354, 7
          %v356 = vsub.s32 %v353, %v355
          %v357 = vrot.slane %v343, %v356
          %v358 = vcombine.high %v350, %v350
          %v359 = vcombine.high %v357, %v357
          %360 = vrot.lane.b32.xlu0 %v350, 127
          %v361 = vpop.permute.xlu0 %360
          %362 = vrot.lane.b32.xlu0 %v358, 127
          %v363 = vpop.permute.xlu0 %362
          %364 = vrot.lane.b32.xlu0 %v357, 127
          %v365 = vpop.permute.xlu0 %364
          %366 = vrot.lane.b32.xlu0 %v359, 127
          %v367 = vpop.permute.xlu0 %366
          %vm368 = vcmask 1039360
          %v369 = vsel %vm368, %v361, %v363
          %v370 = vsel %vm368, %v363, %v365
          %v371 = vsel %vm368, %v365, %v367
          %vm372 = vcmask 15360
          %v374 = vsel %vm372, %v341, 0
          %vm376 = vcmask 1040384
          %v378 = vsel %vm376, %v369, 0
          %v381 = vsel %vm376, %v370, 0
          %v384 = vsel %vm376, %v371, 0
          %386 = vmatprep.subr.bf16.mxu0 0
          %387 = vmatpush1.bf16.msra.mxu0 0
          %388 = vmatprep.subr.bf16.mxu0 0
          %389 = vmatpush1.bf16.msra.mxu0 0
          %390 = vmatprep.subr.bf16.mxu0 0
          %391 = vmatpush1.bf16.msra.mxu0 0
          %392 = vmatprep.subr.bf16.mxu0 0
          %393 = vmatpush1.bf16.msra.mxu0 0
          %394 = vmatprep.subr.bf16.mxu0 0
          %395 = vmatpush1.bf16.msra.mxu0 0
          %396 = vmatprep.subr.bf16.mxu0 0
          %397 = vmatpush1.bf16.msra.mxu0 0
          %398 = vmatprep.subr.bf16.mxu0 0
          %399 = vmatpush1.bf16.msra.mxu0 0
          %400 = vmatprep.subr.bf16.mxu0 %v381
          %401 = vmatpush1.bf16.msra.mxu0 %v378
          %402 = vmatprep.subr.bf16.mxu0 0
          %403 = vmatpush2.bf16.msra.mxu0 0
          %404 = vmatprep.subr.bf16.mxu0 0
          %405 = vmatpush2.bf16.msra.mxu0 0
          %406 = vmatprep.subr.bf16.mxu0 0
          %407 = vmatpush2.bf16.msra.mxu0 0
          %408 = vmatprep.subr.bf16.mxu0 0
          %409 = vmatpush2.bf16.msra.mxu0 0
          %410 = vmatprep.subr.bf16.mxu0 0
          %411 = vmatpush2.bf16.msra.mxu0 0
          %412 = vmatprep.subr.bf16.mxu0 0
          %413 = vmatpush2.bf16.msra.mxu0 0
          %414 = vmatprep.subr.bf16.mxu0 0
          %415 = vmatpush2.bf16.msra.mxu0 0
          %416 = vmatprep.subr.bf16.mxu0 0
          %417 = vmatpush2.bf16.msra.mxu0 0
          %418 = vmatprep.mubr.bf16.mxu0 0
          %419 = vmatmul.mubr.bf16.gmra.mxu0 %v374
          %v420 = vpop.f32.mrf.mxu0
          %v421 = vadd.f32 0.0, %v420
          %v422 = vpop.f32.mrf.mxu0
          %v423 = vadd.f32 0.0, %v422
          %v424 = vpop.f32.mrf.mxu0
          %v425 = vpop.f32.mrf.mxu0
          %426 = vdwg.mxu0
          %427 = vmatprep.subr.bf16.mxu0 0
          %428 = vmatpush1.bf16.msra.mxu0 0
          %429 = vmatprep.subr.bf16.mxu0 0
          %430 = vmatpush1.bf16.msra.mxu0 0
          %431 = vmatprep.subr.bf16.mxu0 0
          %432 = vmatpush1.bf16.msra.mxu0 0
          %433 = vmatprep.subr.bf16.mxu0 0
          %434 = vmatpush1.bf16.msra.mxu0 0
          %435 = vmatprep.subr.bf16.mxu0 0
          %436 = vmatpush1.bf16.msra.mxu0 0
          %437 = vmatprep.subr.bf16.mxu0 0
          %438 = vmatpush1.bf16.msra.mxu0 0
          %439 = vmatprep.subr.bf16.mxu0 0
          %440 = vmatpush1.bf16.msra.mxu0 0
          %441 = vmatprep.subr.bf16.mxu0 0
          %442 = vmatpush1.bf16.msra.mxu0 %v384
          %443 = vmatprep.subr.bf16.mxu0 0
          %444 = vmatpush2.bf16.msra.mxu0 0
          %445 = vmatprep.subr.bf16.mxu0 0
          %446 = vmatpush2.bf16.msra.mxu0 0
          %447 = vmatprep.subr.bf16.mxu0 0
          %448 = vmatpush2.bf16.msra.mxu0 0
          %449 = vmatprep.subr.bf16.mxu0 0
          %450 = vmatpush2.bf16.msra.mxu0 0
          %451 = vmatprep.subr.bf16.mxu0 0
          %452 = vmatpush2.bf16.msra.mxu0 0
          %453 = vmatprep.subr.bf16.mxu0 0
          %454 = vmatpush2.bf16.msra.mxu0 0
          %455 = vmatprep.subr.bf16.mxu0 0
          %456 = vmatpush2.bf16.msra.mxu0 0
          %457 = vmatprep.subr.bf16.mxu0 0
          %458 = vmatpush2.bf16.msra.mxu0 0
          %459 = vmatprep.mubr.bf16.mxu0 0
          %460 = vmatmul.mubr.bf16.gmra.mxu0 %v374
          %v461 = vpop.f32.mrf.mxu0
          %v462 = vadd.f32 0.0, %v461
          %v463 = vpop.f32.mrf.mxu0
          %v464 = vpop.f32.mrf.mxu0
          %v465 = vpop.f32.mrf.mxu0
          %466 = vdwg.mxu0
          %v468 = vsel %vm372, %v339, 0
          %v471 = vsel %vm376, %v350, 0
          %v474 = vsel %vm376, %v358, 0
          %v477 = vsel %vm376, %v357, 0
          %479 = vmatprep.subr.bf16.mxu0 0
          %480 = vmatpush1.bf16.msra.mxu0 0
          %481 = vmatprep.subr.bf16.mxu0 0
          %482 = vmatpush1.bf16.msra.mxu0 0
          %483 = vmatprep.subr.bf16.mxu0 0
          %484 = vmatpush1.bf16.msra.mxu0 0
          %485 = vmatprep.subr.bf16.mxu0 0
          %486 = vmatpush1.bf16.msra.mxu0 0
          %487 = vmatprep.subr.bf16.mxu0 0
          %488 = vmatpush1.bf16.msra.mxu0 0
          %489 = vmatprep.subr.bf16.mxu0 0
          %490 = vmatpush1.bf16.msra.mxu0 0
          %491 = vmatprep.subr.bf16.mxu0 0
          %492 = vmatpush1.bf16.msra.mxu0 0
          %493 = vmatprep.subr.bf16.mxu0 %v474
          %494 = vmatpush1.bf16.msra.mxu0 %v471
          %495 = vmatprep.subr.bf16.mxu0 0
          %496 = vmatpush2.bf16.msra.mxu0 0
          %497 = vmatprep.subr.bf16.mxu0 0
          %498 = vmatpush2.bf16.msra.mxu0 0
          %499 = vmatprep.subr.bf16.mxu0 0
          %500 = vmatpush2.bf16.msra.mxu0 0
          %501 = vmatprep.subr.bf16.mxu0 0
          %502 = vmatpush2.bf16.msra.mxu0 0
          %503 = vmatprep.subr.bf16.mxu0 0
          %504 = vmatpush2.bf16.msra.mxu0 0
          %505 = vmatprep.subr.bf16.mxu0 0
          %506 = vmatpush2.bf16.msra.mxu0 0
          %507 = vmatprep.subr.bf16.mxu0 0
          %508 = vmatpush2.bf16.msra.mxu0 0
          %509 = vmatprep.subr.bf16.mxu0 0
          %510 = vmatpush2.bf16.msra.mxu0 0
          %511 = vmatprep.mubr.bf16.mxu0 0
          %512 = vmatmul.mubr.bf16.gmra.mxu0 %v468
          %v513 = vpop.f32.mrf.mxu0
          %v514 = vadd.f32 %v421, %v513
          %v515 = vpop.f32.mrf.mxu0
          %v516 = vadd.f32 %v423, %v515
          %v517 = vpop.f32.mrf.mxu0
          %v518 = vpop.f32.mrf.mxu0
          %519 = vdwg.mxu0
          %520 = vmatprep.subr.bf16.mxu0 0
          %521 = vmatpush1.bf16.msra.mxu0 0
          %522 = vmatprep.subr.bf16.mxu0 0
          %523 = vmatpush1.bf16.msra.mxu0 0
          %524 = vmatprep.subr.bf16.mxu0 0
          %525 = vmatpush1.bf16.msra.mxu0 0
          %526 = vmatprep.subr.bf16.mxu0 0
          %527 = vmatpush1.bf16.msra.mxu0 0
          %528 = vmatprep.subr.bf16.mxu0 0
          %529 = vmatpush1.bf16.msra.mxu0 0
          %530 = vmatprep.subr.bf16.mxu0 0
          %531 = vmatpush1.bf16.msra.mxu0 0
          %532 = vmatprep.subr.bf16.mxu0 0
          %533 = vmatpush1.bf16.msra.mxu0 0
          %534 = vmatprep.subr.bf16.mxu0 0
          %535 = vmatpush1.bf16.msra.mxu0 %v477
          %536 = vmatprep.subr.bf16.mxu0 0
          %537 = vmatpush2.bf16.msra.mxu0 0
          %538 = vmatprep.subr.bf16.mxu0 0
          %539 = vmatpush2.bf16.msra.mxu0 0
          %540 = vmatprep.subr.bf16.mxu0 0
          %541 = vmatpush2.bf16.msra.mxu0 0
          %542 = vmatprep.subr.bf16.mxu0 0
          %543 = vmatpush2.bf16.msra.mxu0 0
          %544 = vmatprep.subr.bf16.mxu0 0
          %545 = vmatpush2.bf16.msra.mxu0 0
          %546 = vmatprep.subr.bf16.mxu0 0
          %547 = vmatpush2.bf16.msra.mxu0 0
          %548 = vmatprep.subr.bf16.mxu0 0
          %549 = vmatpush2.bf16.msra.mxu0 0
          %550 = vmatprep.subr.bf16.mxu0 0
          %551 = vmatpush2.bf16.msra.mxu0 0
          %552 = vmatprep.mubr.bf16.mxu0 0
          %553 = vmatmul.mubr.bf16.gmra.mxu0 %v468
          %v554 = vpop.f32.mrf.mxu0
          %v555 = vadd.f32 %v462, %v554
          %v556 = vpop.f32.mrf.mxu0
          %v557 = vpop.f32.mrf.mxu0
          %v558 = vpop.f32.mrf.mxu0
          %559 = vdwg.mxu0
          %s560 = scalar_lea.vmem %s1, 4
          %v561 = vld [vmem:[%s560] sm:$0x3]
          %562 = vrot.lane.b32.xlu0 %v350, 126
          %v563 = vpop.permute.xlu0 %562
          %564 = vrot.lane.b32.xlu0 %v358, 126
          %v565 = vpop.permute.xlu0 %564
          %566 = vrot.lane.b32.xlu0 %v357, 126
          %v567 = vpop.permute.xlu0 %566
          %568 = vrot.lane.b32.xlu0 %v359, 126
          %v569 = vpop.permute.xlu0 %568
          %vm570 = vcmask 1031168
          %v571 = vsel %vm570, %v563, %v565
          %v572 = vsel %vm570, %v565, %v567
          %v573 = vsel %vm570, %v567, %v569
          %v575 = vsel %vm372, %v561, 0
          %v578 = vsel %vm376, %v571, 0
          %v581 = vsel %vm376, %v572, 0
          %v584 = vsel %vm376, %v573, 0
          %586 = vmatprep.subr.bf16.mxu0 0
          %587 = vmatpush1.bf16.msra.mxu0 0
          %588 = vmatprep.subr.bf16.mxu0 0
          %589 = vmatpush1.bf16.msra.mxu0 0
          %590 = vmatprep.subr.bf16.mxu0 0
          %591 = vmatpush1.bf16.msra.mxu0 0
          %592 = vmatprep.subr.bf16.mxu0 0
          %593 = vmatpush1.bf16.msra.mxu0 0
          %594 = vmatprep.subr.bf16.mxu0 0
          %595 = vmatpush1.bf16.msra.mxu0 0
          %596 = vmatprep.subr.bf16.mxu0 0
          %597 = vmatpush1.bf16.msra.mxu0 0
          %598 = vmatprep.subr.bf16.mxu0 0
          %599 = vmatpush1.bf16.msra.mxu0 0
          %600 = vmatprep.subr.bf16.mxu0 %v581
          %601 = vmatpush1.bf16.msra.mxu0 %v578
          %602 = vmatprep.subr.bf16.mxu0 0
          %603 = vmatpush2.bf16.msra.mxu0 0
          %604 = vmatprep.subr.bf16.mxu0 0
          %605 = vmatpush2.bf16.msra.mxu0 0
          %606 = vmatprep.subr.bf16.mxu0 0
          %607 = vmatpush2.bf16.msra.mxu0 0
          %608 = vmatprep.subr.bf16.mxu0 0
          %609 = vmatpush2.bf16.msra.mxu0 0
          %610 = vmatprep.subr.bf16.mxu0 0
          %611 = vmatpush2.bf16.msra.mxu0 0
          %612 = vmatprep.subr.bf16.mxu0 0
          %613 = vmatpush2.bf16.msra.mxu0 0
          %614 = vmatprep.subr.bf16.mxu0 0
          %615 = vmatpush2.bf16.msra.mxu0 0
          %616 = vmatprep.subr.bf16.mxu0 0
          %617 = vmatpush2.bf16.msra.mxu0 0
          %618 = vmatprep.mubr.bf16.mxu0 0
          %619 = vmatmul.mubr.bf16.gmra.mxu0 %v575
          %v620 = vpop.f32.mrf.mxu0
          %v621 = vadd.f32 0.0, %v620
          %v622 = vpop.f32.mrf.mxu0
          %v623 = vadd.f32 0.0, %v622
          %v624 = vpop.f32.mrf.mxu0
          %v625 = vpop.f32.mrf.mxu0
          %626 = vdwg.mxu0
          %627 = vmatprep.subr.bf16.mxu0 0
          %628 = vmatpush1.bf16.msra.mxu0 0
          %629 = vmatprep.subr.bf16.mxu0 0
          %630 = vmatpush1.bf16.msra.mxu0 0
          %631 = vmatprep.subr.bf16.mxu0 0
          %632 = vmatpush1.bf16.msra.mxu0 0
          %633 = vmatprep.subr.bf16.mxu0 0
          %634 = vmatpush1.bf16.msra.mxu0 0
          %635 = vmatprep.subr.bf16.mxu0 0
          %636 = vmatpush1.bf16.msra.mxu0 0
          %637 = vmatprep.subr.bf16.mxu0 0
          %638 = vmatpush1.bf16.msra.mxu0 0
          %639 = vmatprep.subr.bf16.mxu0 0
          %640 = vmatpush1.bf16.msra.mxu0 0
          %641 = vmatprep.subr.bf16.mxu0 0
          %642 = vmatpush1.bf16.msra.mxu0 %v584
          %643 = vmatprep.subr.bf16.mxu0 0
          %644 = vmatpush2.bf16.msra.mxu0 0
          %645 = vmatprep.subr.bf16.mxu0 0
          %646 = vmatpush2.bf16.msra.mxu0 0
          %647 = vmatprep.subr.bf16.mxu0 0
          %648 = vmatpush2.bf16.msra.mxu0 0
          %649 = vmatprep.subr.bf16.mxu0 0
          %650 = vmatpush2.bf16.msra.mxu0 0
          %651 = vmatprep.subr.bf16.mxu0 0
          %652 = vmatpush2.bf16.msra.mxu0 0
          %653 = vmatprep.subr.bf16.mxu0 0
          %654 = vmatpush2.bf16.msra.mxu0 0
          %655 = vmatprep.subr.bf16.mxu0 0
          %656 = vmatpush2.bf16.msra.mxu0 0
          %657 = vmatprep.subr.bf16.mxu0 0
          %658 = vmatpush2.bf16.msra.mxu0 0
          %659 = vmatprep.mubr.bf16.mxu0 0
          %660 = vmatmul.mubr.bf16.gmra.mxu0 %v575
          %v661 = vpop.f32.mrf.mxu0
          %v662 = vadd.f32 0.0, %v661
          %v663 = vpop.f32.mrf.mxu0
          %v664 = vpop.f32.mrf.mxu0
          %v665 = vpop.f32.mrf.mxu0
          %666 = vdwg.mxu0
          %v667 = vadd.f32 %v514, %v621
          %v668 = vadd.f32 %v516, %v623
          %v669 = vadd.f32 %v555, %v662
          %s670 = scalar_lea.vmem %s1, 6
          %v671 = vld [vmem:[%s670] sm:$0x3]
          %672 = vrot.lane.b32.xlu0 %v350, 110
          %v673 = vpop.permute.xlu0 %672
          %674 = vrot.lane.b32.xlu0 %v358, 110
          %v675 = vpop.permute.xlu0 %674
          %676 = vrot.lane.b32.xlu0 %v357, 110
          %v677 = vpop.permute.xlu0 %676
          %678 = vrot.lane.b32.xlu0 %v359, 110
          %v679 = vpop.permute.xlu0 %678
          %vm680 = vcmask 900096
          %v681 = vsel %vm680, %v673, %v675
          %v682 = vsel %vm680, %v675, %v677
          %v683 = vsel %vm680, %v677, %v679
          %v685 = vsel %vm372, %v671, 0
          %v688 = vsel %vm376, %v681, 0
          %v691 = vsel %vm376, %v682, 0
          %v694 = vsel %vm376, %v683, 0
          %696 = vmatprep.subr.bf16.mxu0 0
          %697 = vmatpush1.bf16.msra.mxu0 0
          %698 = vmatprep.subr.bf16.mxu0 0
          %699 = vmatpush1.bf16.msra.mxu0 0
          %700 = vmatprep.subr.bf16.mxu0 0
          %701 = vmatpush1.bf16.msra.mxu0 0
          %702 = vmatprep.subr.bf16.mxu0 0
          %703 = vmatpush1.bf16.msra.mxu0 0
          %704 = vmatprep.subr.bf16.mxu0 0
          %705 = vmatpush1.bf16.msra.mxu0 0
          %706 = vmatprep.subr.bf16.mxu0 0
          %707 = vmatpush1.bf16.msra.mxu0 0
          %708 = vmatprep.subr.bf16.mxu0 0
          %709 = vmatpush1.bf16.msra.mxu0 0
          %710 = vmatprep.subr.bf16.mxu0 %v691
          %711 = vmatpush1.bf16.msra.mxu0 %v688
          %712 = vmatprep.subr.bf16.mxu0 0
          %713 = vmatpush2.bf16.msra.mxu0 0
          %714 = vmatprep.subr.bf16.mxu0 0
          %715 = vmatpush2.bf16.msra.mxu0 0
          %716 = vmatprep.subr.bf16.mxu0 0
          %717 = vmatpush2.bf16.msra.mxu0 0
          %718 = vmatprep.subr.bf16.mxu0 0
          %719 = vmatpush2.bf16.msra.mxu0 0
          %720 = vmatprep.subr.bf16.mxu0 0
          %721 = vmatpush2.bf16.msra.mxu0 0
          %722 = vmatprep.subr.bf16.mxu0 0
          %723 = vmatpush2.bf16.msra.mxu0 0
          %724 = vmatprep.subr.bf16.mxu0 0
          %725 = vmatpush2.bf16.msra.mxu0 0
          %726 = vmatprep.subr.bf16.mxu0 0
          %727 = vmatpush2.bf16.msra.mxu0 0
          %728 = vmatprep.mubr.bf16.mxu0 0
          %729 = vmatmul.mubr.bf16.gmra.mxu0 %v685
          %v730 = vpop.f32.mrf.mxu0
          %v731 = vadd.f32 0.0, %v730
          %v732 = vpop.f32.mrf.mxu0
          %v733 = vadd.f32 0.0, %v732
          %v734 = vpop.f32.mrf.mxu0
          %v735 = vpop.f32.mrf.mxu0
          %736 = vdwg.mxu0
          %737 = vmatprep.subr.bf16.mxu0 0
          %738 = vmatpush1.bf16.msra.mxu0 0
          %739 = vmatprep.subr.bf16.mxu0 0
          %740 = vmatpush1.bf16.msra.mxu0 0
          %741 = vmatprep.subr.bf16.mxu0 0
          %742 = vmatpush1.bf16.msra.mxu0 0
          %743 = vmatprep.subr.bf16.mxu0 0
          %744 = vmatpush1.bf16.msra.mxu0 0
          %745 = vmatprep.subr.bf16.mxu0 0
          %746 = vmatpush1.bf16.msra.mxu0 0
          %747 = vmatprep.subr.bf16.mxu0 0
          %748 = vmatpush1.bf16.msra.mxu0 0
          %749 = vmatprep.subr.bf16.mxu0 0
          %750 = vmatpush1.bf16.msra.mxu0 0
          %751 = vmatprep.subr.bf16.mxu0 0
          %752 = vmatpush1.bf16.msra.mxu0 %v694
          %753 = vmatprep.subr.bf16.mxu0 0
          %754 = vmatpush2.bf16.msra.mxu0 0
          %755 = vmatprep.subr.bf16.mxu0 0
          %756 = vmatpush2.bf16.msra.mxu0 0
          %757 = vmatprep.subr.bf16.mxu0 0
          %758 = vmatpush2.bf16.msra.mxu0 0
          %759 = vmatprep.subr.bf16.mxu0 0
          %760 = vmatpush2.bf16.msra.mxu0 0
          %761 = vmatprep.subr.bf16.mxu0 0
          %762 = vmatpush2.bf16.msra.mxu0 0
          %763 = vmatprep.subr.bf16.mxu0 0
          %764 = vmatpush2.bf16.msra.mxu0 0
          %765 = vmatprep.subr.bf16.mxu0 0
          %766 = vmatpush2.bf16.msra.mxu0 0
          %767 = vmatprep.subr.bf16.mxu0 0
          %768 = vmatpush2.bf16.msra.mxu0 0
          %769 = vmatprep.mubr.bf16.mxu0 0
          %770 = vmatmul.mubr.bf16.gmra.mxu0 %v685
          %v771 = vpop.f32.mrf.mxu0
          %v772 = vadd.f32 0.0, %v771
          %v773 = vpop.f32.mrf.mxu0
          %v774 = vpop.f32.mrf.mxu0
          %v775 = vpop.f32.mrf.mxu0
          %776 = vdwg.mxu0
          %v777 = vadd.f32 %v667, %v731
          %v778 = vadd.f32 %v668, %v733
          %v779 = vadd.f32 %v669, %v772
          %s780 = scalar_lea.vmem %s1, 8
          %v781 = vld [vmem:[%s780] sm:$0x3]
          %782 = vrot.lane.b32.xlu0 %v350, 109
          %v783 = vpop.permute.xlu0 %782
          %784 = vrot.lane.b32.xlu0 %v358, 109
          %v785 = vpop.permute.xlu0 %784
          %786 = vrot.lane.b32.xlu0 %v357, 109
          %v787 = vpop.permute.xlu0 %786
          %788 = vrot.lane.b32.xlu0 %v359, 109
          %v789 = vpop.permute.xlu0 %788
          %vm790 = vcmask 891904
          %v791 = vsel %vm790, %v783, %v785
          %v792 = vsel %vm790, %v785, %v787
          %v793 = vsel %vm790, %v787, %v789
          %v795 = vsel %vm372, %v781, 0
          %v798 = vsel %vm376, %v791, 0
          %v801 = vsel %vm376, %v792, 0
          %v804 = vsel %vm376, %v793, 0
          %806 = vmatprep.subr.bf16.mxu0 0
          %807 = vmatpush1.bf16.msra.mxu0 0
          %808 = vmatprep.subr.bf16.mxu0 0
          %809 = vmatpush1.bf16.msra.mxu0 0
          %810 = vmatprep.subr.bf16.mxu0 0
          %811 = vmatpush1.bf16.msra.mxu0 0
          %812 = vmatprep.subr.bf16.mxu0 0
          %813 = vmatpush1.bf16.msra.mxu0 0
          %814 = vmatprep.subr.bf16.mxu0 0
          %815 = vmatpush1.bf16.msra.mxu0 0
          %816 = vmatprep.subr.bf16.mxu0 0
          %817 = vmatpush1.bf16.msra.mxu0 0
          %818 = vmatprep.subr.bf16.mxu0 0
          %819 = vmatpush1.bf16.msra.mxu0 0
          %820 = vmatprep.subr.bf16.mxu0 %v801
          %821 = vmatpush1.bf16.msra.mxu0 %v798
          %822 = vmatprep.subr.bf16.mxu0 0
          %823 = vmatpush2.bf16.msra.mxu0 0
          %824 = vmatprep.subr.bf16.mxu0 0
          %825 = vmatpush2.bf16.msra.mxu0 0
          %826 = vmatprep.subr.bf16.mxu0 0
          %827 = vmatpush2.bf16.msra.mxu0 0
          %828 = vmatprep.subr.bf16.mxu0 0
          %829 = vmatpush2.bf16.msra.mxu0 0
          %830 = vmatprep.subr.bf16.mxu0 0
          %831 = vmatpush2.bf16.msra.mxu0 0
          %832 = vmatprep.subr.bf16.mxu0 0
          %833 = vmatpush2.bf16.msra.mxu0 0
          %834 = vmatprep.subr.bf16.mxu0 0
          %835 = vmatpush2.bf16.msra.mxu0 0
          %836 = vmatprep.subr.bf16.mxu0 0
          %837 = vmatpush2.bf16.msra.mxu0 0
          %838 = vmatprep.mubr.bf16.mxu0 0
          %839 = vmatmul.mubr.bf16.gmra.mxu0 %v795
          %v840 = vpop.f32.mrf.mxu0
          %v841 = vadd.f32 0.0, %v840
          %v842 = vpop.f32.mrf.mxu0
          %v843 = vadd.f32 0.0, %v842
          %v844 = vpop.f32.mrf.mxu0
          %v845 = vpop.f32.mrf.mxu0
          %846 = vdwg.mxu0
          %847 = vmatprep.subr.bf16.mxu0 0
          %848 = vmatpush1.bf16.msra.mxu0 0
          %849 = vmatprep.subr.bf16.mxu0 0
          %850 = vmatpush1.bf16.msra.mxu0 0
          %851 = vmatprep.subr.bf16.mxu0 0
          %852 = vmatpush1.bf16.msra.mxu0 0
          %853 = vmatprep.subr.bf16.mxu0 0
          %854 = vmatpush1.bf16.msra.mxu0 0
          %855 = vmatprep.subr.bf16.mxu0 0
          %856 = vmatpush1.bf16.msra.mxu0 0
          %857 = vmatprep.subr.bf16.mxu0 0
          %858 = vmatpush1.bf16.msra.mxu0 0
          %859 = vmatprep.subr.bf16.mxu0 0
          %860 = vmatpush1.bf16.msra.mxu0 0
          %861 = vmatprep.subr.bf16.mxu0 0
          %862 = vmatpush1.bf16.msra.mxu0 %v804
          %863 = vmatprep.subr.bf16.mxu0 0
          %864 = vmatpush2.bf16.msra.mxu0 0
          %865 = vmatprep.subr.bf16.mxu0 0
          %866 = vmatpush2.bf16.msra.mxu0 0
          %867 = vmatprep.subr.bf16.mxu0 0
          %868 = vmatpush2.bf16.msra.mxu0 0
          %869 = vmatprep.subr.bf16.mxu0 0
          %870 = vmatpush2.bf16.msra.mxu0 0
          %871 = vmatprep.subr.bf16.mxu0 0
          %872 = vmatpush2.bf16.msra.mxu0 0
          %873 = vmatprep.subr.bf16.mxu0 0
          %874 = vmatpush2.bf16.msra.mxu0 0
          %875 = vmatprep.subr.bf16.mxu0 0
          %876 = vmatpush2.bf16.msra.mxu0 0
          %877 = vmatprep.subr.bf16.mxu0 0
          %878 = vmatpush2.bf16.msra.mxu0 0
          %879 = vmatprep.mubr.bf16.mxu0 0
          %880 = vmatmul.mubr.bf16.gmra.mxu0 %v795
          %v881 = vpop.f32.mrf.mxu0
          %v882 = vadd.f32 0.0, %v881
          %v883 = vpop.f32.mrf.mxu0
          %v884 = vpop.f32.mrf.mxu0
          %v885 = vpop.f32.mrf.mxu0
          %886 = vdwg.mxu0
          %v887 = vadd.f32 %v777, %v841
          %v888 = vadd.f32 %v778, %v843
          %v889 = vadd.f32 %v779, %v882
          %s890 = scalar_lea.vmem %s1, 10
          %v891 = vld [vmem:[%s890] sm:$0x3]
          %892 = vrot.lane.b32.xlu0 %v350, 108
          %v893 = vpop.permute.xlu0 %892
          %894 = vrot.lane.b32.xlu0 %v358, 108
          %v895 = vpop.permute.xlu0 %894
          %896 = vrot.lane.b32.xlu0 %v357, 108
          %v897 = vpop.permute.xlu0 %896
          %898 = vrot.lane.b32.xlu0 %v359, 108
          %v899 = vpop.permute.xlu0 %898
          %vm900 = vcmask 883712
          %v901 = vsel %vm900, %v893, %v895
          %v902 = vsel %vm900, %v895, %v897
          %v903 = vsel %vm900, %v897, %v899
          %v905 = vsel %vm372, %v891, 0
          %v908 = vsel %vm376, %v901, 0
          %v911 = vsel %vm376, %v902, 0
          %v914 = vsel %vm376, %v903, 0
          %916 = vmatprep.subr.bf16.mxu0 0
          %917 = vmatpush1.bf16.msra.mxu0 0
          %918 = vmatprep.subr.bf16.mxu0 0
          %919 = vmatpush1.bf16.msra.mxu0 0
          %920 = vmatprep.subr.bf16.mxu0 0
          %921 = vmatpush1.bf16.msra.mxu0 0
          %922 = vmatprep.subr.bf16.mxu0 0
          %923 = vmatpush1.bf16.msra.mxu0 0
          %924 = vmatprep.subr.bf16.mxu0 0
          %925 = vmatpush1.bf16.msra.mxu0 0
          %926 = vmatprep.subr.bf16.mxu0 0
          %927 = vmatpush1.bf16.msra.mxu0 0
          %928 = vmatprep.subr.bf16.mxu0 0
          %929 = vmatpush1.bf16.msra.mxu0 0
          %930 = vmatprep.subr.bf16.mxu0 %v911
          %931 = vmatpush1.bf16.msra.mxu0 %v908
          %932 = vmatprep.subr.bf16.mxu0 0
          %933 = vmatpush2.bf16.msra.mxu0 0
          %934 = vmatprep.subr.bf16.mxu0 0
          %935 = vmatpush2.bf16.msra.mxu0 0
          %936 = vmatprep.subr.bf16.mxu0 0
          %937 = vmatpush2.bf16.msra.mxu0 0
          %938 = vmatprep.subr.bf16.mxu0 0
          %939 = vmatpush2.bf16.msra.mxu0 0
          %940 = vmatprep.subr.bf16.mxu0 0
          %941 = vmatpush2.bf16.msra.mxu0 0
          %942 = vmatprep.subr.bf16.mxu0 0
          %943 = vmatpush2.bf16.msra.mxu0 0
          %944 = vmatprep.subr.bf16.mxu0 0
          %945 = vmatpush2.bf16.msra.mxu0 0
          %946 = vmatprep.subr.bf16.mxu0 0
          %947 = vmatpush2.bf16.msra.mxu0 0
          %948 = vmatprep.mubr.bf16.mxu0 0
          %949 = vmatmul.mubr.bf16.gmra.mxu0 %v905
          %v950 = vpop.f32.mrf.mxu0
          %v951 = vadd.f32 0.0, %v950
          %v952 = vpop.f32.mrf.mxu0
          %v953 = vadd.f32 0.0, %v952
          %v954 = vpop.f32.mrf.mxu0
          %v955 = vpop.f32.mrf.mxu0
          %956 = vdwg.mxu0
          %957 = vmatprep.subr.bf16.mxu0 0
          %958 = vmatpush1.bf16.msra.mxu0 0
          %959 = vmatprep.subr.bf16.mxu0 0
          %960 = vmatpush1.bf16.msra.mxu0 0
          %961 = vmatprep.subr.bf16.mxu0 0
          %962 = vmatpush1.bf16.msra.mxu0 0
          %963 = vmatprep.subr.bf16.mxu0 0
          %964 = vmatpush1.bf16.msra.mxu0 0
          %965 = vmatprep.subr.bf16.mxu0 0
          %966 = vmatpush1.bf16.msra.mxu0 0
          %967 = vmatprep.subr.bf16.mxu0 0
          %968 = vmatpush1.bf16.msra.mxu0 0
          %969 = vmatprep.subr.bf16.mxu0 0
          %970 = vmatpush1.bf16.msra.mxu0 0
          %971 = vmatprep.subr.bf16.mxu0 0
          %972 = vmatpush1.bf16.msra.mxu0 %v914
          %973 = vmatprep.subr.bf16.mxu0 0
          %974 = vmatpush2.bf16.msra.mxu0 0
          %975 = vmatprep.subr.bf16.mxu0 0
          %976 = vmatpush2.bf16.msra.mxu0 0
          %977 = vmatprep.subr.bf16.mxu0 0
          %978 = vmatpush2.bf16.msra.mxu0 0
          %979 = vmatprep.subr.bf16.mxu0 0
          %980 = vmatpush2.bf16.msra.mxu0 0
          %981 = vmatprep.subr.bf16.mxu0 0
          %982 = vmatpush2.bf16.msra.mxu0 0
          %983 = vmatprep.subr.bf16.mxu0 0
          %984 = vmatpush2.bf16.msra.mxu0 0
          %985 = vmatprep.subr.bf16.mxu0 0
          %986 = vmatpush2.bf16.msra.mxu0 0
          %987 = vmatprep.subr.bf16.mxu0 0
          %988 = vmatpush2.bf16.msra.mxu0 0
          %989 = vmatprep.mubr.bf16.mxu0 0
          %990 = vmatmul.mubr.bf16.gmra.mxu0 %v905
          %v991 = vpop.f32.mrf.mxu0
          %v992 = vadd.f32 0.0, %v991
          %v993 = vpop.f32.mrf.mxu0
          %v994 = vpop.f32.mrf.mxu0
          %v995 = vpop.f32.mrf.mxu0
          %996 = vdwg.mxu0
          %v997 = vadd.f32 %v887, %v951
          %v998 = vadd.f32 %v888, %v953
          %v999 = vadd.f32 %v889, %v992
          %s1000 = scalar_lea.vmem %s1, 12
          %v1001 = vld [vmem:[%s1000] sm:$0x3]
          %1002 = vrot.lane.b32.xlu0 %v350, 92
          %v1003 = vpop.permute.xlu0 %1002
          %1004 = vrot.lane.b32.xlu0 %v358, 92
          %v1005 = vpop.permute.xlu0 %1004
          %1006 = vrot.lane.b32.xlu0 %v357, 92
          %v1007 = vpop.permute.xlu0 %1006
          %1008 = vrot.lane.b32.xlu0 %v359, 92
          %v1009 = vpop.permute.xlu0 %1008
          %vm1010 = vcmask 752640
          %v1011 = vsel %vm1010, %v1003, %v1005
          %v1012 = vsel %vm1010, %v1005, %v1007
          %v1013 = vsel %vm1010, %v1007, %v1009
          %v1015 = vsel %vm372, %v1001, 0
          %v1018 = vsel %vm376, %v1011, 0
          %v1021 = vsel %vm376, %v1012, 0
          %v1024 = vsel %vm376, %v1013, 0
          %1026 = vmatprep.subr.bf16.mxu0 0
          %1027 = vmatpush1.bf16.msra.mxu0 0
          %1028 = vmatprep.subr.bf16.mxu0 0
          %1029 = vmatpush1.bf16.msra.mxu0 0
          %1030 = vmatprep.subr.bf16.mxu0 0
          %1031 = vmatpush1.bf16.msra.mxu0 0
          %1032 = vmatprep.subr.bf16.mxu0 0
          %1033 = vmatpush1.bf16.msra.mxu0 0
          %1034 = vmatprep.subr.bf16.mxu0 0
          %1035 = vmatpush1.bf16.msra.mxu0 0
          %1036 = vmatprep.subr.bf16.mxu0 0
          %1037 = vmatpush1.bf16.msra.mxu0 0
          %1038 = vmatprep.subr.bf16.mxu0 0
          %1039 = vmatpush1.bf16.msra.mxu0 0
          %1040 = vmatprep.subr.bf16.mxu0 %v1021
          %1041 = vmatpush1.bf16.msra.mxu0 %v1018
          %1042 = vmatprep.subr.bf16.mxu0 0
          %1043 = vmatpush2.bf16.msra.mxu0 0
          %1044 = vmatprep.subr.bf16.mxu0 0
          %1045 = vmatpush2.bf16.msra.mxu0 0
          %1046 = vmatprep.subr.bf16.mxu0 0
          %1047 = vmatpush2.bf16.msra.mxu0 0
          %1048 = vmatprep.subr.bf16.mxu0 0
          %1049 = vmatpush2.bf16.msra.mxu0 0
          %1050 = vmatprep.subr.bf16.mxu0 0
          %1051 = vmatpush2.bf16.msra.mxu0 0
          %1052 = vmatprep.subr.bf16.mxu0 0
          %1053 = vmatpush2.bf16.msra.mxu0 0
          %1054 = vmatprep.subr.bf16.mxu0 0
          %1055 = vmatpush2.bf16.msra.mxu0 0
          %1056 = vmatprep.subr.bf16.mxu0 0
          %1057 = vmatpush2.bf16.msra.mxu0 0
          %1058 = vmatprep.mubr.bf16.mxu0 0
          %1059 = vmatmul.mubr.bf16.gmra.mxu0 %v1015
          %v1060 = vpop.f32.mrf.mxu0
          %v1061 = vadd.f32 0.0, %v1060
          %v1062 = vpop.f32.mrf.mxu0
          %v1063 = vadd.f32 0.0, %v1062
          %v1064 = vpop.f32.mrf.mxu0
          %v1065 = vpop.f32.mrf.mxu0
          %1066 = vdwg.mxu0
          %1067 = vmatprep.subr.bf16.mxu0 0
          %1068 = vmatpush1.bf16.msra.mxu0 0
          %1069 = vmatprep.subr.bf16.mxu0 0
          %1070 = vmatpush1.bf16.msra.mxu0 0
          %1071 = vmatprep.subr.bf16.mxu0 0
          %1072 = vmatpush1.bf16.msra.mxu0 0
          %1073 = vmatprep.subr.bf16.mxu0 0
          %1074 = vmatpush1.bf16.msra.mxu0 0
          %1075 = vmatprep.subr.bf16.mxu0 0
          %1076 = vmatpush1.bf16.msra.mxu0 0
          %1077 = vmatprep.subr.bf16.mxu0 0
          %1078 = vmatpush1.bf16.msra.mxu0 0
          %1079 = vmatprep.subr.bf16.mxu0 0
          %1080 = vmatpush1.bf16.msra.mxu0 0
          %1081 = vmatprep.subr.bf16.mxu0 0
          %1082 = vmatpush1.bf16.msra.mxu0 %v1024
          %1083 = vmatprep.subr.bf16.mxu0 0
          %1084 = vmatpush2.bf16.msra.mxu0 0
          %1085 = vmatprep.subr.bf16.mxu0 0
          %1086 = vmatpush2.bf16.msra.mxu0 0
          %1087 = vmatprep.subr.bf16.mxu0 0
          %1088 = vmatpush2.bf16.msra.mxu0 0
          %1089 = vmatprep.subr.bf16.mxu0 0
          %1090 = vmatpush2.bf16.msra.mxu0 0
          %1091 = vmatprep.subr.bf16.mxu0 0
          %1092 = vmatpush2.bf16.msra.mxu0 0
          %1093 = vmatprep.subr.bf16.mxu0 0
          %1094 = vmatpush2.bf16.msra.mxu0 0
          %1095 = vmatprep.subr.bf16.mxu0 0
          %1096 = vmatpush2.bf16.msra.mxu0 0
          %1097 = vmatprep.subr.bf16.mxu0 0
          %1098 = vmatpush2.bf16.msra.mxu0 0
          %1099 = vmatprep.mubr.bf16.mxu0 0
          %1100 = vmatmul.mubr.bf16.gmra.mxu0 %v1015
          %v1101 = vpop.f32.mrf.mxu0
          %v1102 = vadd.f32 0.0, %v1101
          %v1103 = vpop.f32.mrf.mxu0
          %v1104 = vpop.f32.mrf.mxu0
          %v1105 = vpop.f32.mrf.mxu0
          %1106 = vdwg.mxu0
          %v1107 = vadd.f32 %v997, %v1061
          %v1108 = vadd.f32 %v998, %v1063
          %v1109 = vadd.f32 %v999, %v1102
          %s1110 = scalar_lea.vmem %s1, 14
          %v1111 = vld [vmem:[%s1110] sm:$0x3]
          %1112 = vrot.lane.b32.xlu0 %v350, 91
          %v1113 = vpop.permute.xlu0 %1112
          %1114 = vrot.lane.b32.xlu0 %v358, 91
          %v1115 = vpop.permute.xlu0 %1114
          %1116 = vrot.lane.b32.xlu0 %v357, 91
          %v1117 = vpop.permute.xlu0 %1116
          %1118 = vrot.lane.b32.xlu0 %v359, 91
          %v1119 = vpop.permute.xlu0 %1118
          %vm1120 = vcmask 744448
          %v1121 = vsel %vm1120, %v1113, %v1115
          %v1122 = vsel %vm1120, %v1115, %v1117
          %v1123 = vsel %vm1120, %v1117, %v1119
          %v1125 = vsel %vm372, %v1111, 0
          %v1128 = vsel %vm376, %v1121, 0
          %v1131 = vsel %vm376, %v1122, 0
          %v1134 = vsel %vm376, %v1123, 0
          %1136 = vmatprep.subr.bf16.mxu0 0
          %1137 = vmatpush1.bf16.msra.mxu0 0
          %1138 = vmatprep.subr.bf16.mxu0 0
          %1139 = vmatpush1.bf16.msra.mxu0 0
          %1140 = vmatprep.subr.bf16.mxu0 0
          %1141 = vmatpush1.bf16.msra.mxu0 0
          %1142 = vmatprep.subr.bf16.mxu0 0
          %1143 = vmatpush1.bf16.msra.mxu0 0
          %1144 = vmatprep.subr.bf16.mxu0 0
          %1145 = vmatpush1.bf16.msra.mxu0 0
          %1146 = vmatprep.subr.bf16.mxu0 0
          %1147 = vmatpush1.bf16.msra.mxu0 0
          %1148 = vmatprep.subr.bf16.mxu0 0
          %1149 = vmatpush1.bf16.msra.mxu0 0
          %1150 = vmatprep.subr.bf16.mxu0 %v1131
          %1151 = vmatpush1.bf16.msra.mxu0 %v1128
          %1152 = vmatprep.subr.bf16.mxu0 0
          %1153 = vmatpush2.bf16.msra.mxu0 0
          %1154 = vmatprep.subr.bf16.mxu0 0
          %1155 = vmatpush2.bf16.msra.mxu0 0
          %1156 = vmatprep.subr.bf16.mxu0 0
          %1157 = vmatpush2.bf16.msra.mxu0 0
          %1158 = vmatprep.subr.bf16.mxu0 0
          %1159 = vmatpush2.bf16.msra.mxu0 0
          %1160 = vmatprep.subr.bf16.mxu0 0
          %1161 = vmatpush2.bf16.msra.mxu0 0
          %1162 = vmatprep.subr.bf16.mxu0 0
          %1163 = vmatpush2.bf16.msra.mxu0 0
          %1164 = vmatprep.subr.bf16.mxu0 0
          %1165 = vmatpush2.bf16.msra.mxu0 0
          %1166 = vmatprep.subr.bf16.mxu0 0
          %1167 = vmatpush2.bf16.msra.mxu0 0
          %1168 = vmatprep.mubr.bf16.mxu0 0
          %1169 = vmatmul.mubr.bf16.gmra.mxu0 %v1125
          %v1170 = vpop.f32.mrf.mxu0
          %v1171 = vadd.f32 0.0, %v1170
          %v1172 = vpop.f32.mrf.mxu0
          %v1173 = vadd.f32 0.0, %v1172
          %v1174 = vpop.f32.mrf.mxu0
          %v1175 = vpop.f32.mrf.mxu0
          %1176 = vdwg.mxu0
          %1177 = vmatprep.subr.bf16.mxu0 0
          %1178 = vmatpush1.bf16.msra.mxu0 0
          %1179 = vmatprep.subr.bf16.mxu0 0
          %1180 = vmatpush1.bf16.msra.mxu0 0
          %1181 = vmatprep.subr.bf16.mxu0 0
          %1182 = vmatpush1.bf16.msra.mxu0 0
          %1183 = vmatprep.subr.bf16.mxu0 0
          %1184 = vmatpush1.bf16.msra.mxu0 0
          %1185 = vmatprep.subr.bf16.mxu0 0
          %1186 = vmatpush1.bf16.msra.mxu0 0
          %1187 = vmatprep.subr.bf16.mxu0 0
          %1188 = vmatpush1.bf16.msra.mxu0 0
          %1189 = vmatprep.subr.bf16.mxu0 0
          %1190 = vmatpush1.bf16.msra.mxu0 0
          %1191 = vmatprep.subr.bf16.mxu0 0
          %1192 = vmatpush1.bf16.msra.mxu0 %v1134
          %1193 = vmatprep.subr.bf16.mxu0 0
          %1194 = vmatpush2.bf16.msra.mxu0 0
          %1195 = vmatprep.subr.bf16.mxu0 0
          %1196 = vmatpush2.bf16.msra.mxu0 0
          %1197 = vmatprep.subr.bf16.mxu0 0
          %1198 = vmatpush2.bf16.msra.mxu0 0
          %1199 = vmatprep.subr.bf16.mxu0 0
          %1200 = vmatpush2.bf16.msra.mxu0 0
          %1201 = vmatprep.subr.bf16.mxu0 0
          %1202 = vmatpush2.bf16.msra.mxu0 0
          %1203 = vmatprep.subr.bf16.mxu0 0
          %1204 = vmatpush2.bf16.msra.mxu0 0
          %1205 = vmatprep.subr.bf16.mxu0 0
          %1206 = vmatpush2.bf16.msra.mxu0 0
          %1207 = vmatprep.subr.bf16.mxu0 0
          %1208 = vmatpush2.bf16.msra.mxu0 0
          %1209 = vmatprep.mubr.bf16.mxu0 0
          %1210 = vmatmul.mubr.bf16.gmra.mxu0 %v1125
          %v1211 = vpop.f32.mrf.mxu0
          %v1212 = vadd.f32 0.0, %v1211
          %v1213 = vpop.f32.mrf.mxu0
          %v1214 = vpop.f32.mrf.mxu0
          %v1215 = vpop.f32.mrf.mxu0
          %1216 = vdwg.mxu0
          %v1217 = vadd.f32 %v1107, %v1171
          %v1218 = vadd.f32 %v1108, %v1173
          %v1219 = vadd.f32 %v1109, %v1212
          %s1220 = scalar_lea.vmem %s1, 16
          %v1221 = vld [vmem:[%s1220] sm:$0x3]
          %1222 = vrot.lane.b32.xlu0 %v350, 90
          %v1223 = vpop.permute.xlu0 %1222
          %1224 = vrot.lane.b32.xlu0 %v358, 90
          %v1225 = vpop.permute.xlu0 %1224
          %1226 = vrot.lane.b32.xlu0 %v357, 90
          %v1227 = vpop.permute.xlu0 %1226
          %1228 = vrot.lane.b32.xlu0 %v359, 90
          %v1229 = vpop.permute.xlu0 %1228
          %vm1230 = vcmask 736256
          %v1231 = vsel %vm1230, %v1223, %v1225
          %v1232 = vsel %vm1230, %v1225, %v1227
          %v1233 = vsel %vm1230, %v1227, %v1229
          %v1235 = vsel %vm372, %v1221, 0
          %v1238 = vsel %vm376, %v1231, 0
          %v1241 = vsel %vm376, %v1232, 0
          %v1244 = vsel %vm376, %v1233, 0
          %1246 = vmatprep.subr.bf16.mxu0 0
          %1247 = vmatpush1.bf16.msra.mxu0 0
          %1248 = vmatprep.subr.bf16.mxu0 0
          %1249 = vmatpush1.bf16.msra.mxu0 0
          %1250 = vmatprep.subr.bf16.mxu0 0
          %1251 = vmatpush1.bf16.msra.mxu0 0
          %1252 = vmatprep.subr.bf16.mxu0 0
          %1253 = vmatpush1.bf16.msra.mxu0 0
          %1254 = vmatprep.subr.bf16.mxu0 0
          %1255 = vmatpush1.bf16.msra.mxu0 0
          %1256 = vmatprep.subr.bf16.mxu0 0
          %1257 = vmatpush1.bf16.msra.mxu0 0
          %1258 = vmatprep.subr.bf16.mxu0 0
          %1259 = vmatpush1.bf16.msra.mxu0 0
          %1260 = vmatprep.subr.bf16.mxu0 %v1241
          %1261 = vmatpush1.bf16.msra.mxu0 %v1238
          %1262 = vmatprep.subr.bf16.mxu0 0
          %1263 = vmatpush2.bf16.msra.mxu0 0
          %1264 = vmatprep.subr.bf16.mxu0 0
          %1265 = vmatpush2.bf16.msra.mxu0 0
          %1266 = vmatprep.subr.bf16.mxu0 0
          %1267 = vmatpush2.bf16.msra.mxu0 0
          %1268 = vmatprep.subr.bf16.mxu0 0
          %1269 = vmatpush2.bf16.msra.mxu0 0
          %1270 = vmatprep.subr.bf16.mxu0 0
          %1271 = vmatpush2.bf16.msra.mxu0 0
          %1272 = vmatprep.subr.bf16.mxu0 0
          %1273 = vmatpush2.bf16.msra.mxu0 0
          %1274 = vmatprep.subr.bf16.mxu0 0
          %1275 = vmatpush2.bf16.msra.mxu0 0
          %1276 = vmatprep.subr.bf16.mxu0 0
          %1277 = vmatpush2.bf16.msra.mxu0 0
          %1278 = vmatprep.mubr.bf16.mxu0 0
          %1279 = vmatmul.mubr.bf16.gmra.mxu0 %v1235
          %v1280 = vpop.f32.mrf.mxu0
          %v1281 = vadd.f32 0.0, %v1280
          %v1282 = vpop.f32.mrf.mxu0
          %v1283 = vadd.f32 0.0, %v1282
          %v1284 = vpop.f32.mrf.mxu0
          %v1285 = vpop.f32.mrf.mxu0
          %1286 = vdwg.mxu0
          %1287 = vmatprep.subr.bf16.mxu0 0
          %1288 = vmatpush1.bf16.msra.mxu0 0
          %1289 = vmatprep.subr.bf16.mxu0 0
          %1290 = vmatpush1.bf16.msra.mxu0 0
          %1291 = vmatprep.subr.bf16.mxu0 0
          %1292 = vmatpush1.bf16.msra.mxu0 0
          %1293 = vmatprep.subr.bf16.mxu0 0
          %1294 = vmatpush1.bf16.msra.mxu0 0
          %1295 = vmatprep.subr.bf16.mxu0 0
          %1296 = vmatpush1.bf16.msra.mxu0 0
          %1297 = vmatprep.subr.bf16.mxu0 0
          %1298 = vmatpush1.bf16.msra.mxu0 0
          %1299 = vmatprep.subr.bf16.mxu0 0
          %1300 = vmatpush1.bf16.msra.mxu0 0
          %1301 = vmatprep.subr.bf16.mxu0 0
          %1302 = vmatpush1.bf16.msra.mxu0 %v1244
          %1303 = vmatprep.subr.bf16.mxu0 0
          %1304 = vmatpush2.bf16.msra.mxu0 0
          %1305 = vmatprep.subr.bf16.mxu0 0
          %1306 = vmatpush2.bf16.msra.mxu0 0
          %1307 = vmatprep.subr.bf16.mxu0 0
          %1308 = vmatpush2.bf16.msra.mxu0 0
          %1309 = vmatprep.subr.bf16.mxu0 0
          %1310 = vmatpush2.bf16.msra.mxu0 0
          %1311 = vmatprep.subr.bf16.mxu0 0
          %1312 = vmatpush2.bf16.msra.mxu0 0
          %1313 = vmatprep.subr.bf16.mxu0 0
          %1314 = vmatpush2.bf16.msra.mxu0 0
          %1315 = vmatprep.subr.bf16.mxu0 0
          %1316 = vmatpush2.bf16.msra.mxu0 0
          %1317 = vmatprep.subr.bf16.mxu0 0
          %1318 = vmatpush2.bf16.msra.mxu0 0
          %1319 = vmatprep.mubr.bf16.mxu0 0
          %1320 = vmatmul.mubr.bf16.gmra.mxu0 %v1235
          %v1321 = vpop.f32.mrf.mxu0
          %v1322 = vadd.f32 0.0, %v1321
          %v1323 = vpop.f32.mrf.mxu0
          %v1324 = vpop.f32.mrf.mxu0
          %v1325 = vpop.f32.mrf.mxu0
          %1326 = vdwg.mxu0
          %v1327 = vadd.f32 %v1217, %v1281
          %v1328 = vadd.f32 %v1218, %v1283
          %v1329 = vadd.f32 %v1219, %v1322
          %v1330 = vmax.f32 %v1327, 0.0
          %v1331 = vmax.f32 %v1328, 0.0
          %v1332 = vmax.f32 %v1329, 0.0
          %v1333 = vld [vmem:[#allocation3] sm:$0xf]
          %v1335 = vlaneseq
          %v1336 = vshrl.u32 %v1335, 7
          %v1337 = vsub.s32 0, %v1336
          %v1338 = vrot.slane %v333, %v1337
          %v1339 = vlaneseq
          %v1340 = vshrl.u32 %v1339, 7
          %v1341 = vsub.s32 1, %v1340
          %v1342 = vrot.slane %v333, %v1341
          %v1343 = vlaneseq
          %v1344 = vshrl.u32 %v1343, 7
          %v1345 = vsub.s32 2, %v1344
          %v1346 = vrot.slane %v333, %v1345
          %v1350 = vmul.f32 %v1330, %v1338
          %v1351 = vmul.f32 %v1331, %v1342
          %v1352 = vmul.f32 %v1332, %v1346
          %vm1353 = vcmask 1043456
          %v1354 = vsel %vm1353, %v1350, 0.0
          %v1355 = vsel %vm1353, %v1351, 0.0
          %v1356 = vadd.f32 %v1354, %v1355
          %v1357 = vsel %vm1353, %v1352, 0.0
          %v1358 = vadd.f32 %v1356, %v1357
          %1359 = vadd.xlane.f32.xlu0 %v1358
          %v1360 = vpop.xlane.xlu0 %1359
          %v1361 = vadd.f32 %v1333, %v1360
          %vm1362 = vcmask 3072
          %1363 = vst.msk [vmem:[#allocation3] sm:$0xf] %vm1362, %v1361
          %v1364 = vpack.c.bf16 %v1330, %v1330
          %v1365 = vpack.c.bf16 %v1331, %v1331
          %v1366 = vpack.c.bf16 %v1332, %v1332
          %v1370 = vcombine.low %v1364, %v1365
          %v1372 = vunpack.c.l.s4 1983009808
          %v1373 = vunpack.c.0.s8 %v1372
          %v1374 = vlaneseq
          %v1375 = vshrl.u32 %v1374, 7
          %v1376 = vsub.s32 %v1373, %v1375
          %v1377 = vrot.slane %v1370, %v1376
          %v1379 = vunpack.c.l.s4 1983009808
          %v1380 = vunpack.c.0.s8 %v1379
          %v1381 = vlaneseq
          %v1382 = vshrl.u32 %v1381, 7
          %v1383 = vsub.s32 %v1380, %v1382
          %v1384 = vrot.slane %v1366, %v1383
          %v1385 = vcombine.low %v1377, %v1384
          %s1387 = smul.addr %s334, 2
          %s1388 = scalar_lea.vmem [#allocation2], %s1387
          %1389 = vst [vmem:[%s1388] sm:$0x3f] %v1385
          %v1390 = vld [vmem:[%s337] sm:$0xaa]
          %s1391 = scalar_lea.vmem %s1, 18
          %v1392 = vld [vmem:[%s1391] sm:$0x3]
          %s1393 = scalar_lea.vmem %s1, 20
          %v1394 = vld [vmem:[%s1393] sm:$0x3]
          %v1396 = vcombine.high %v1390, %v1390
          %v1398 = vunpack.c.l.s4 1983009808
          %v1399 = vunpack.c.0.s8 %v1398
          %v1400 = vlaneseq
          %v1401 = vshrl.u32 %v1400, 7
          %v1402 = vsub.s32 %v1399, %v1401
          %v1403 = vrot.slane %v1390, %v1402
          %v1405 = vunpack.c.l.s4 1983009808
          %v1406 = vunpack.c.0.s8 %v1405
          %v1407 = vlaneseq
          %v1408 = vshrl.u32 %v1407, 7
          %v1409 = vsub.s32 %v1406, %v1408
          %v1410 = vrot.slane %v1396, %v1409
          %v1411 = vcombine.high %v1403, %v1403
          %v1412 = vcombine.high %v1410, %v1410
          %v1413 = vrot.slane %v1403, 1
          %v1414 = vrot.slane %v1411, 1
          %v1415 = vrot.slane %v1410, 1
          %v1416 = vrot.slane %v1412, 1
          %1417 = vrot.lane.b32.xlu0 %v1413, 127
          %v1418 = vpop.permute.xlu0 %1417
          %1419 = vrot.lane.b32.xlu0 %v1414, 127
          %v1420 = vpop.permute.xlu0 %1419
          %1421 = vrot.lane.b32.xlu0 %v1415, 127
          %v1422 = vpop.permute.xlu0 %1421
          %1423 = vrot.lane.b32.xlu0 %v1416, 127
          %v1424 = vpop.permute.xlu0 %1423
          %v1425 = vsel %vm368, %v1418, %v1420
          %v1426 = vsel %vm368, %v1420, %v1422
          %v1427 = vsel %vm368, %v1422, %v1424
          %v1429 = vsel %vm372, %v1394, 0
          %v1432 = vsel %vm376, %v1425, 0
          %v1435 = vsel %vm376, %v1426, 0
          %v1438 = vsel %vm376, %v1427, 0
          %1440 = vmatprep.subr.bf16.mxu0 0
          %1441 = vmatpush1.bf16.msra.mxu0 0
          %1442 = vmatprep.subr.bf16.mxu0 0
          %1443 = vmatpush1.bf16.msra.mxu0 0
          %1444 = vmatprep.subr.bf16.mxu0 0
          %1445 = vmatpush1.bf16.msra.mxu0 0
          %1446 = vmatprep.subr.bf16.mxu0 0
          %1447 = vmatpush1.bf16.msra.mxu0 0
          %1448 = vmatprep.subr.bf16.mxu0 0
          %1449 = vmatpush1.bf16.msra.mxu0 0
          %1450 = vmatprep.subr.bf16.mxu0 0
          %1451 = vmatpush1.bf16.msra.mxu0 0
          %1452 = vmatprep.subr.bf16.mxu0 0
          %1453 = vmatpush1.bf16.msra.mxu0 0
          %1454 = vmatprep.subr.bf16.mxu0 %v1435
          %1455 = vmatpush1.bf16.msra.mxu0 %v1432
          %1456 = vmatprep.subr.bf16.mxu0 0
          %1457 = vmatpush2.bf16.msra.mxu0 0
          %1458 = vmatprep.subr.bf16.mxu0 0
          %1459 = vmatpush2.bf16.msra.mxu0 0
          %1460 = vmatprep.subr.bf16.mxu0 0
          %1461 = vmatpush2.bf16.msra.mxu0 0
          %1462 = vmatprep.subr.bf16.mxu0 0
          %1463 = vmatpush2.bf16.msra.mxu0 0
          %1464 = vmatprep.subr.bf16.mxu0 0
          %1465 = vmatpush2.bf16.msra.mxu0 0
          %1466 = vmatprep.subr.bf16.mxu0 0
          %1467 = vmatpush2.bf16.msra.mxu0 0
          %1468 = vmatprep.subr.bf16.mxu0 0
          %1469 = vmatpush2.bf16.msra.mxu0 0
          %1470 = vmatprep.subr.bf16.mxu0 0
          %1471 = vmatpush2.bf16.msra.mxu0 0
          %1472 = vmatprep.mubr.bf16.mxu0 0
          %1473 = vmatmul.mubr.bf16.gmra.mxu0 %v1429
          %v1474 = vpop.f32.mrf.mxu0
          %v1475 = vadd.f32 0.0, %v1474
          %v1476 = vpop.f32.mrf.mxu0
          %v1477 = vadd.f32 0.0, %v1476
          %v1478 = vpop.f32.mrf.mxu0
          %v1479 = vpop.f32.mrf.mxu0
          %1480 = vdwg.mxu0
          %1481 = vmatprep.subr.bf16.mxu0 0
          %1482 = vmatpush1.bf16.msra.mxu0 0
          %1483 = vmatprep.subr.bf16.mxu0 0
          %1484 = vmatpush1.bf16.msra.mxu0 0
          %1485 = vmatprep.subr.bf16.mxu0 0
          %1486 = vmatpush1.bf16.msra.mxu0 0
          %1487 = vmatprep.subr.bf16.mxu0 0
          %1488 = vmatpush1.bf16.msra.mxu0 0
          %1489 = vmatprep.subr.bf16.mxu0 0
          %1490 = vmatpush1.bf16.msra.mxu0 0
          %1491 = vmatprep.subr.bf16.mxu0 0
          %1492 = vmatpush1.bf16.msra.mxu0 0
          %1493 = vmatprep.subr.bf16.mxu0 0
          %1494 = vmatpush1.bf16.msra.mxu0 0
          %1495 = vmatprep.subr.bf16.mxu0 0
          %1496 = vmatpush1.bf16.msra.mxu0 %v1438
          %1497 = vmatprep.subr.bf16.mxu0 0
          %1498 = vmatpush2.bf16.msra.mxu0 0
          %1499 = vmatprep.subr.bf16.mxu0 0
          %1500 = vmatpush2.bf16.msra.mxu0 0
          %1501 = vmatprep.subr.bf16.mxu0 0
          %1502 = vmatpush2.bf16.msra.mxu0 0
          %1503 = vmatprep.subr.bf16.mxu0 0
          %1504 = vmatpush2.bf16.msra.mxu0 0
          %1505 = vmatprep.subr.bf16.mxu0 0
          %1506 = vmatpush2.bf16.msra.mxu0 0
          %1507 = vmatprep.subr.bf16.mxu0 0
          %1508 = vmatpush2.bf16.msra.mxu0 0
          %1509 = vmatprep.subr.bf16.mxu0 0
          %1510 = vmatpush2.bf16.msra.mxu0 0
          %1511 = vmatprep.subr.bf16.mxu0 0
          %1512 = vmatpush2.bf16.msra.mxu0 0
          %1513 = vmatprep.mubr.bf16.mxu0 0
          %1514 = vmatmul.mubr.bf16.gmra.mxu0 %v1429
          %v1515 = vpop.f32.mrf.mxu0
          %v1516 = vadd.f32 0.0, %v1515
          %v1517 = vpop.f32.mrf.mxu0
          %v1518 = vpop.f32.mrf.mxu0
          %v1519 = vpop.f32.mrf.mxu0
          %1520 = vdwg.mxu0
          %v1522 = vsel %vm372, %v1392, 0
          %v1525 = vsel %vm376, %v1413, 0
          %v1528 = vsel %vm376, %v1414, 0
          %v1531 = vsel %vm376, %v1415, 0
          %1533 = vmatprep.subr.bf16.mxu0 0
          %1534 = vmatpush1.bf16.msra.mxu0 0
          %1535 = vmatprep.subr.bf16.mxu0 0
          %1536 = vmatpush1.bf16.msra.mxu0 0
          %1537 = vmatprep.subr.bf16.mxu0 0
          %1538 = vmatpush1.bf16.msra.mxu0 0
          %1539 = vmatprep.subr.bf16.mxu0 0
          %1540 = vmatpush1.bf16.msra.mxu0 0
          %1541 = vmatprep.subr.bf16.mxu0 0
          %1542 = vmatpush1.bf16.msra.mxu0 0
          %1543 = vmatprep.subr.bf16.mxu0 0
          %1544 = vmatpush1.bf16.msra.mxu0 0
          %1545 = vmatprep.subr.bf16.mxu0 0
          %1546 = vmatpush1.bf16.msra.mxu0 0
          %1547 = vmatprep.subr.bf16.mxu0 %v1528
          %1548 = vmatpush1.bf16.msra.mxu0 %v1525
          %1549 = vmatprep.subr.bf16.mxu0 0
          %1550 = vmatpush2.bf16.msra.mxu0 0
          %1551 = vmatprep.subr.bf16.mxu0 0
          %1552 = vmatpush2.bf16.msra.mxu0 0
          %1553 = vmatprep.subr.bf16.mxu0 0
          %1554 = vmatpush2.bf16.msra.mxu0 0
          %1555 = vmatprep.subr.bf16.mxu0 0
          %1556 = vmatpush2.bf16.msra.mxu0 0
          %1557 = vmatprep.subr.bf16.mxu0 0
          %1558 = vmatpush2.bf16.msra.mxu0 0
          %1559 = vmatprep.subr.bf16.mxu0 0
          %1560 = vmatpush2.bf16.msra.mxu0 0
          %1561 = vmatprep.subr.bf16.mxu0 0
          %1562 = vmatpush2.bf16.msra.mxu0 0
          %1563 = vmatprep.subr.bf16.mxu0 0
          %1564 = vmatpush2.bf16.msra.mxu0 0
          %1565 = vmatprep.mubr.bf16.mxu0 0
          %1566 = vmatmul.mubr.bf16.gmra.mxu0 %v1522
          %v1567 = vpop.f32.mrf.mxu0
          %v1568 = vadd.f32 %v1475, %v1567
          %v1569 = vpop.f32.mrf.mxu0
          %v1570 = vadd.f32 %v1477, %v1569
          %v1571 = vpop.f32.mrf.mxu0
          %v1572 = vpop.f32.mrf.mxu0
          %1573 = vdwg.mxu0
          %1574 = vmatprep.subr.bf16.mxu0 0
          %1575 = vmatpush1.bf16.msra.mxu0 0
          %1576 = vmatprep.subr.bf16.mxu0 0
          %1577 = vmatpush1.bf16.msra.mxu0 0
          %1578 = vmatprep.subr.bf16.mxu0 0
          %1579 = vmatpush1.bf16.msra.mxu0 0
          %1580 = vmatprep.subr.bf16.mxu0 0
          %1581 = vmatpush1.bf16.msra.mxu0 0
          %1582 = vmatprep.subr.bf16.mxu0 0
          %1583 = vmatpush1.bf16.msra.mxu0 0
          %1584 = vmatprep.subr.bf16.mxu0 0
          %1585 = vmatpush1.bf16.msra.mxu0 0
          %1586 = vmatprep.subr.bf16.mxu0 0
          %1587 = vmatpush1.bf16.msra.mxu0 0
          %1588 = vmatprep.subr.bf16.mxu0 0
          %1589 = vmatpush1.bf16.msra.mxu0 %v1531
          %1590 = vmatprep.subr.bf16.mxu0 0
          %1591 = vmatpush2.bf16.msra.mxu0 0
          %1592 = vmatprep.subr.bf16.mxu0 0
          %1593 = vmatpush2.bf16.msra.mxu0 0
          %1594 = vmatprep.subr.bf16.mxu0 0
          %1595 = vmatpush2.bf16.msra.mxu0 0
          %1596 = vmatprep.subr.bf16.mxu0 0
          %1597 = vmatpush2.bf16.msra.mxu0 0
          %1598 = vmatprep.subr.bf16.mxu0 0
          %1599 = vmatpush2.bf16.msra.mxu0 0
          %1600 = vmatprep.subr.bf16.mxu0 0
          %1601 = vmatpush2.bf16.msra.mxu0 0
          %1602 = vmatprep.subr.bf16.mxu0 0
          %1603 = vmatpush2.bf16.msra.mxu0 0
          %1604 = vmatprep.subr.bf16.mxu0 0
          %1605 = vmatpush2.bf16.msra.mxu0 0
          %1606 = vmatprep.mubr.bf16.mxu0 0
          %1607 = vmatmul.mubr.bf16.gmra.mxu0 %v1522
          %v1608 = vpop.f32.mrf.mxu0
          %v1609 = vadd.f32 %v1516, %v1608
          %v1610 = vpop.f32.mrf.mxu0
          %v1611 = vpop.f32.mrf.mxu0
          %v1612 = vpop.f32.mrf.mxu0
          %1613 = vdwg.mxu0
          %s1614 = scalar_lea.vmem %s1, 22
          %v1615 = vld [vmem:[%s1614] sm:$0x3]
          %1616 = vrot.lane.b32.xlu0 %v1413, 126
          %v1617 = vpop.permute.xlu0 %1616
          %1618 = vrot.lane.b32.xlu0 %v1414, 126
          %v1619 = vpop.permute.xlu0 %1618
          %1620 = vrot.lane.b32.xlu0 %v1415, 126
          %v1621 = vpop.permute.xlu0 %1620
          %1622 = vrot.lane.b32.xlu0 %v1416, 126
          %v1623 = vpop.permute.xlu0 %1622
          %v1624 = vsel %vm570, %v1617, %v1619
          %v1625 = vsel %vm570, %v1619, %v1621
          %v1626 = vsel %vm570, %v1621, %v1623
          %v1628 = vsel %vm372, %v1615, 0
          %v1631 = vsel %vm376, %v1624, 0
          %v1634 = vsel %vm376, %v1625, 0
          %v1637 = vsel %vm376, %v1626, 0
          %1639 = vmatprep.subr.bf16.mxu0 0
          %1640 = vmatpush1.bf16.msra.mxu0 0
          %1641 = vmatprep.subr.bf16.mxu0 0
          %1642 = vmatpush1.bf16.msra.mxu0 0
          %1643 = vmatprep.subr.bf16.mxu0 0
          %1644 = vmatpush1.bf16.msra.mxu0 0
          %1645 = vmatprep.subr.bf16.mxu0 0
          %1646 = vmatpush1.bf16.msra.mxu0 0
          %1647 = vmatprep.subr.bf16.mxu0 0
          %1648 = vmatpush1.bf16.msra.mxu0 0
          %1649 = vmatprep.subr.bf16.mxu0 0
          %1650 = vmatpush1.bf16.msra.mxu0 0
          %1651 = vmatprep.subr.bf16.mxu0 0
          %1652 = vmatpush1.bf16.msra.mxu0 0
          %1653 = vmatprep.subr.bf16.mxu0 %v1634
          %1654 = vmatpush1.bf16.msra.mxu0 %v1631
          %1655 = vmatprep.subr.bf16.mxu0 0
          %1656 = vmatpush2.bf16.msra.mxu0 0
          %1657 = vmatprep.subr.bf16.mxu0 0
          %1658 = vmatpush2.bf16.msra.mxu0 0
          %1659 = vmatprep.subr.bf16.mxu0 0
          %1660 = vmatpush2.bf16.msra.mxu0 0
          %1661 = vmatprep.subr.bf16.mxu0 0
          %1662 = vmatpush2.bf16.msra.mxu0 0
          %1663 = vmatprep.subr.bf16.mxu0 0
          %1664 = vmatpush2.bf16.msra.mxu0 0
          %1665 = vmatprep.subr.bf16.mxu0 0
          %1666 = vmatpush2.bf16.msra.mxu0 0
          %1667 = vmatprep.subr.bf16.mxu0 0
          %1668 = vmatpush2.bf16.msra.mxu0 0
          %1669 = vmatprep.subr.bf16.mxu0 0
          %1670 = vmatpush2.bf16.msra.mxu0 0
          %1671 = vmatprep.mubr.bf16.mxu0 0
          %1672 = vmatmul.mubr.bf16.gmra.mxu0 %v1628
          %v1673 = vpop.f32.mrf.mxu0
          %v1674 = vadd.f32 0.0, %v1673
          %v1675 = vpop.f32.mrf.mxu0
          %v1676 = vadd.f32 0.0, %v1675
          %v1677 = vpop.f32.mrf.mxu0
          %v1678 = vpop.f32.mrf.mxu0
          %1679 = vdwg.mxu0
          %1680 = vmatprep.subr.bf16.mxu0 0
          %1681 = vmatpush1.bf16.msra.mxu0 0
          %1682 = vmatprep.subr.bf16.mxu0 0
          %1683 = vmatpush1.bf16.msra.mxu0 0
          %1684 = vmatprep.subr.bf16.mxu0 0
          %1685 = vmatpush1.bf16.msra.mxu0 0
          %1686 = vmatprep.subr.bf16.mxu0 0
          %1687 = vmatpush1.bf16.msra.mxu0 0
          %1688 = vmatprep.subr.bf16.mxu0 0
          %1689 = vmatpush1.bf16.msra.mxu0 0
          %1690 = vmatprep.subr.bf16.mxu0 0
          %1691 = vmatpush1.bf16.msra.mxu0 0
          %1692 = vmatprep.subr.bf16.mxu0 0
          %1693 = vmatpush1.bf16.msra.mxu0 0
          %1694 = vmatprep.subr.bf16.mxu0 0
          %1695 = vmatpush1.bf16.msra.mxu0 %v1637
          %1696 = vmatprep.subr.bf16.mxu0 0
          %1697 = vmatpush2.bf16.msra.mxu0 0
          %1698 = vmatprep.subr.bf16.mxu0 0
          %1699 = vmatpush2.bf16.msra.mxu0 0
          %1700 = vmatprep.subr.bf16.mxu0 0
          %1701 = vmatpush2.bf16.msra.mxu0 0
          %1702 = vmatprep.subr.bf16.mxu0 0
          %1703 = vmatpush2.bf16.msra.mxu0 0
          %1704 = vmatprep.subr.bf16.mxu0 0
          %1705 = vmatpush2.bf16.msra.mxu0 0
          %1706 = vmatprep.subr.bf16.mxu0 0
          %1707 = vmatpush2.bf16.msra.mxu0 0
          %1708 = vmatprep.subr.bf16.mxu0 0
          %1709 = vmatpush2.bf16.msra.mxu0 0
          %1710 = vmatprep.subr.bf16.mxu0 0
          %1711 = vmatpush2.bf16.msra.mxu0 0
          %1712 = vmatprep.mubr.bf16.mxu0 0
          %1713 = vmatmul.mubr.bf16.gmra.mxu0 %v1628
          %v1714 = vpop.f32.mrf.mxu0
          %v1715 = vadd.f32 0.0, %v1714
          %v1716 = vpop.f32.mrf.mxu0
          %v1717 = vpop.f32.mrf.mxu0
          %v1718 = vpop.f32.mrf.mxu0
          %1719 = vdwg.mxu0
          %v1720 = vadd.f32 %v1568, %v1674
          %v1721 = vadd.f32 %v1570, %v1676
          %v1722 = vadd.f32 %v1609, %v1715
          %s1723 = scalar_lea.vmem %s1, 24
          %v1724 = vld [vmem:[%s1723] sm:$0x3]
          %1725 = vrot.lane.b32.xlu0 %v1413, 110
          %v1726 = vpop.permute.xlu0 %1725
          %1727 = vrot.lane.b32.xlu0 %v1414, 110
          %v1728 = vpop.permute.xlu0 %1727
          %1729 = vrot.lane.b32.xlu0 %v1415, 110
          %v1730 = vpop.permute.xlu0 %1729
          %1731 = vrot.lane.b32.xlu0 %v1416, 110
          %v1732 = vpop.permute.xlu0 %1731
          %v1733 = vsel %vm680, %v1726, %v1728
          %v1734 = vsel %vm680, %v1728, %v1730
          %v1735 = vsel %vm680, %v1730, %v1732
          %v1737 = vsel %vm372, %v1724, 0
          %v1740 = vsel %vm376, %v1733, 0
          %v1743 = vsel %vm376, %v1734, 0
          %v1746 = vsel %vm376, %v1735, 0
          %1748 = vmatprep.subr.bf16.mxu0 0
          %1749 = vmatpush1.bf16.msra.mxu0 0
          %1750 = vmatprep.subr.bf16.mxu0 0
          %1751 = vmatpush1.bf16.msra.mxu0 0
          %1752 = vmatprep.subr.bf16.mxu0 0
          %1753 = vmatpush1.bf16.msra.mxu0 0
          %1754 = vmatprep.subr.bf16.mxu0 0
          %1755 = vmatpush1.bf16.msra.mxu0 0
          %1756 = vmatprep.subr.bf16.mxu0 0
          %1757 = vmatpush1.bf16.msra.mxu0 0
          %1758 = vmatprep.subr.bf16.mxu0 0
          %1759 = vmatpush1.bf16.msra.mxu0 0
          %1760 = vmatprep.subr.bf16.mxu0 0
          %1761 = vmatpush1.bf16.msra.mxu0 0
          %1762 = vmatprep.subr.bf16.mxu0 %v1743
          %1763 = vmatpush1.bf16.msra.mxu0 %v1740
          %1764 = vmatprep.subr.bf16.mxu0 0
          %1765 = vmatpush2.bf16.msra.mxu0 0
          %1766 = vmatprep.subr.bf16.mxu0 0
          %1767 = vmatpush2.bf16.msra.mxu0 0
          %1768 = vmatprep.subr.bf16.mxu0 0
          %1769 = vmatpush2.bf16.msra.mxu0 0
          %1770 = vmatprep.subr.bf16.mxu0 0
          %1771 = vmatpush2.bf16.msra.mxu0 0
          %1772 = vmatprep.subr.bf16.mxu0 0
          %1773 = vmatpush2.bf16.msra.mxu0 0
          %1774 = vmatprep.subr.bf16.mxu0 0
          %1775 = vmatpush2.bf16.msra.mxu0 0
          %1776 = vmatprep.subr.bf16.mxu0 0
          %1777 = vmatpush2.bf16.msra.mxu0 0
          %1778 = vmatprep.subr.bf16.mxu0 0
          %1779 = vmatpush2.bf16.msra.mxu0 0
          %1780 = vmatprep.mubr.bf16.mxu0 0
          %1781 = vmatmul.mubr.bf16.gmra.mxu0 %v1737
          %v1782 = vpop.f32.mrf.mxu0
          %v1783 = vadd.f32 0.0, %v1782
          %v1784 = vpop.f32.mrf.mxu0
          %v1785 = vadd.f32 0.0, %v1784
          %v1786 = vpop.f32.mrf.mxu0
          %v1787 = vpop.f32.mrf.mxu0
          %1788 = vdwg.mxu0
          %1789 = vmatprep.subr.bf16.mxu0 0
          %1790 = vmatpush1.bf16.msra.mxu0 0
          %1791 = vmatprep.subr.bf16.mxu0 0
          %1792 = vmatpush1.bf16.msra.mxu0 0
          %1793 = vmatprep.subr.bf16.mxu0 0
          %1794 = vmatpush1.bf16.msra.mxu0 0
          %1795 = vmatprep.subr.bf16.mxu0 0
          %1796 = vmatpush1.bf16.msra.mxu0 0
          %1797 = vmatprep.subr.bf16.mxu0 0
          %1798 = vmatpush1.bf16.msra.mxu0 0
          %1799 = vmatprep.subr.bf16.mxu0 0
          %1800 = vmatpush1.bf16.msra.mxu0 0
          %1801 = vmatprep.subr.bf16.mxu0 0
          %1802 = vmatpush1.bf16.msra.mxu0 0
          %1803 = vmatprep.subr.bf16.mxu0 0
          %1804 = vmatpush1.bf16.msra.mxu0 %v1746
          %1805 = vmatprep.subr.bf16.mxu0 0
          %1806 = vmatpush2.bf16.msra.mxu0 0
          %1807 = vmatprep.subr.bf16.mxu0 0
          %1808 = vmatpush2.bf16.msra.mxu0 0
          %1809 = vmatprep.subr.bf16.mxu0 0
          %1810 = vmatpush2.bf16.msra.mxu0 0
          %1811 = vmatprep.subr.bf16.mxu0 0
          %1812 = vmatpush2.bf16.msra.mxu0 0
          %1813 = vmatprep.subr.bf16.mxu0 0
          %1814 = vmatpush2.bf16.msra.mxu0 0
          %1815 = vmatprep.subr.bf16.mxu0 0
          %1816 = vmatpush2.bf16.msra.mxu0 0
          %1817 = vmatprep.subr.bf16.mxu0 0
          %1818 = vmatpush2.bf16.msra.mxu0 0
          %1819 = vmatprep.subr.bf16.mxu0 0
          %1820 = vmatpush2.bf16.msra.mxu0 0
          %1821 = vmatprep.mubr.bf16.mxu0 0
          %1822 = vmatmul.mubr.bf16.gmra.mxu0 %v1737
          %v1823 = vpop.f32.mrf.mxu0
          %v1824 = vadd.f32 0.0, %v1823
          %v1825 = vpop.f32.mrf.mxu0
          %v1826 = vpop.f32.mrf.mxu0
          %v1827 = vpop.f32.mrf.mxu0
          %1828 = vdwg.mxu0
          %v1829 = vadd.f32 %v1720, %v1783
          %v1830 = vadd.f32 %v1721, %v1785
          %v1831 = vadd.f32 %v1722, %v1824
          %s1832 = scalar_lea.vmem %s1, 26
          %v1833 = vld [vmem:[%s1832] sm:$0x3]
          %1834 = vrot.lane.b32.xlu0 %v1413, 109
          %v1835 = vpop.permute.xlu0 %1834
          %1836 = vrot.lane.b32.xlu0 %v1414, 109
          %v1837 = vpop.permute.xlu0 %1836
          %1838 = vrot.lane.b32.xlu0 %v1415, 109
          %v1839 = vpop.permute.xlu0 %1838
          %1840 = vrot.lane.b32.xlu0 %v1416, 109
          %v1841 = vpop.permute.xlu0 %1840
          %v1842 = vsel %vm790, %v1835, %v1837
          %v1843 = vsel %vm790, %v1837, %v1839
          %v1844 = vsel %vm790, %v1839, %v1841
          %v1846 = vsel %vm372, %v1833, 0
          %v1849 = vsel %vm376, %v1842, 0
          %v1852 = vsel %vm376, %v1843, 0
          %v1855 = vsel %vm376, %v1844, 0
          %1857 = vmatprep.subr.bf16.mxu0 0
          %1858 = vmatpush1.bf16.msra.mxu0 0
          %1859 = vmatprep.subr.bf16.mxu0 0
          %1860 = vmatpush1.bf16.msra.mxu0 0
          %1861 = vmatprep.subr.bf16.mxu0 0
          %1862 = vmatpush1.bf16.msra.mxu0 0
          %1863 = vmatprep.subr.bf16.mxu0 0
          %1864 = vmatpush1.bf16.msra.mxu0 0
          %1865 = vmatprep.subr.bf16.mxu0 0
          %1866 = vmatpush1.bf16.msra.mxu0 0
          %1867 = vmatprep.subr.bf16.mxu0 0
          %1868 = vmatpush1.bf16.msra.mxu0 0
          %1869 = vmatprep.subr.bf16.mxu0 0
          %1870 = vmatpush1.bf16.msra.mxu0 0
          %1871 = vmatprep.subr.bf16.mxu0 %v1852
          %1872 = vmatpush1.bf16.msra.mxu0 %v1849
          %1873 = vmatprep.subr.bf16.mxu0 0
          %1874 = vmatpush2.bf16.msra.mxu0 0
          %1875 = vmatprep.subr.bf16.mxu0 0
          %1876 = vmatpush2.bf16.msra.mxu0 0
          %1877 = vmatprep.subr.bf16.mxu0 0
          %1878 = vmatpush2.bf16.msra.mxu0 0
          %1879 = vmatprep.subr.bf16.mxu0 0
          %1880 = vmatpush2.bf16.msra.mxu0 0
          %1881 = vmatprep.subr.bf16.mxu0 0
          %1882 = vmatpush2.bf16.msra.mxu0 0
          %1883 = vmatprep.subr.bf16.mxu0 0
          %1884 = vmatpush2.bf16.msra.mxu0 0
          %1885 = vmatprep.subr.bf16.mxu0 0
          %1886 = vmatpush2.bf16.msra.mxu0 0
          %1887 = vmatprep.subr.bf16.mxu0 0
          %1888 = vmatpush2.bf16.msra.mxu0 0
          %1889 = vmatprep.mubr.bf16.mxu0 0
          %1890 = vmatmul.mubr.bf16.gmra.mxu0 %v1846
          %v1891 = vpop.f32.mrf.mxu0
          %v1892 = vadd.f32 0.0, %v1891
          %v1893 = vpop.f32.mrf.mxu0
          %v1894 = vadd.f32 0.0, %v1893
          %v1895 = vpop.f32.mrf.mxu0
          %v1896 = vpop.f32.mrf.mxu0
          %1897 = vdwg.mxu0
          %1898 = vmatprep.subr.bf16.mxu0 0
          %1899 = vmatpush1.bf16.msra.mxu0 0
          %1900 = vmatprep.subr.bf16.mxu0 0
          %1901 = vmatpush1.bf16.msra.mxu0 0
          %1902 = vmatprep.subr.bf16.mxu0 0
          %1903 = vmatpush1.bf16.msra.mxu0 0
          %1904 = vmatprep.subr.bf16.mxu0 0
          %1905 = vmatpush1.bf16.msra.mxu0 0
          %1906 = vmatprep.subr.bf16.mxu0 0
          %1907 = vmatpush1.bf16.msra.mxu0 0
          %1908 = vmatprep.subr.bf16.mxu0 0
          %1909 = vmatpush1.bf16.msra.mxu0 0
          %1910 = vmatprep.subr.bf16.mxu0 0
          %1911 = vmatpush1.bf16.msra.mxu0 0
          %1912 = vmatprep.subr.bf16.mxu0 0
          %1913 = vmatpush1.bf16.msra.mxu0 %v1855
          %1914 = vmatprep.subr.bf16.mxu0 0
          %1915 = vmatpush2.bf16.msra.mxu0 0
          %1916 = vmatprep.subr.bf16.mxu0 0
          %1917 = vmatpush2.bf16.msra.mxu0 0
          %1918 = vmatprep.subr.bf16.mxu0 0
          %1919 = vmatpush2.bf16.msra.mxu0 0
          %1920 = vmatprep.subr.bf16.mxu0 0
          %1921 = vmatpush2.bf16.msra.mxu0 0
          %1922 = vmatprep.subr.bf16.mxu0 0
          %1923 = vmatpush2.bf16.msra.mxu0 0
          %1924 = vmatprep.subr.bf16.mxu0 0
          %1925 = vmatpush2.bf16.msra.mxu0 0
          %1926 = vmatprep.subr.bf16.mxu0 0
          %1927 = vmatpush2.bf16.msra.mxu0 0
          %1928 = vmatprep.subr.bf16.mxu0 0
          %1929 = vmatpush2.bf16.msra.mxu0 0
          %1930 = vmatprep.mubr.bf16.mxu0 0
          %1931 = vmatmul.mubr.bf16.gmra.mxu0 %v1846
          %v1932 = vpop.f32.mrf.mxu0
          %v1933 = vadd.f32 0.0, %v1932
          %v1934 = vpop.f32.mrf.mxu0
          %v1935 = vpop.f32.mrf.mxu0
          %v1936 = vpop.f32.mrf.mxu0
          %1937 = vdwg.mxu0
          %v1938 = vadd.f32 %v1829, %v1892
          %v1939 = vadd.f32 %v1830, %v1894
          %v1940 = vadd.f32 %v1831, %v1933
          %s1941 = scalar_lea.vmem %s1, 28
          %v1942 = vld [vmem:[%s1941] sm:$0x3]
          %1943 = vrot.lane.b32.xlu0 %v1413, 108
          %v1944 = vpop.permute.xlu0 %1943
          %1945 = vrot.lane.b32.xlu0 %v1414, 108
          %v1946 = vpop.permute.xlu0 %1945
          %1947 = vrot.lane.b32.xlu0 %v1415, 108
          %v1948 = vpop.permute.xlu0 %1947
          %1949 = vrot.lane.b32.xlu0 %v1416, 108
          %v1950 = vpop.permute.xlu0 %1949
          %v1951 = vsel %vm900, %v1944, %v1946
          %v1952 = vsel %vm900, %v1946, %v1948
          %v1953 = vsel %vm900, %v1948, %v1950
          %v1955 = vsel %vm372, %v1942, 0
          %v1958 = vsel %vm376, %v1951, 0
          %v1961 = vsel %vm376, %v1952, 0
          %v1964 = vsel %vm376, %v1953, 0
          %1966 = vmatprep.subr.bf16.mxu0 0
          %1967 = vmatpush1.bf16.msra.mxu0 0
          %1968 = vmatprep.subr.bf16.mxu0 0
          %1969 = vmatpush1.bf16.msra.mxu0 0
          %1970 = vmatprep.subr.bf16.mxu0 0
          %1971 = vmatpush1.bf16.msra.mxu0 0
          %1972 = vmatprep.subr.bf16.mxu0 0
          %1973 = vmatpush1.bf16.msra.mxu0 0
          %1974 = vmatprep.subr.bf16.mxu0 0
          %1975 = vmatpush1.bf16.msra.mxu0 0
          %1976 = vmatprep.subr.bf16.mxu0 0
          %1977 = vmatpush1.bf16.msra.mxu0 0
          %1978 = vmatprep.subr.bf16.mxu0 0
          %1979 = vmatpush1.bf16.msra.mxu0 0
          %1980 = vmatprep.subr.bf16.mxu0 %v1961
          %1981 = vmatpush1.bf16.msra.mxu0 %v1958
          %1982 = vmatprep.subr.bf16.mxu0 0
          %1983 = vmatpush2.bf16.msra.mxu0 0
          %1984 = vmatprep.subr.bf16.mxu0 0
          %1985 = vmatpush2.bf16.msra.mxu0 0
          %1986 = vmatprep.subr.bf16.mxu0 0
          %1987 = vmatpush2.bf16.msra.mxu0 0
          %1988 = vmatprep.subr.bf16.mxu0 0
          %1989 = vmatpush2.bf16.msra.mxu0 0
          %1990 = vmatprep.subr.bf16.mxu0 0
          %1991 = vmatpush2.bf16.msra.mxu0 0
          %1992 = vmatprep.subr.bf16.mxu0 0
          %1993 = vmatpush2.bf16.msra.mxu0 0
          %1994 = vmatprep.subr.bf16.mxu0 0
          %1995 = vmatpush2.bf16.msra.mxu0 0
          %1996 = vmatprep.subr.bf16.mxu0 0
          %1997 = vmatpush2.bf16.msra.mxu0 0
          %1998 = vmatprep.mubr.bf16.mxu0 0
          %1999 = vmatmul.mubr.bf16.gmra.mxu0 %v1955
          %v2000 = vpop.f32.mrf.mxu0
          %v2001 = vadd.f32 0.0, %v2000
          %v2002 = vpop.f32.mrf.mxu0
          %v2003 = vadd.f32 0.0, %v2002
          %v2004 = vpop.f32.mrf.mxu0
          %v2005 = vpop.f32.mrf.mxu0
          %2006 = vdwg.mxu0
          %2007 = vmatprep.subr.bf16.mxu0 0
          %2008 = vmatpush1.bf16.msra.mxu0 0
          %2009 = vmatprep.subr.bf16.mxu0 0
          %2010 = vmatpush1.bf16.msra.mxu0 0
          %2011 = vmatprep.subr.bf16.mxu0 0
          %2012 = vmatpush1.bf16.msra.mxu0 0
          %2013 = vmatprep.subr.bf16.mxu0 0
          %2014 = vmatpush1.bf16.msra.mxu0 0
          %2015 = vmatprep.subr.bf16.mxu0 0
          %2016 = vmatpush1.bf16.msra.mxu0 0
          %2017 = vmatprep.subr.bf16.mxu0 0
          %2018 = vmatpush1.bf16.msra.mxu0 0
          %2019 = vmatprep.subr.bf16.mxu0 0
          %2020 = vmatpush1.bf16.msra.mxu0 0
          %2021 = vmatprep.subr.bf16.mxu0 0
          %2022 = vmatpush1.bf16.msra.mxu0 %v1964
          %2023 = vmatprep.subr.bf16.mxu0 0
          %2024 = vmatpush2.bf16.msra.mxu0 0
          %2025 = vmatprep.subr.bf16.mxu0 0
          %2026 = vmatpush2.bf16.msra.mxu0 0
          %2027 = vmatprep.subr.bf16.mxu0 0
          %2028 = vmatpush2.bf16.msra.mxu0 0
          %2029 = vmatprep.subr.bf16.mxu0 0
          %2030 = vmatpush2.bf16.msra.mxu0 0
          %2031 = vmatprep.subr.bf16.mxu0 0
          %2032 = vmatpush2.bf16.msra.mxu0 0
          %2033 = vmatprep.subr.bf16.mxu0 0
          %2034 = vmatpush2.bf16.msra.mxu0 0
          %2035 = vmatprep.subr.bf16.mxu0 0
          %2036 = vmatpush2.bf16.msra.mxu0 0
          %2037 = vmatprep.subr.bf16.mxu0 0
          %2038 = vmatpush2.bf16.msra.mxu0 0
          %2039 = vmatprep.mubr.bf16.mxu0 0
          %2040 = vmatmul.mubr.bf16.gmra.mxu0 %v1955
          %v2041 = vpop.f32.mrf.mxu0
          %v2042 = vadd.f32 0.0, %v2041
          %v2043 = vpop.f32.mrf.mxu0
          %v2044 = vpop.f32.mrf.mxu0
          %v2045 = vpop.f32.mrf.mxu0
          %2046 = vdwg.mxu0
          %v2047 = vadd.f32 %v1938, %v2001
          %v2048 = vadd.f32 %v1939, %v2003
          %v2049 = vadd.f32 %v1940, %v2042
          %s2050 = scalar_lea.vmem %s1, 30
          %v2051 = vld [vmem:[%s2050] sm:$0x3]
          %2052 = vrot.lane.b32.xlu0 %v1413, 92
          %v2053 = vpop.permute.xlu0 %2052
          %2054 = vrot.lane.b32.xlu0 %v1414, 92
          %v2055 = vpop.permute.xlu0 %2054
          %2056 = vrot.lane.b32.xlu0 %v1415, 92
          %v2057 = vpop.permute.xlu0 %2056
          %2058 = vrot.lane.b32.xlu0 %v1416, 92
          %v2059 = vpop.permute.xlu0 %2058
          %v2060 = vsel %vm1010, %v2053, %v2055
          %v2061 = vsel %vm1010, %v2055, %v2057
          %v2062 = vsel %vm1010, %v2057, %v2059
          %v2064 = vsel %vm372, %v2051, 0
          %v2067 = vsel %vm376, %v2060, 0
          %v2070 = vsel %vm376, %v2061, 0
          %v2073 = vsel %vm376, %v2062, 0
          %2075 = vmatprep.subr.bf16.mxu0 0
          %2076 = vmatpush1.bf16.msra.mxu0 0
          %2077 = vmatprep.subr.bf16.mxu0 0
          %2078 = vmatpush1.bf16.msra.mxu0 0
          %2079 = vmatprep.subr.bf16.mxu0 0
          %2080 = vmatpush1.bf16.msra.mxu0 0
          %2081 = vmatprep.subr.bf16.mxu0 0
          %2082 = vmatpush1.bf16.msra.mxu0 0
          %2083 = vmatprep.subr.bf16.mxu0 0
          %2084 = vmatpush1.bf16.msra.mxu0 0
          %2085 = vmatprep.subr.bf16.mxu0 0
          %2086 = vmatpush1.bf16.msra.mxu0 0
          %2087 = vmatprep.subr.bf16.mxu0 0
          %2088 = vmatpush1.bf16.msra.mxu0 0
          %2089 = vmatprep.subr.bf16.mxu0 %v2070
          %2090 = vmatpush1.bf16.msra.mxu0 %v2067
          %2091 = vmatprep.subr.bf16.mxu0 0
          %2092 = vmatpush2.bf16.msra.mxu0 0
          %2093 = vmatprep.subr.bf16.mxu0 0
          %2094 = vmatpush2.bf16.msra.mxu0 0
          %2095 = vmatprep.subr.bf16.mxu0 0
          %2096 = vmatpush2.bf16.msra.mxu0 0
          %2097 = vmatprep.subr.bf16.mxu0 0
          %2098 = vmatpush2.bf16.msra.mxu0 0
          %2099 = vmatprep.subr.bf16.mxu0 0
          %2100 = vmatpush2.bf16.msra.mxu0 0
          %2101 = vmatprep.subr.bf16.mxu0 0
          %2102 = vmatpush2.bf16.msra.mxu0 0
          %2103 = vmatprep.subr.bf16.mxu0 0
          %2104 = vmatpush2.bf16.msra.mxu0 0
          %2105 = vmatprep.subr.bf16.mxu0 0
          %2106 = vmatpush2.bf16.msra.mxu0 0
          %2107 = vmatprep.mubr.bf16.mxu0 0
          %2108 = vmatmul.mubr.bf16.gmra.mxu0 %v2064
          %v2109 = vpop.f32.mrf.mxu0
          %v2110 = vadd.f32 0.0, %v2109
          %v2111 = vpop.f32.mrf.mxu0
          %v2112 = vadd.f32 0.0, %v2111
          %v2113 = vpop.f32.mrf.mxu0
          %v2114 = vpop.f32.mrf.mxu0
          %2115 = vdwg.mxu0
          %2116 = vmatprep.subr.bf16.mxu0 0
          %2117 = vmatpush1.bf16.msra.mxu0 0
          %2118 = vmatprep.subr.bf16.mxu0 0
          %2119 = vmatpush1.bf16.msra.mxu0 0
          %2120 = vmatprep.subr.bf16.mxu0 0
          %2121 = vmatpush1.bf16.msra.mxu0 0
          %2122 = vmatprep.subr.bf16.mxu0 0
          %2123 = vmatpush1.bf16.msra.mxu0 0
          %2124 = vmatprep.subr.bf16.mxu0 0
          %2125 = vmatpush1.bf16.msra.mxu0 0
          %2126 = vmatprep.subr.bf16.mxu0 0
          %2127 = vmatpush1.bf16.msra.mxu0 0
          %2128 = vmatprep.subr.bf16.mxu0 0
          %2129 = vmatpush1.bf16.msra.mxu0 0
          %2130 = vmatprep.subr.bf16.mxu0 0
          %2131 = vmatpush1.bf16.msra.mxu0 %v2073
          %2132 = vmatprep.subr.bf16.mxu0 0
          %2133 = vmatpush2.bf16.msra.mxu0 0
          %2134 = vmatprep.subr.bf16.mxu0 0
          %2135 = vmatpush2.bf16.msra.mxu0 0
          %2136 = vmatprep.subr.bf16.mxu0 0
          %2137 = vmatpush2.bf16.msra.mxu0 0
          %2138 = vmatprep.subr.bf16.mxu0 0
          %2139 = vmatpush2.bf16.msra.mxu0 0
          %2140 = vmatprep.subr.bf16.mxu0 0
          %2141 = vmatpush2.bf16.msra.mxu0 0
          %2142 = vmatprep.subr.bf16.mxu0 0
          %2143 = vmatpush2.bf16.msra.mxu0 0
          %2144 = vmatprep.subr.bf16.mxu0 0
          %2145 = vmatpush2.bf16.msra.mxu0 0
          %2146 = vmatprep.subr.bf16.mxu0 0
          %2147 = vmatpush2.bf16.msra.mxu0 0
          %2148 = vmatprep.mubr.bf16.mxu0 0
          %2149 = vmatmul.mubr.bf16.gmra.mxu0 %v2064
          %v2150 = vpop.f32.mrf.mxu0
          %v2151 = vadd.f32 0.0, %v2150
          %v2152 = vpop.f32.mrf.mxu0
          %v2153 = vpop.f32.mrf.mxu0
          %v2154 = vpop.f32.mrf.mxu0
          %2155 = vdwg.mxu0
          %v2156 = vadd.f32 %v2047, %v2110
          %v2157 = vadd.f32 %v2048, %v2112
          %v2158 = vadd.f32 %v2049, %v2151
          %s2159 = scalar_lea.vmem %s1, 32
          %v2160 = vld [vmem:[%s2159] sm:$0x3]
          %2161 = vrot.lane.b32.xlu0 %v1413, 91
          %v2162 = vpop.permute.xlu0 %2161
          %2163 = vrot.lane.b32.xlu0 %v1414, 91
          %v2164 = vpop.permute.xlu0 %2163
          %2165 = vrot.lane.b32.xlu0 %v1415, 91
          %v2166 = vpop.permute.xlu0 %2165
          %2167 = vrot.lane.b32.xlu0 %v1416, 91
          %v2168 = vpop.permute.xlu0 %2167
          %v2169 = vsel %vm1120, %v2162, %v2164
          %v2170 = vsel %vm1120, %v2164, %v2166
          %v2171 = vsel %vm1120, %v2166, %v2168
          %v2173 = vsel %vm372, %v2160, 0
          %v2176 = vsel %vm376, %v2169, 0
          %v2179 = vsel %vm376, %v2170, 0
          %v2182 = vsel %vm376, %v2171, 0
          %2184 = vmatprep.subr.bf16.mxu0 0
          %2185 = vmatpush1.bf16.msra.mxu0 0
          %2186 = vmatprep.subr.bf16.mxu0 0
          %2187 = vmatpush1.bf16.msra.mxu0 0
          %2188 = vmatprep.subr.bf16.mxu0 0
          %2189 = vmatpush1.bf16.msra.mxu0 0
          %2190 = vmatprep.subr.bf16.mxu0 0
          %2191 = vmatpush1.bf16.msra.mxu0 0
          %2192 = vmatprep.subr.bf16.mxu0 0
          %2193 = vmatpush1.bf16.msra.mxu0 0
          %2194 = vmatprep.subr.bf16.mxu0 0
          %2195 = vmatpush1.bf16.msra.mxu0 0
          %2196 = vmatprep.subr.bf16.mxu0 0
          %2197 = vmatpush1.bf16.msra.mxu0 0
          %2198 = vmatprep.subr.bf16.mxu0 %v2179
          %2199 = vmatpush1.bf16.msra.mxu0 %v2176
          %2200 = vmatprep.subr.bf16.mxu0 0
          %2201 = vmatpush2.bf16.msra.mxu0 0
          %2202 = vmatprep.subr.bf16.mxu0 0
          %2203 = vmatpush2.bf16.msra.mxu0 0
          %2204 = vmatprep.subr.bf16.mxu0 0
          %2205 = vmatpush2.bf16.msra.mxu0 0
          %2206 = vmatprep.subr.bf16.mxu0 0
          %2207 = vmatpush2.bf16.msra.mxu0 0
          %2208 = vmatprep.subr.bf16.mxu0 0
          %2209 = vmatpush2.bf16.msra.mxu0 0
          %2210 = vmatprep.subr.bf16.mxu0 0
          %2211 = vmatpush2.bf16.msra.mxu0 0
          %2212 = vmatprep.subr.bf16.mxu0 0
          %2213 = vmatpush2.bf16.msra.mxu0 0
          %2214 = vmatprep.subr.bf16.mxu0 0
          %2215 = vmatpush2.bf16.msra.mxu0 0
          %2216 = vmatprep.mubr.bf16.mxu0 0
          %2217 = vmatmul.mubr.bf16.gmra.mxu0 %v2173
          %v2218 = vpop.f32.mrf.mxu0
          %v2219 = vadd.f32 0.0, %v2218
          %v2220 = vpop.f32.mrf.mxu0
          %v2221 = vadd.f32 0.0, %v2220
          %v2222 = vpop.f32.mrf.mxu0
          %v2223 = vpop.f32.mrf.mxu0
          %2224 = vdwg.mxu0
          %2225 = vmatprep.subr.bf16.mxu0 0
          %2226 = vmatpush1.bf16.msra.mxu0 0
          %2227 = vmatprep.subr.bf16.mxu0 0
          %2228 = vmatpush1.bf16.msra.mxu0 0
          %2229 = vmatprep.subr.bf16.mxu0 0
          %2230 = vmatpush1.bf16.msra.mxu0 0
          %2231 = vmatprep.subr.bf16.mxu0 0
          %2232 = vmatpush1.bf16.msra.mxu0 0
          %2233 = vmatprep.subr.bf16.mxu0 0
          %2234 = vmatpush1.bf16.msra.mxu0 0
          %2235 = vmatprep.subr.bf16.mxu0 0
          %2236 = vmatpush1.bf16.msra.mxu0 0
          %2237 = vmatprep.subr.bf16.mxu0 0
          %2238 = vmatpush1.bf16.msra.mxu0 0
          %2239 = vmatprep.subr.bf16.mxu0 0
          %2240 = vmatpush1.bf16.msra.mxu0 %v2182
          %2241 = vmatprep.subr.bf16.mxu0 0
          %2242 = vmatpush2.bf16.msra.mxu0 0
          %2243 = vmatprep.subr.bf16.mxu0 0
          %2244 = vmatpush2.bf16.msra.mxu0 0
          %2245 = vmatprep.subr.bf16.mxu0 0
          %2246 = vmatpush2.bf16.msra.mxu0 0
          %2247 = vmatprep.subr.bf16.mxu0 0
          %2248 = vmatpush2.bf16.msra.mxu0 0
          %2249 = vmatprep.subr.bf16.mxu0 0
          %2250 = vmatpush2.bf16.msra.mxu0 0
          %2251 = vmatprep.subr.bf16.mxu0 0
          %2252 = vmatpush2.bf16.msra.mxu0 0
          %2253 = vmatprep.subr.bf16.mxu0 0
          %2254 = vmatpush2.bf16.msra.mxu0 0
          %2255 = vmatprep.subr.bf16.mxu0 0
          %2256 = vmatpush2.bf16.msra.mxu0 0
          %2257 = vmatprep.mubr.bf16.mxu0 0
          %2258 = vmatmul.mubr.bf16.gmra.mxu0 %v2173
          %v2259 = vpop.f32.mrf.mxu0
          %v2260 = vadd.f32 0.0, %v2259
          %v2261 = vpop.f32.mrf.mxu0
          %v2262 = vpop.f32.mrf.mxu0
          %v2263 = vpop.f32.mrf.mxu0
          %2264 = vdwg.mxu0
          %v2265 = vadd.f32 %v2156, %v2219
          %v2266 = vadd.f32 %v2157, %v2221
          %v2267 = vadd.f32 %v2158, %v2260
          %s2268 = scalar_lea.vmem %s1, 34
          %v2269 = vld [vmem:[%s2268] sm:$0x3]
          %2270 = vrot.lane.b32.xlu0 %v1413, 90
          %v2271 = vpop.permute.xlu0 %2270
          %2272 = vrot.lane.b32.xlu0 %v1414, 90
          %v2273 = vpop.permute.xlu0 %2272
          %2274 = vrot.lane.b32.xlu0 %v1415, 90
          %v2275 = vpop.permute.xlu0 %2274
          %2276 = vrot.lane.b32.xlu0 %v1416, 90
          %v2277 = vpop.permute.xlu0 %2276
          %v2278 = vsel %vm1230, %v2271, %v2273
          %v2279 = vsel %vm1230, %v2273, %v2275
          %v2280 = vsel %vm1230, %v2275, %v2277
          %v2282 = vsel %vm372, %v2269, 0
          %v2285 = vsel %vm376, %v2278, 0
          %v2288 = vsel %vm376, %v2279, 0
          %v2291 = vsel %vm376, %v2280, 0
          %2293 = vmatprep.subr.bf16.mxu0 0
          %2294 = vmatpush1.bf16.msra.mxu0 0
          %2295 = vmatprep.subr.bf16.mxu0 0
          %2296 = vmatpush1.bf16.msra.mxu0 0
          %2297 = vmatprep.subr.bf16.mxu0 0
          %2298 = vmatpush1.bf16.msra.mxu0 0
          %2299 = vmatprep.subr.bf16.mxu0 0
          %2300 = vmatpush1.bf16.msra.mxu0 0
          %2301 = vmatprep.subr.bf16.mxu0 0
          %2302 = vmatpush1.bf16.msra.mxu0 0
          %2303 = vmatprep.subr.bf16.mxu0 0
          %2304 = vmatpush1.bf16.msra.mxu0 0
          %2305 = vmatprep.subr.bf16.mxu0 0
          %2306 = vmatpush1.bf16.msra.mxu0 0
          %2307 = vmatprep.subr.bf16.mxu0 %v2288
          %2308 = vmatpush1.bf16.msra.mxu0 %v2285
          %2309 = vmatprep.subr.bf16.mxu0 0
          %2310 = vmatpush2.bf16.msra.mxu0 0
          %2311 = vmatprep.subr.bf16.mxu0 0
          %2312 = vmatpush2.bf16.msra.mxu0 0
          %2313 = vmatprep.subr.bf16.mxu0 0
          %2314 = vmatpush2.bf16.msra.mxu0 0
          %2315 = vmatprep.subr.bf16.mxu0 0
          %2316 = vmatpush2.bf16.msra.mxu0 0
          %2317 = vmatprep.subr.bf16.mxu0 0
          %2318 = vmatpush2.bf16.msra.mxu0 0
          %2319 = vmatprep.subr.bf16.mxu0 0
          %2320 = vmatpush2.bf16.msra.mxu0 0
          %2321 = vmatprep.subr.bf16.mxu0 0
          %2322 = vmatpush2.bf16.msra.mxu0 0
          %2323 = vmatprep.subr.bf16.mxu0 0
          %2324 = vmatpush2.bf16.msra.mxu0 0
          %2325 = vmatprep.mubr.bf16.mxu0 0
          %2326 = vmatmul.mubr.bf16.gmra.mxu0 %v2282
          %v2327 = vpop.f32.mrf.mxu0
          %v2328 = vadd.f32 0.0, %v2327
          %v2329 = vpop.f32.mrf.mxu0
          %v2330 = vadd.f32 0.0, %v2329
          %v2331 = vpop.f32.mrf.mxu0
          %v2332 = vpop.f32.mrf.mxu0
          %2333 = vdwg.mxu0
          %2334 = vmatprep.subr.bf16.mxu0 0
          %2335 = vmatpush1.bf16.msra.mxu0 0
          %2336 = vmatprep.subr.bf16.mxu0 0
          %2337 = vmatpush1.bf16.msra.mxu0 0
          %2338 = vmatprep.subr.bf16.mxu0 0
          %2339 = vmatpush1.bf16.msra.mxu0 0
          %2340 = vmatprep.subr.bf16.mxu0 0
          %2341 = vmatpush1.bf16.msra.mxu0 0
          %2342 = vmatprep.subr.bf16.mxu0 0
          %2343 = vmatpush1.bf16.msra.mxu0 0
          %2344 = vmatprep.subr.bf16.mxu0 0
          %2345 = vmatpush1.bf16.msra.mxu0 0
          %2346 = vmatprep.subr.bf16.mxu0 0
          %2347 = vmatpush1.bf16.msra.mxu0 0
          %2348 = vmatprep.subr.bf16.mxu0 0
          %2349 = vmatpush1.bf16.msra.mxu0 %v2291
          %2350 = vmatprep.subr.bf16.mxu0 0
          %2351 = vmatpush2.bf16.msra.mxu0 0
          %2352 = vmatprep.subr.bf16.mxu0 0
          %2353 = vmatpush2.bf16.msra.mxu0 0
          %2354 = vmatprep.subr.bf16.mxu0 0
          %2355 = vmatpush2.bf16.msra.mxu0 0
          %2356 = vmatprep.subr.bf16.mxu0 0
          %2357 = vmatpush2.bf16.msra.mxu0 0
          %2358 = vmatprep.subr.bf16.mxu0 0
          %2359 = vmatpush2.bf16.msra.mxu0 0
          %2360 = vmatprep.subr.bf16.mxu0 0
          %2361 = vmatpush2.bf16.msra.mxu0 0
          %2362 = vmatprep.subr.bf16.mxu0 0
          %2363 = vmatpush2.bf16.msra.mxu0 0
          %2364 = vmatprep.subr.bf16.mxu0 0
          %2365 = vmatpush2.bf16.msra.mxu0 0
          %2366 = vmatprep.mubr.bf16.mxu0 0
          %2367 = vmatmul.mubr.bf16.gmra.mxu0 %v2282
          %v2368 = vpop.f32.mrf.mxu0
          %v2369 = vadd.f32 0.0, %v2368
          %v2370 = vpop.f32.mrf.mxu0
          %v2371 = vpop.f32.mrf.mxu0
          %v2372 = vpop.f32.mrf.mxu0
          %2373 = vdwg.mxu0
          %v2374 = vadd.f32 %v2265, %v2328
          %v2375 = vadd.f32 %v2266, %v2330
          %v2376 = vadd.f32 %v2267, %v2369
          %v2377 = vmax.f32 %v2374, 0.0
          %v2378 = vmax.f32 %v2375, 0.0
          %v2379 = vmax.f32 %v2376, 0.0
          %v2380 = vld [vmem:[#allocation3] sm:$0xf]
          %v2381 = vmul.f32 %v2377, %v1338
          %v2382 = vmul.f32 %v2378, %v1342
          %v2383 = vmul.f32 %v2379, %v1346
          %v2384 = vsel %vm1353, %v2381, 0.0
          %v2385 = vsel %vm1353, %v2382, 0.0
          %v2386 = vadd.f32 %v2384, %v2385
          %v2387 = vsel %vm1353, %v2383, 0.0
          %v2388 = vadd.f32 %v2386, %v2387
          %2389 = vadd.xlane.f32.xlu0 %v2388
          %v2390 = vpop.xlane.xlu0 %2389
          %v2391 = vadd.f32 %v2380, %v2390
          %2392 = vst.msk [vmem:[#allocation3] sm:$0xf] %vm1362, %v2391
          %v2393 = vpack.c.bf16 %v2377, %v2377
          %v2394 = vpack.c.bf16 %v2378, %v2378
          %v2395 = vpack.c.bf16 %v2379, %v2379
          %v2399 = vcombine.low %v2393, %v2394
          %v2401 = vunpack.c.l.s4 1983009808
          %v2402 = vunpack.c.0.s8 %v2401
          %v2403 = vlaneseq
          %v2404 = vshrl.u32 %v2403, 7
          %v2405 = vsub.s32 %v2402, %v2404
          %v2406 = vrot.slane %v2399, %v2405
          %v2408 = vunpack.c.l.s4 1983009808
          %v2409 = vunpack.c.0.s8 %v2408
          %v2410 = vlaneseq
          %v2411 = vshrl.u32 %v2410, 7
          %v2412 = vsub.s32 %v2409, %v2411
          %v2413 = vrot.slane %v2395, %v2412
          %v2414 = vcombine.low %v2406, %v2413
          %s2416 = sadd.s32 %s334, 3
          %s2417 = smul.addr %s2416, 2
          %s2418 = scalar_lea.vmem [#allocation2], %s2417
          %2419 = vst [vmem:[%s2418] sm:$0x3f] %v2414
        $region52: #{tpu_custom_call.1} parent=47 // pred_fallthru
          _
        %p2420 = scmp.eq.s32.totalorder %s27, 1
        // Predicated region
        $region57: #{tpu_custom_call.1} parent=47 // pred_check
          %p2421 = pneg %p2420
        $region58: #{tpu_custom_call.1} parent=47 // pred_check_branch
          %2423 = sbr.rel (%p2421) target = $region60
        $region59: #{tpu_custom_call.1} parent=47 // pred_region
          %p2424 = scmp.eq.s32.totalorder %s28, 0
          // Predicated region
          $region61: #{tpu_custom_call.1} parent=59 // pred_check
            %p2425 = pneg %p2424
          $region62: #{tpu_custom_call.1} parent=59 // pred_check_branch
            %2427 = sbr.rel (%p2425) target = $region64
          $region63: #{tpu_custom_call.1} parent=59 // pred_region
            %v2428 = vld [vmem:[#allocation3] sm:$0xf]
            %v2429 = vmul.f32 %v2428, 0.00390625
            %v2430 = vld [vmem:[%s3] sm:$0xff]
            %v2431 = vld [vmem:[%s3 + $0x8] sm:$0xff]
            %v2432 = vld [vmem:[%s3 + $0x10] sm:$0xff]
            %v2433 = vld [vmem:[%s3 + $0x18] sm:$0xff]
            %v2434 = vld [vmem:[%s4] sm:$0xff]
            %v2435 = vld [vmem:[%s4 + $0x8] sm:$0xff]
            %v2436 = vld [vmem:[%s4 + $0x10] sm:$0xff]
            %v2437 = vld [vmem:[%s4 + $0x18] sm:$0xff]
            %vm2438 = vcmask 31744
            %v2440 = vsel %vm2438, %v2430, 0
            %v2443 = vsel %vm2438, %v2431, 0
            %v2446 = vsel %vm2438, %v2432, 0
            %v2449 = vsel %vm2438, %v2433, 0
            %vm2451 = vcmask 1043456
            %v2453 = vsel %vm2451, %v2429, 0
            %2455 = vmatprep.subr.mxu0 0.0
            %2456 = vmatpush1.msra.mxu0 0.0
            %2457 = vmatprep.subr.mxu0 0.0
            %2458 = vmatpush1.msra.mxu0 0.0
            %2459 = vmatprep.subr.mxu0 0.0
            %2460 = vmatpush1.msra.mxu0 0.0
            %2461 = vmatprep.subr.mxu0 0.0
            %2462 = vmatpush1.msra.mxu0 0.0
            %2463 = vmatprep.subr.mxu0 0.0
            %2464 = vmatpush1.msra.mxu0 0.0
            %2465 = vmatprep.subr.mxu0 0.0
            %2466 = vmatpush1.msra.mxu0 0.0
            %2467 = vmatprep.subr.mxu0 0.0
            %2468 = vmatpush1.msra.mxu0 0.0
            %2469 = vmatprep.subr.mxu0 0.0
            %2470 = vmatpush1.msra.mxu0 0.0
            %2471 = vmatprep.subr.mxu0 0.0
            %2472 = vmatpush1.msra.mxu0 0.0
            %2473 = vmatprep.subr.mxu0 0.0
            %2474 = vmatpush1.msra.mxu0 0.0
            %2475 = vmatprep.subr.mxu0 0.0
            %2476 = vmatpush1.msra.mxu0 0.0
            %2477 = vmatprep.subr.mxu0 0.0
            %2478 = vmatpush1.msra.mxu0 0.0
            %2479 = vmatprep.subr.mxu0 0.0
            %2480 = vmatpush1.msra.mxu0 0.0
            %2481 = vmatprep.subr.mxu0 0.0
            %2482 = vmatpush1.msra.mxu0 0.0
            %2483 = vmatprep.subr.mxu0 0.0
            %2484 = vmatpush1.msra.mxu0 0.0
            %2485 = vmatprep.subr.mxu0 0.0
            %2486 = vmatpush1.msra.mxu0 %v2453
            %2487 = vmatprep.subr.mxu0 0.0
            %2488 = vmatpush2.msra.mxu0 0.0
            %2489 = vmatprep.subr.mxu0 0.0
            %2490 = vmatpush2.msra.mxu0 0.0
            %2491 = vmatprep.subr.mxu0 0.0
            %2492 = vmatpush2.msra.mxu0 0.0
            %2493 = vmatprep.subr.mxu0 0.0
            %2494 = vmatpush2.msra.mxu0 0.0
            %2495 = vmatprep.subr.mxu0 0.0
            %2496 = vmatpush2.msra.mxu0 0.0
            %2497 = vmatprep.subr.mxu0 0.0
            %2498 = vmatpush2.msra.mxu0 0.0
            %2499 = vmatprep.subr.mxu0 0.0
            %2500 = vmatpush2.msra.mxu0 0.0
            %2501 = vmatprep.subr.mxu0 0.0
            %2502 = vmatpush2.msra.mxu0 0.0
            %2503 = vmatprep.subr.mxu0 0.0
            %2504 = vmatpush2.msra.mxu0 0.0
            %2505 = vmatprep.subr.mxu0 0.0
            %2506 = vmatpush2.msra.mxu0 0.0
            %2507 = vmatprep.subr.mxu0 0.0
            %2508 = vmatpush2.msra.mxu0 0.0
            %2509 = vmatprep.subr.mxu0 0.0
            %2510 = vmatpush2.msra.mxu0 0.0
            %2511 = vmatprep.subr.mxu0 0.0
            %2512 = vmatpush2.msra.mxu0 0.0
            %2513 = vmatprep.subr.mxu0 0.0
            %2514 = vmatpush2.msra.mxu0 0.0
            %2515 = vmatprep.subr.mxu0 0.0
            %2516 = vmatpush2.msra.mxu0 0.0
            %2517 = vmatprep.subr.mxu0 0.0
            %2518 = vmatpush2.msra.mxu0 0.0
            %2519 = vmatprep.mubr.f32.mxu0 0.0
            %2520 = vmatmul.mubr.f32.gmra.mxu0 %v2440
            %v2521 = vpop.f32.mrf.mxu0
            %v2522 = vadd.f32 %v2434, %v2521
            %v2523 = vpop.f32.mrf.mxu0
            %2524 = vmatprep.mubr.f32.mxu0 0.0
            %2525 = vmatmul.mubr.f32.gmra.mxu0 %v2443
            %v2526 = vpop.f32.mrf.mxu0
            %v2527 = vadd.f32 %v2435, %v2526
            %v2528 = vpop.f32.mrf.mxu0
            %2529 = vmatprep.mubr.f32.mxu0 0.0
            %2530 = vmatmul.mubr.f32.gmra.mxu0 %v2446
            %v2531 = vpop.f32.mrf.mxu0
            %v2532 = vadd.f32 %v2436, %v2531
            %v2533 = vpop.f32.mrf.mxu0
            %2534 = vmatprep.mubr.f32.mxu0 0.0
            %2535 = vmatmul.mubr.f32.gmra.mxu0 %v2449
            %v2536 = vpop.f32.mrf.mxu0
            %v2537 = vadd.f32 %v2437, %v2536
            %v2538 = vpop.f32.mrf.mxu0
            %2539 = vdwg.mxu0
            %v2540 = vmax.f32 %v2522, 0.0
            %v2541 = vmax.f32 %v2527, 0.0
            %v2542 = vmax.f32 %v2532, 0.0
            %v2543 = vmax.f32 %v2537, 0.0
            %v2544 = vld [vmem:[%s5] sm:$0xf]
            %v2545 = vld [vmem:[%s6] sm:$0xf]
            %vm2546 = vcmask 261120
            %v2548 = vsel %vm2546, %v2544, 0
            %2550 = vmatprep.subr.mxu0 0.0
            %2551 = vmatpush1.msra.mxu0 0.0
            %2552 = vmatprep.subr.mxu0 0.0
            %2553 = vmatpush1.msra.mxu0 0.0
            %2554 = vmatprep.subr.mxu0 0.0
            %2555 = vmatpush1.msra.mxu0 0.0
            %2556 = vmatprep.subr.mxu0 0.0
            %2557 = vmatpush1.msra.mxu0 0.0
            %2558 = vmatprep.subr.mxu0 0.0
            %2559 = vmatpush1.msra.mxu0 0.0
            %2560 = vmatprep.subr.mxu0 0.0
            %2561 = vmatpush1.msra.mxu0 0.0
            %2562 = vmatprep.subr.mxu0 0.0
            %2563 = vmatpush1.msra.mxu0 0.0
            %2564 = vmatprep.subr.mxu0 0.0
            %2565 = vmatpush1.msra.mxu0 0.0
            %2566 = vmatprep.subr.mxu0 0.0
            %2567 = vmatpush1.msra.mxu0 0.0
            %2568 = vmatprep.subr.mxu0 0.0
            %2569 = vmatpush1.msra.mxu0 0.0
            %2570 = vmatprep.subr.mxu0 0.0
            %2571 = vmatpush1.msra.mxu0 0.0
            %2572 = vmatprep.subr.mxu0 0.0
            %2573 = vmatpush1.msra.mxu0 0.0
            %2574 = vmatprep.subr.mxu0 0.0
            %2575 = vmatpush1.msra.mxu0 %v2543
            %2576 = vmatprep.subr.mxu0 0.0
            %2577 = vmatpush1.msra.mxu0 %v2542
            %2578 = vmatprep.subr.mxu0 0.0
            %2579 = vmatpush1.msra.mxu0 %v2541
            %2580 = vmatprep.subr.mxu0 0.0
            %2581 = vmatpush1.msra.mxu0 %v2540
            %2582 = vmatprep.subr.mxu0 0.0
            %2583 = vmatpush2.msra.mxu0 0.0
            %2584 = vmatprep.subr.mxu0 0.0
            %2585 = vmatpush2.msra.mxu0 0.0
            %2586 = vmatprep.subr.mxu0 0.0
            %2587 = vmatpush2.msra.mxu0 0.0
            %2588 = vmatprep.subr.mxu0 0.0
            %2589 = vmatpush2.msra.mxu0 0.0
            %2590 = vmatprep.subr.mxu0 0.0
            %2591 = vmatpush2.msra.mxu0 0.0
            %2592 = vmatprep.subr.mxu0 0.0
            %2593 = vmatpush2.msra.mxu0 0.0
            %2594 = vmatprep.subr.mxu0 0.0
            %2595 = vmatpush2.msra.mxu0 0.0
            %2596 = vmatprep.subr.mxu0 0.0
            %2597 = vmatpush2.msra.mxu0 0.0
            %2598 = vmatprep.subr.mxu0 0.0
            %2599 = vmatpush2.msra.mxu0 0.0
            %2600 = vmatprep.subr.mxu0 0.0
            %2601 = vmatpush2.msra.mxu0 0.0
            %2602 = vmatprep.subr.mxu0 0.0
            %2603 = vmatpush2.msra.mxu0 0.0
            %2604 = vmatprep.subr.mxu0 0.0
            %2605 = vmatpush2.msra.mxu0 0.0
            %2606 = vmatprep.subr.mxu0 0.0
            %2607 = vmatpush2.msra.mxu0 0.0
            %2608 = vmatprep.subr.mxu0 0.0
            %2609 = vmatpush2.msra.mxu0 0.0
            %2610 = vmatprep.subr.mxu0 0.0
            %2611 = vmatpush2.msra.mxu0 0.0
            %2612 = vmatprep.subr.mxu0 0.0
            %2613 = vmatpush2.msra.mxu0 0.0
            %2614 = vmatprep.mubr.f32.mxu0 0.0
            %2615 = vmatmul.mubr.f32.gmra.mxu0 %v2548
            %v2616 = vpop.f32.mrf.mxu0
            %v2617 = vadd.f32 %v2545, %v2616
            %v2618 = vpop.f32.mrf.mxu0
            %2619 = vdwg.mxu0
            %s2620 = scalar_lea.vmem %s5, 4
            %v2621 = vld [vmem:[%s2620] sm:$0xf]
            %s2622 = scalar_lea.vmem %s6, 4
            %v2623 = vld [vmem:[%s2622] sm:$0xf]
            %v2625 = vsel %vm2546, %v2621, 0
            %2627 = vmatprep.subr.mxu0 0.0
            %2628 = vmatpush1.msra.mxu0 0.0
            %2629 = vmatprep.subr.mxu0 0.0
            %2630 = vmatpush1.msra.mxu0 0.0
            %2631 = vmatprep.subr.mxu0 0.0
            %2632 = vmatpush1.msra.mxu0 0.0
            %2633 = vmatprep.subr.mxu0 0.0
            %2634 = vmatpush1.msra.mxu0 0.0
            %2635 = vmatprep.subr.mxu0 0.0
            %2636 = vmatpush1.msra.mxu0 0.0
            %2637 = vmatprep.subr.mxu0 0.0
            %2638 = vmatpush1.msra.mxu0 0.0
            %2639 = vmatprep.subr.mxu0 0.0
            %2640 = vmatpush1.msra.mxu0 0.0
            %2641 = vmatprep.subr.mxu0 0.0
            %2642 = vmatpush1.msra.mxu0 0.0
            %2643 = vmatprep.subr.mxu0 0.0
            %2644 = vmatpush1.msra.mxu0 0.0
            %2645 = vmatprep.subr.mxu0 0.0
            %2646 = vmatpush1.msra.mxu0 0.0
            %2647 = vmatprep.subr.mxu0 0.0
            %2648 = vmatpush1.msra.mxu0 0.0
            %2649 = vmatprep.subr.mxu0 0.0
            %2650 = vmatpush1.msra.mxu0 0.0
            %2651 = vmatprep.subr.mxu0 0.0
            %2652 = vmatpush1.msra.mxu0 %v2543
            %2653 = vmatprep.subr.mxu0 0.0
            %2654 = vmatpush1.msra.mxu0 %v2542
            %2655 = vmatprep.subr.mxu0 0.0
            %2656 = vmatpush1.msra.mxu0 %v2541
            %2657 = vmatprep.subr.mxu0 0.0
            %2658 = vmatpush1.msra.mxu0 %v2540
            %2659 = vmatprep.subr.mxu0 0.0
            %2660 = vmatpush2.msra.mxu0 0.0
            %2661 = vmatprep.subr.mxu0 0.0
            %2662 = vmatpush2.msra.mxu0 0.0
            %2663 = vmatprep.subr.mxu0 0.0
            %2664 = vmatpush2.msra.mxu0 0.0
            %2665 = vmatprep.subr.mxu0 0.0
            %2666 = vmatpush2.msra.mxu0 0.0
            %2667 = vmatprep.subr.mxu0 0.0
            %2668 = vmatpush2.msra.mxu0 0.0
            %2669 = vmatprep.subr.mxu0 0.0
            %2670 = vmatpush2.msra.mxu0 0.0
            %2671 = vmatprep.subr.mxu0 0.0
            %2672 = vmatpush2.msra.mxu0 0.0
            %2673 = vmatprep.subr.mxu0 0.0
            %2674 = vmatpush2.msra.mxu0 0.0
            %2675 = vmatprep.subr.mxu0 0.0
            %2676 = vmatpush2.msra.mxu0 0.0
            %2677 = vmatprep.subr.mxu0 0.0
            %2678 = vmatpush2.msra.mxu0 0.0
            %2679 = vmatprep.subr.mxu0 0.0
            %2680 = vmatpush2.msra.mxu0 0.0
            %2681 = vmatprep.subr.mxu0 0.0
            %2682 = vmatpush2.msra.mxu0 0.0
            %2683 = vmatprep.subr.mxu0 0.0
            %2684 = vmatpush2.msra.mxu0 0.0
            %2685 = vmatprep.subr.mxu0 0.0
            %2686 = vmatpush2.msra.mxu0 0.0
            %2687 = vmatprep.subr.mxu0 0.0
            %2688 = vmatpush2.msra.mxu0 0.0
            %2689 = vmatprep.subr.mxu0 0.0
            %2690 = vmatpush2.msra.mxu0 0.0
            %2691 = vmatprep.mubr.f32.mxu0 0.0
            %2692 = vmatmul.mubr.f32.gmra.mxu0 %v2625
            %v2693 = vpop.f32.mrf.mxu0
            %v2694 = vadd.f32 %v2623, %v2693
            %v2695 = vpop.f32.mrf.mxu0
            %2696 = vdwg.mxu0
            %v2697 = vsub.f32 %v2694, %v2617
            %v2698 = vmul.f32 %v2697, 1.442695
            %v2699 = vpow.pop %v2698
            %v2700 = vadd.f32 %v2699, 1.0
            %v2701 = vrcp.pop %v2700
            %v2702 = vmul.f32 1.0, %v2701
            %v2703 = vsub.f32 1.0, %v2702
            %vm2704 = vcmask 3072
            %2705 = vst.msk [vmem:[#allocation4] sm:$0xf] %vm2704, %v2702
            %s2706 = scalar_lea.vmem [#allocation4], 4
            %2707 = vst.msk [vmem:[%s2706] sm:$0xf] %vm2704, %v2703
          $region64: #{tpu_custom_call.1} parent=59 // pred_fallthru
            _
          %s2708 = sshra.s32 %s322, 7
          %s2709 = sand.u32 %s322, 127
          %s2710 = smul.addr %s2708, 2
          %s2711 = scalar_lea.vmem [#allocation2], %s2710
          %v2712 = vld [vmem:[%s2711] sm:$0x3f]
          %v2713 = vunpack.c.l.bf16 %v2712
          %v2714 = vunpack.c.h.bf16 %v2712
          %v2715 = vld [vmem:[#allocation4] sm:$0xf]
          %2717 = vset.pattern.permute.xlu0 0
          %2718 = vperm.xlu0 %2717, %v2715
          %v2719 = vpop.permute.xlu0 %2718
          %v2721 = vunpack.c.l.s4 839922192
          %v2722 = vunpack.c.0.s8 %v2721
          %v2723 = vlaneseq
          %v2724 = vshrl.u32 %v2723, 7
          %v2725 = vsub.s32 %v2722, %v2724
          %v2726 = vrot.slane %v2719, %v2725
          %v2728 = vmul.f32 %v2713, %v2726
          %v2729 = vmul.f32 %v2714, %v2726
          %s2730 = sadd.s32 %s2708, 3
          %s2731 = smul.addr %s2730, 2
          %s2732 = scalar_lea.vmem [#allocation2], %s2731
          %v2733 = vld [vmem:[%s2732] sm:$0x3f]
          %v2734 = vunpack.c.l.bf16 %v2733
          %v2735 = vunpack.c.h.bf16 %v2733
          %s2736 = scalar_lea.vmem [#allocation4], 4
          %v2737 = vld [vmem:[%s2736] sm:$0xf]
          %2739 = vset.pattern.permute.xlu0 0
          %2740 = vperm.xlu0 %2739, %v2737
          %v2741 = vpop.permute.xlu0 %2740
          %v2743 = vunpack.c.l.s4 839922192
          %v2744 = vunpack.c.0.s8 %v2743
          %v2745 = vlaneseq
          %v2746 = vshrl.u32 %v2745, 7
          %v2747 = vsub.s32 %v2744, %v2746
          %v2748 = vrot.slane %v2741, %v2747
          %v2750 = vmul.f32 %v2734, %v2748
          %v2751 = vmul.f32 %v2735, %v2748
          %v2752 = vadd.f32 %v2728, %v2750
          %v2753 = vadd.f32 %v2729, %v2751
          %2754 = vst [vmem:[%s308] sm:$0xff] %v2752
          %2755 = vst [vmem:[%s308 + $0x8] sm:$0xf] %v2753
        $region60: #{tpu_custom_call.1} parent=47 // pred_fallthru
          _
        %s2756 = sand.u32 %s209, 1
        %s2757 = scalar_lea.sflag [#allocation6], %s2756
        %s2758 = sand.u32 %s209, 1
        %s2759 = smul.addr %s2758, 12
        %s2760 = scalar_lea.vmem [#allocation5], %s2759
        // Predicated region
        $region65: #{tpu_custom_call.1} parent=47 // pred_check
          %p2761 = pneg %p219
        $region66: #{tpu_custom_call.1} parent=47 // pred_check_branch
          %2763 = sbr.rel (%p2761) target = $region68
        $region67: #{tpu_custom_call.1} parent=47 // pred_region
          %s2764 = smul.u32 %s28, %s27
          %s2765 = smul.u32 3, %s2764
          %s2767 = ssub.s32 192, 192
          %2768 = vsyncadd %s2757, %s2767
          %s2769 = smul.addr %s26, 3
          %s2770 = sadd.s32 %s2765, %s2769
          %s2771 = smul.addr %s2770, 64
          %s2772 = scalar_lea.hbm %s7, %s2771
          %s2774 = sshll.u32 %s2760, 4
          %s2775 = int_to_ptr.vmem [resolvable:$true] %s2774
          %2777 = dma.vmem_to_hbm [thread:$0]  %s2775, 192, %s2772, %s2757
        $region68: #{tpu_custom_call.1} parent=47 // pred_fallthru
          _
      $region48: #{tpu_custom_call.1} parent=5 // pred_fallthru
        _
      %p2778 = scmp.le.s32.totalorder 2, %s16
      // Predicated region
      $region69: #{tpu_custom_call.1} parent=5 // pred_check
        %p2779 = pneg %p2778
      $region70: #{tpu_custom_call.1} parent=5 // pred_check_branch
        %2781 = sbr.rel (%p2779) target = $region72
      $region71: #{tpu_custom_call.1} parent=5 // pred_region
        %s2782 = ssub.s32 %s16, 2
        // Predicated region
        $region73: #{tpu_custom_call.1} parent=71 // pred_check
          %p2783 = pneg %p225
        $region74: #{tpu_custom_call.1} parent=71 // pred_check_branch
          %2785 = sbr.rel (%p2783) target = $region76
        $region75: #{tpu_custom_call.1} parent=71 // pred_region
          %s2786 = sand.u32 %s210, 1
          %s2787 = scalar_lea.sflag [#allocation6], %s2786
          %s2788 = sand.u32 %s210, 1
          %s2789 = smul.addr %s2788, 12
          %s2790 = scalar_lea.vmem [#allocation5], %s2789
          %2791 = dma.done %s2787, 192
        $region76: #{tpu_custom_call.1} parent=71 // pred_fallthru
          _
      $region72: #{tpu_custom_call.1} parent=5 // pred_fallthru
        _
    $region6: #{tpu_custom_call.1} parent=1 // loop_footer
      %s20 = sadd.s32 1, %s16
    $region7: #{tpu_custom_call.1} parent=1 // loop_footer_branch
      %15 = sbr.rel target = $region3
    $region8: #{tpu_custom_call.1} parent=1 // loop_exit
      _
    %2792 = vsyncpa [#allocation6], 1
    %s2793 = scalar_lea.sflag [#allocation6], 1
    %2794 = vsyncpa %s2793, 1

</llo_original>
